<compile_context>
chip_gen: v5e
topology: v5e:2x2
jax: 0.10.0
libtpu: 0.0.40
codegen_flags: <defaults>
</compile_context>

<pallas_src>
import numpy as np
import jax
import jax.numpy as jnp
from jax import lax
from jax.experimental import pallas as pl
from jax.experimental.pallas import tpu as pltpu

NEG_SLOPE = 0.01
BN_EPS = 1e-5
NUM_ACTIONS = 6
VAL_LANE = 127                       # lane of W2/b2 carrying the value stream
CONV_CHANNELS = (16, 32, 32, 64, 64)  # fixed by the module definition
FC_HIDDEN = 512
MAX_SINGLE_M = 4096                  # conv patch rows handled as one block (no pad/slice)
CONV_TM = 1024                       # M tile when the conv matmul is grid-tiled
MAX_HEAD_TB = 256                    # batch tile for the dueling head
VMEM_LIMIT = 32 * 1024 * 1024        # within v7x's 64 MiB VMEM; not binding here


# ----------------------------------------------------------------------------
# helpers
# ----------------------------------------------------------------------------
def _round_up(x, m):
    return ((x + m - 1) // m) * m


def _pad_rows(a, rows):
    return jnp.pad(a, ((0, rows - a.shape[0]), (0, 0)))


def _lrelu(y):
    return jnp.where(y > 0, y, NEG_SLOPE * y)


# ----------------------------------------------------------------------------
# Pallas kernels
# ----------------------------------------------------------------------------
def _conv_bn_lrelu_kernel(p_ref, w_ref, shift_ref, o_ref):
    # (bf16 patches @ bf16 (W * bn_scale)) -> f32 acc + bn_shift -> LeakyReLU -> bf16
    acc = jnp.dot(p_ref[...], w_ref[...], preferred_element_type=jnp.float32)
    o_ref[...] = _lrelu(acc + shift_ref[...]).astype(o_ref.dtype)


def _dueling_math(feats_b16, w1, b1, w2, b2):
    # FC1: [Wa1 | Wv1] packed -> one (F, 1024) matmul
    h = jnp.dot(feats_b16, w1, preferred_element_type=jnp.float32)
    h = _lrelu(h + b1)
    # FC2: Wa2 in lanes 0..5, Wv2 in lane VAL_LANE -> one (1024, 128) matmul
    y = jnp.dot(h.astype(jnp.bfloat16), w2, preferred_element_type=jnp.float32) + b2
    lane = lax.broadcasted_iota(jnp.int32, (1, 128), 1)
    adv_sum = jnp.sum(jnp.where(lane < NUM_ACTIONS, y, 0.0), axis=1, keepdims=True)
    val = jnp.sum(jnp.where(lane == VAL_LANE, y, 0.0), axis=1, keepdims=True)
    # q = val + adv - adv.mean();  only lanes 0..NUM_ACTIONS-1 are meaningful
    return val + y - adv_sum * (1.0 / NUM_ACTIONS)


def _head_kernel(x_ref, w1_ref, b1_ref, w2_ref, b2_ref, o_ref):
    o_ref[...] = _dueling_math(x_ref[...], w1_ref[...], b1_ref[...],
                               w2_ref[...], b2_ref[...])


def _conv5_head_kernel(p_ref, w5_ref, s5_ref, w1_ref, b1_ref, w2_ref, b2_ref,
                       o_ref):
    # fused: last conv (as matmul, BN folded) + LeakyReLU + dueling head
    feats = _lrelu(jnp.dot(p_ref[...], w5_ref[...],
                           preferred_element_type=jnp.float32) + s5_ref[...])
    o_ref[...] = _dueling_math(feats.astype(jnp.bfloat16), w1_ref[...],
                               b1_ref[...], w2_ref[...], b2_ref[...])


# ----------------------------------------------------------------------------
# wrappers
# ----------------------------------------------------------------------------
def _im2col_nhwc(x, k=3, stride=2):
    """x: (B, H, W, C) NHWC bf16 -> patches (B*OH*OW, k*k*C) in (i, j, c) order."""
    B, H, W, C = x.shape
    OH = (H - k) // stride + 1
    OW = (W - k) // stride + 1
    cols = []
    for i in range(k):
        for j in range(k):
            cols.append(x[:, i:i + stride * (OH - 1) + 1:stride,
                            j:j + stride * (OW - 1) + 1:stride, :])
    patches = jnp.concatenate(cols, axis=-1)           # (B, OH, OW, k*k*C)
    return patches.reshape(B * OH * OW, k * k * C), OH, OW


def _conv_matmul(patches, cp, B, OH, OW):
    """Fused conv-as-matmul + folded BN + LeakyReLU. Exact K, slim bf16 output."""
    M, K = patches.shape
    cout = cp["W"].shape[1]
    if M <= MAX_SINGLE_M:
        TM, Mp, p_in = M, M, patches        # one full-extent block: no pad, no slice
    else:
        TM = CONV_TM
        Mp = _round_up(M, TM)
        p_in = _pad_rows(patches, Mp)
    out = pl.pallas_call(
        _conv_bn_lrelu_kernel,
        out_shape=jax.ShapeDtypeStruct((Mp, cout), jnp.bfloat16),
        grid=(Mp // TM,),
        in_specs=[pl.BlockSpec((TM, K), lambda i: (i, 0)),
                  pl.BlockSpec((K, cout), lambda i: (0, 0)),   # weight resident
                  pl.BlockSpec((1, cout), lambda i: (0, 0))],  # shift resident
        out_specs=pl.BlockSpec((TM, cout), lambda i: (i, 0)),
        compiler_params=pltpu.CompilerParams(
            dimension_semantics=("parallel",),
            vmem_limit_bytes=VMEM_LIMIT),
        cost_estimate=pl.CostEstimate(
            flops=2 * Mp * K * cout, transcendentals=0,
            bytes_accessed=Mp * K * 2 + K * cout * 2 + cout * 4 + Mp * cout * 2),
    )(p_in, cp["W"], cp["shift"])
    if Mp != M:
        out = out[:M]
    return out.reshape(B, OH, OW, cout)


def _head_pallas(kernel, x, weights, B):
    """Dueling head (optionally with conv5 fused). Batch-tiled, weights resident."""
    if B <= MAX_HEAD_TB:
        TB, Bp, x_in = B, B, x
    else:
        TB = MAX_HEAD_TB
        Bp = _round_up(B, TB)
        x_in = _pad_rows(x, Bp)
    flops = 2 * Bp * int(sum(w.shape[0] * w.shape[1] for w in weights
                             if w.dtype == jnp.bfloat16))
    bytes_acc = int(sum(int(np.prod(a.shape)) * a.dtype.itemsize
                        for a in (x_in,) + tuple(weights))) + Bp * 128 * 4
    out = pl.pallas_call(
        kernel,
        out_shape=jax.ShapeDtypeStruct((Bp, 128), jnp.float32),
        grid=(Bp // TB,),
        in_specs=[pl.BlockSpec((TB, x.shape[1]), lambda i: (i, 0))]
                 + [pl.BlockSpec(w.shape, lambda i: (0, 0)) for w in weights],
        out_specs=pl.BlockSpec((TB, 128), lambda i: (i, 0)),
        compiler_params=pltpu.CompilerParams(
            dimension_semantics=("parallel",),
            vmem_limit_bytes=VMEM_LIMIT),
        cost_estimate=pl.CostEstimate(flops=flops, transcendentals=0,
                                      bytes_accessed=bytes_acc),
    )(x_in, *weights)
    return out[:B, :NUM_ACTIONS]


@jax.jit
def dqn_forward(x, prep):
    """x: (B, 3, H, W) float32 NCHW -> q: (B, NUM_ACTIONS) float32."""
    B = x.shape[0]
    x = jnp.transpose(x, (0, 2, 3, 1)).astype(jnp.bfloat16)   # NHWC + bf16, once
    convs = prep["convs"]
    for li in range(len(convs) - 1):
        patches, OH, OW = _im2col_nhwc(x)
        x = _conv_matmul(patches, convs[li], B, OH, OW)
    fc = prep["fc"]
    last = convs[-1]
    OH = (x.shape[1] - 3) // 2 + 1
    OW = (x.shape[2] - 3) // 2 + 1
    if OH == 1 and OW == 1:
        # final spatial 1x1 (64x64 input): conv5 "im2col" is a (nearly) free
        # reshape of the 3x3 window; conv5 + dueling head fused in ONE kernel.
        patches5 = x[:, :3, :3, :].reshape(B, 9 * x.shape[3])
        return _head_pallas(_conv5_head_kernel, patches5,
                            (last["W"], last["shift"],
                             fc["W1"], fc["b1"], fc["W2"], fc["b2"]), B)
    # generic path: separate conv5, flatten in torch's NCHW .view order, head.
    patches, OH, OW = _im2col_nhwc(x)
    x = _conv_matmul(patches, last, B, OH, OW)
    feats = jnp.transpose(x, (0, 3, 1, 2)).reshape(B, -1)
    return _head_pallas(_head_kernel, feats,
                        (fc["W1"], fc["b1"], fc["W2"], fc["b2"]), B)


# ----------------------------------------------------------------------------
# run-once parameter preprocessing (hoisted out of the forward pass)
# ----------------------------------------------------------------------------
def prepare_params(params):
    """Fold BN into the conv weights, pack the dueling-head weights (adv lanes
    0..5, val lane VAL_LANE), cast matmul operands to bf16.  Run once."""
    convs = []
    for cp in params["convs"]:
        Cout, Cin, kh, kw = cp["W"].shape
        K = kh * kw * Cin
        Wm = jnp.transpose(cp["W"], (2, 3, 1, 0)).reshape(K, Cout)  # (i,j,c) x Cout
        s = cp["gamma"] / jnp.sqrt(cp["var"] + BN_EPS)
        shift = s * (cp["b"] - cp["mean"]) + cp["beta"]
        convs.append(dict(W=(Wm * s[None, :]).astype(jnp.bfloat16),
                          shift=shift[None, :].astype(jnp.float32)))

    fc = params["fc"]
    Hd = fc["Wa1"].shape[0]                       # 512
    n_act = fc["Wa2"].shape[0]                    # 6
    W1 = jnp.concatenate([fc["Wa1"].T, fc["Wv1"].T], axis=1)    # (lin_in, 2*Hd)
    b1 = jnp.concatenate([fc["ba1"], fc["bv1"]])[None, :]       # (1, 2*Hd)
    W2 = jnp.zeros((2 * Hd, 128), jnp.float32)
    W2 = W2.at[:Hd, :n_act].set(fc["Wa2"].T)          # adv -> lanes 0..n_act-1
    W2 = W2.at[Hd:, VAL_LANE:VAL_LANE + 1].set(fc["Wv2"].T)     # val -> lane 127
    b2 = jnp.zeros((1, 128), jnp.float32)
    b2 = b2.at[0, :n_act].set(fc["ba2"])
    b2 = b2.at[0, VAL_LANE].set(fc["bv2"][0])
    return dict(convs=convs,
                fc=dict(W1=W1.astype(jnp.bfloat16),
                        b1=b1.astype(jnp.float32),
                        W2=W2.astype(jnp.bfloat16),
                        b2=b2.astype(jnp.float32)))


# ----------------------------------------------------------------------------
# deterministic parameter init (matches module __init__ shapes)
# ----------------------------------------------------------------------------
def init_params(key, h, w, outputs=NUM_ACTIONS):
    conv_defs = list(zip((3,) + CONV_CHANNELS[:-1], CONV_CHANNELS))
    keys = jax.random.split(key, 6 * len(conv_defs) + 8)
    ki = 0
    convs = []
    for cin, cout in conv_defs:
        kW, kb, kg, kbe, km, kv = keys[ki:ki + 6]
        ki += 6
        convs.append(dict(
            W=0.1 * jax.random.normal(kW, (cout, cin, 3, 3), jnp.float32),
            b=0.1 * jax.random.normal(kb, (cout,), jnp.float32),
            gamma=1.0 + 0.1 * jax.random.normal(kg, (cout,), jnp.float32),
            beta=0.1 * jax.random.normal(kbe, (cout,), jnp.float32),
            mean=0.1 * jax.random.normal(km, (cout,), jnp.float32),
            var=jax.random.uniform(kv, (cout,), jnp.float32, 0.5, 1.5),
        ))

    def csz(s):
        return (s - 3) // 2 + 1

    convw = csz(csz(csz(csz(csz(w)))))
    convh = csz(csz(csz(csz(csz(h)))))
    lin_in = convw * convh * 64

    kfc = keys[ki:ki + 8]
    fc = dict(
        Wa1=0.05 * jax.random.normal(kfc[0], (FC_HIDDEN, lin_in), jnp.float32),
        ba1=0.05 * jax.random.normal(kfc[1], (FC_HIDDEN,), jnp.float32),
        Wv1=0.05 * jax.random.normal(kfc[2], (FC_HIDDEN, lin_in), jnp.float32),
        bv1=0.05 * jax.random.normal(kfc[3], (FC_HIDDEN,), jnp.float32),
        Wa2=0.05 * jax.random.normal(kfc[4], (outputs, FC_HIDDEN), jnp.float32),
        ba2=0.05 * jax.random.normal(kfc[5], (outputs,), jnp.float32),
        Wv2=0.05 * jax.random.normal(kfc[6], (1, FC_HIDDEN), jnp.float32),
        bv2=0.05 * jax.random.normal(kfc[7], (1,), jnp.float32),
    )
    return dict(convs=convs, fc=fc)


# ----------------------------------------------------------------------------
# pure-JAX reference (ground truth for the correctness check)
# ----------------------------------------------------------------------------
def ref_forward(x, params):
    hp = lax.Precision.HIGHEST
    for cp in params["convs"]:
        x = lax.conv_general_dilated(
            x, cp["W"], (2, 2), "VALID",
            dimension_numbers=("NCHW", "OIHW", "NCHW"), precision=hp)
        x = x + cp["b"][None, :, None, None]
        s = cp["gamma"] / jnp.sqrt(cp["var"] + BN_EPS)
        x = (s[None, :, None, None] * (x - cp["mean"][None, :, None, None])
             + cp["beta"][None, :, None, None])
        x = _lrelu(x)
    B = x.shape[0]
    x = x.reshape(B, -1)
    fc = params["fc"]
    adv = _lrelu(jnp.dot(x, fc["Wa1"].T, precision=hp) + fc["ba1"])
    val = _lrelu(jnp.dot(x, fc["Wv1"].T, precision=hp) + fc["bv1"])
    adv = jnp.dot(adv, fc["Wa2"].T, precision=hp) + fc["ba2"]
    val = jnp.dot(val, fc["Wv2"].T, precision=hp) + fc["bv2"]
    return val + adv - adv.mean(axis=1, keepdims=True)


if __name__ == "__main__":
    k1, k2, k3, k4 = jax.random.split(jax.random.PRNGKey(0), 4)

    # Test 1: 64x64 input -> final conv spatial 1x1 -> fused conv5+head kernel.
    B, H, W = 2, 64, 64   # 64 -> 31 -> 15 -> 7 -> 3 -> 1; linear_input_size=64
    x = jax.random.normal(k1, (B, 3, H, W), jnp.float32)
    params = init_params(k2, H, W)
    prep = prepare_params(params)                 # hoisted, run-once param prep
    q = jax.block_until_ready(dqn_forward(x, prep))
    assert q.shape == (B, NUM_ACTIONS)
    np.testing.assert_allclose(np.asarray(q), np.asarray(ref_forward(x, params)),
                               rtol=5e-2, atol=5e-2)

    # Test 2: 96x96 input -> final conv spatial 2x2 -> generic conv + head path.
    B2, H2, W2 = 2, 96, 96  # 96 -> 47 -> 23 -> 11 -> 5 -> 2; linear_input_size=256
    x2 = jax.random.normal(k3, (B2, 3, H2, W2), jnp.float32)
    params2 = init_params(k4, H2, W2)
    prep2 = prepare_params(params2)
    q2 = jax.block_until_ready(dqn_forward(x2, prep2))
    assert q2.shape == (B2, NUM_ACTIONS)
    np.testing.assert_allclose(np.asarray(q2), np.asarray(ref_forward(x2, params2)),
                               rtol=5e-2, atol=5e-2)

    print("KERNEL_OK")
</pallas_src>

<mosaic_0001>
module attributes {stable_mosaic.version = 11 : i64} {
  func.func @_conv_bn_lrelu_kernel(%arg0: i32, %arg1: memref<1922x27xbf16, #tpu.memory_space<vmem>>, %arg2: memref<27x16xbf16, #tpu.memory_space<vmem>>, %arg3: memref<1x16xf32, #tpu.memory_space<vmem>>, %arg4: memref<1922x16xbf16, #tpu.memory_space<vmem>>) attributes {dimension_semantics = [#tpu.dimension_semantics<parallel>], iteration_bounds = array<i64: 1>, scalar_prefetch = 0 : i64, scratch_operands = 0 : i64, tpu.core_type = #tpu.core_type<tc>, window_params = [{transform_indices = @transform_0, window_bounds = array<i64: 1922, 27>}, {pipeline_mode = #tpu.pipeline_mode<synchronous>, transform_indices = @transform_1, window_bounds = array<i64: 27, 16>}, {pipeline_mode = #tpu.pipeline_mode<synchronous>, transform_indices = @transform_2, window_bounds = array<i64: 1, 16>}, {transform_indices = @transform_3, window_bounds = array<i64: 1922, 16>}]} {
    %c0 = arith.constant 0 : index
    %c0_0 = arith.constant 0 : index
    %0 = vector.load %arg1[%c0, %c0_0] : memref<1922x27xbf16, #tpu.memory_space<vmem>>, vector<1922x27xbf16>
    %c0_1 = arith.constant 0 : index
    %c0_2 = arith.constant 0 : index
    %1 = vector.load %arg2[%c0_1, %c0_2] : memref<27x16xbf16, #tpu.memory_space<vmem>>, vector<27x16xbf16>
    %cst = arith.constant dense<0.000000e+00> : vector<1922x16xf32>
    %2 = tpu.matmul %0, %1, %cst {dimension_numbers = #tpu.dot_dimension_numbers<[1], [0], [0], [1], [0, 0, 1, 1], [], []>} : vector<1922x27xbf16>, vector<27x16xbf16>, vector<1922x16xf32> -> vector<1922x16xf32>
    %c0_3 = arith.constant 0 : index
    %c0_4 = arith.constant 0 : index
    %3 = vector.load %arg3[%c0_3, %c0_4] : memref<1x16xf32, #tpu.memory_space<vmem>>, vector<1x16xf32>
    %4 = vector.broadcast %3 : vector<1x16xf32> to vector<1922x16xf32>
    %5 = arith.addf %2, %4 : vector<1922x16xf32>
    %cst_5 = arith.constant 0.000000e+00 : f32
    %6 = vector.broadcast %cst_5 : f32 to vector<1922x16xf32>
    %7 = arith.cmpf ogt, %5, %6 : vector<1922x16xf32>
    %cst_6 = arith.constant 0.00999999977 : f32
    %8 = vector.broadcast %cst_6 : f32 to vector<1922x16xf32>
    %9 = arith.mulf %8, %5 : vector<1922x16xf32>
    %10 = arith.select %7, %5, %9 : vector<1922x16xi1>, vector<1922x16xf32>
    %11 = arith.truncf %10 : vector<1922x16xf32> to vector<1922x16xbf16>
    %c0_7 = arith.constant 0 : index
    %c0_8 = arith.constant 0 : index
    %12 = vector.load %arg4[%c0_7, %c0_8] : memref<1922x16xbf16, #tpu.memory_space<vmem>>, vector<1922x16xbf16>
    tpu.vector_store %arg4[%c0_7, %c0_8], %11 {strides = array<i32>} : memref<1922x16xbf16, #tpu.memory_space<vmem>>, vector<1922x16xbf16>,
    return
  }
  func.func @transform_0(%arg0: i32) -> (i32, i32) {
    %c0_i32 = arith.constant 0 : i32
    %c0_i32_0 = arith.constant 0 : i32
    return %arg0, %c0_i32 : i32, i32
  }
  func.func @transform_1(%arg0: i32) -> (i32, i32) {
    %c0_i32 = arith.constant 0 : i32
    %c0_i32_0 = arith.constant 0 : i32
    %c0_i32_1 = arith.constant 0 : i32
    return %c0_i32, %c0_i32_0 : i32, i32
  }
  func.func @transform_2(%arg0: i32) -> (i32, i32) {
    %c0_i32 = arith.constant 0 : i32
    %c0_i32_0 = arith.constant 0 : i32
    %c0_i32_1 = arith.constant 0 : i32
    return %c0_i32, %c0_i32_0 : i32, i32
  }
  func.func @transform_3(%arg0: i32) -> (i32, i32) {
    %c0_i32 = arith.constant 0 : i32
    %c0_i32_0 = arith.constant 0 : i32
    return %arg0, %c0_i32 : i32, i32
  }
}

module attributes {stable_mosaic.version = 11 : i64} {
  func.func @_conv_bn_lrelu_kernel(%arg0: i32, %arg1: memref<450x144xbf16, #tpu.memory_space<vmem>>, %arg2: memref<144x32xbf16, #tpu.memory_space<vmem>>, %arg3: memref<1x32xf32, #tpu.memory_space<vmem>>, %arg4: memref<450x32xbf16, #tpu.memory_space<vmem>>) attributes {dimension_semantics = [#tpu.dimension_semantics<parallel>], iteration_bounds = array<i64: 1>, scalar_prefetch = 0 : i64, scratch_operands = 0 : i64, tpu.core_type = #tpu.core_type<tc>, window_params = [{transform_indices = @transform_0, window_bounds = array<i64: 450, 144>}, {pipeline_mode = #tpu.pipeline_mode<synchronous>, transform_indices = @transform_1, window_bounds = array<i64: 144, 32>}, {pipeline_mode = #tpu.pipeline_mode<synchronous>, transform_indices = @transform_2, window_bounds = array<i64: 1, 32>}, {transform_indices = @transform_3, window_bounds = array<i64: 450, 32>}]} {
    %c0 = arith.constant 0 : index
    %c0_0 = arith.constant 0 : index
    %0 = vector.load %arg1[%c0, %c0_0] : memref<450x144xbf16, #tpu.memory_space<vmem>>, vector<450x144xbf16>
    %c0_1 = arith.constant 0 : index
    %c0_2 = arith.constant 0 : index
    %1 = vector.load %arg2[%c0_1, %c0_2] : memref<144x32xbf16, #tpu.memory_space<vmem>>, vector<144x32xbf16>
    %cst = arith.constant dense<0.000000e+00> : vector<450x32xf32>
    %2 = tpu.matmul %0, %1, %cst {dimension_numbers = #tpu.dot_dimension_numbers<[1], [0], [0], [1], [0, 0, 1, 1], [], []>} : vector<450x144xbf16>, vector<144x32xbf16>, vector<450x32xf32> -> vector<450x32xf32>
    %c0_3 = arith.constant 0 : index
    %c0_4 = arith.constant 0 : index
    %3 = vector.load %arg3[%c0_3, %c0_4] : memref<1x32xf32, #tpu.memory_space<vmem>>, vector<1x32xf32>
    %4 = vector.broadcast %3 : vector<1x32xf32> to vector<450x32xf32>
    %5 = arith.addf %2, %4 : vector<450x32xf32>
    %cst_5 = arith.constant 0.000000e+00 : f32
    %6 = vector.broadcast %cst_5 : f32 to vector<450x32xf32>
    %7 = arith.cmpf ogt, %5, %6 : vector<450x32xf32>
    %cst_6 = arith.constant 0.00999999977 : f32
    %8 = vector.broadcast %cst_6 : f32 to vector<450x32xf32>
    %9 = arith.mulf %8, %5 : vector<450x32xf32>
    %10 = arith.select %7, %5, %9 : vector<450x32xi1>, vector<450x32xf32>
    %11 = arith.truncf %10 : vector<450x32xf32> to vector<450x32xbf16>
    %c0_7 = arith.constant 0 : index
    %c0_8 = arith.constant 0 : index
    %12 = vector.load %arg4[%c0_7, %c0_8] : memref<450x32xbf16, #tpu.memory_space<vmem>>, vector<450x32xbf16>
    tpu.vector_store %arg4[%c0_7, %c0_8], %11 {strides = array<i32>} : memref<450x32xbf16, #tpu.memory_space<vmem>>, vector<450x32xbf16>,
    return
  }
  func.func @transform_0(%arg0: i32) -> (i32, i32) {
    %c0_i32 = arith.constant 0 : i32
    %c0_i32_0 = arith.constant 0 : i32
    return %arg0, %c0_i32 : i32, i32
  }
  func.func @transform_1(%arg0: i32) -> (i32, i32) {
    %c0_i32 = arith.constant 0 : i32
    %c0_i32_0 = arith.constant 0 : i32
    %c0_i32_1 = arith.constant 0 : i32
    return %c0_i32, %c0_i32_0 : i32, i32
  }
  func.func @transform_2(%arg0: i32) -> (i32, i32) {
    %c0_i32 = arith.constant 0 : i32
    %c0_i32_0 = arith.constant 0 : i32
    %c0_i32_1 = arith.constant 0 : i32
    return %c0_i32, %c0_i32_0 : i32, i32
  }
  func.func @transform_3(%arg0: i32) -> (i32, i32) {
    %c0_i32 = arith.constant 0 : i32
    %c0_i32_0 = arith.constant 0 : i32
    return %arg0, %c0_i32 : i32, i32
  }
}

module attributes {stable_mosaic.version = 11 : i64} {
  func.func @_conv_bn_lrelu_kernel(%arg0: i32, %arg1: memref<98x288xbf16, #tpu.memory_space<vmem>>, %arg2: memref<288x32xbf16, #tpu.memory_space<vmem>>, %arg3: memref<1x32xf32, #tpu.memory_space<vmem>>, %arg4: memref<98x32xbf16, #tpu.memory_space<vmem>>) attributes {dimension_semantics = [#tpu.dimension_semantics<parallel>], iteration_bounds = array<i64: 1>, scalar_prefetch = 0 : i64, scratch_operands = 0 : i64, tpu.core_type = #tpu.core_type<tc>, window_params = [{transform_indices = @transform_0, window_bounds = array<i64: 98, 288>}, {pipeline_mode = #tpu.pipeline_mode<synchronous>, transform_indices = @transform_1, window_bounds = array<i64: 288, 32>}, {pipeline_mode = #tpu.pipeline_mode<synchronous>, transform_indices = @transform_2, window_bounds = array<i64: 1, 32>}, {transform_indices = @transform_3, window_bounds = array<i64: 98, 32>}]} {
    %c0 = arith.constant 0 : index
    %c0_0 = arith.constant 0 : index
    %0 = vector.load %arg1[%c0, %c0_0] : memref<98x288xbf16, #tpu.memory_space<vmem>>, vector<98x288xbf16>
    %c0_1 = arith.constant 0 : index
    %c0_2 = arith.constant 0 : index
    %1 = vector.load %arg2[%c0_1, %c0_2] : memref<288x32xbf16, #tpu.memory_space<vmem>>, vector<288x32xbf16>
    %cst = arith.constant dense<0.000000e+00> : vector<98x32xf32>
    %2 = tpu.matmul %0, %1, %cst {dimension_numbers = #tpu.dot_dimension_numbers<[1], [0], [0], [1], [0, 0, 1, 1], [], []>} : vector<98x288xbf16>, vector<288x32xbf16>, vector<98x32xf32> -> vector<98x32xf32>
    %c0_3 = arith.constant 0 : index
    %c0_4 = arith.constant 0 : index
    %3 = vector.load %arg3[%c0_3, %c0_4] : memref<1x32xf32, #tpu.memory_space<vmem>>, vector<1x32xf32>
    %4 = vector.broadcast %3 : vector<1x32xf32> to vector<98x32xf32>
    %5 = arith.addf %2, %4 : vector<98x32xf32>
    %cst_5 = arith.constant 0.000000e+00 : f32
    %6 = vector.broadcast %cst_5 : f32 to vector<98x32xf32>
    %7 = arith.cmpf ogt, %5, %6 : vector<98x32xf32>
    %cst_6 = arith.constant 0.00999999977 : f32
    %8 = vector.broadcast %cst_6 : f32 to vector<98x32xf32>
    %9 = arith.mulf %8, %5 : vector<98x32xf32>
    %10 = arith.select %7, %5, %9 : vector<98x32xi1>, vector<98x32xf32>
    %11 = arith.truncf %10 : vector<98x32xf32> to vector<98x32xbf16>
    %c0_7 = arith.constant 0 : index
    %c0_8 = arith.constant 0 : index
    %12 = vector.load %arg4[%c0_7, %c0_8] : memref<98x32xbf16, #tpu.memory_space<vmem>>, vector<98x32xbf16>
    tpu.vector_store %arg4[%c0_7, %c0_8], %11 {strides = array<i32>} : memref<98x32xbf16, #tpu.memory_space<vmem>>, vector<98x32xbf16>,
    return
  }
  func.func @transform_0(%arg0: i32) -> (i32, i32) {
    %c0_i32 = arith.constant 0 : i32
    %c0_i32_0 = arith.constant 0 : i32
    return %arg0, %c0_i32 : i32, i32
  }
  func.func @transform_1(%arg0: i32) -> (i32, i32) {
    %c0_i32 = arith.constant 0 : i32
    %c0_i32_0 = arith.constant 0 : i32
    %c0_i32_1 = arith.constant 0 : i32
    return %c0_i32, %c0_i32_0 : i32, i32
  }
  func.func @transform_2(%arg0: i32) -> (i32, i32) {
    %c0_i32 = arith.constant 0 : i32
    %c0_i32_0 = arith.constant 0 : i32
    %c0_i32_1 = arith.constant 0 : i32
    return %c0_i32, %c0_i32_0 : i32, i32
  }
  func.func @transform_3(%arg0: i32) -> (i32, i32) {
    %c0_i32 = arith.constant 0 : i32
    %c0_i32_0 = arith.constant 0 : i32
    return %arg0, %c0_i32 : i32, i32
  }
}

module attributes {stable_mosaic.version = 11 : i64} {
  func.func @_conv_bn_lrelu_kernel(%arg0: i32, %arg1: memref<18x288xbf16, #tpu.memory_space<vmem>>, %arg2: memref<288x64xbf16, #tpu.memory_space<vmem>>, %arg3: memref<1x64xf32, #tpu.memory_space<vmem>>, %arg4: memref<18x64xbf16, #tpu.memory_space<vmem>>) attributes {dimension_semantics = [#tpu.dimension_semantics<parallel>], iteration_bounds = array<i64: 1>, scalar_prefetch = 0 : i64, scratch_operands = 0 : i64, tpu.core_type = #tpu.core_type<tc>, window_params = [{transform_indices = @transform_0, window_bounds = array<i64: 18, 288>}, {pipeline_mode = #tpu.pipeline_mode<synchronous>, transform_indices = @transform_1, window_bounds = array<i64: 288, 64>}, {pipeline_mode = #tpu.pipeline_mode<synchronous>, transform_indices = @transform_2, window_bounds = array<i64: 1, 64>}, {transform_indices = @transform_3, window_bounds = array<i64: 18, 64>}]} {
    %c0 = arith.constant 0 : index
    %c0_0 = arith.constant 0 : index
    %0 = vector.load %arg1[%c0, %c0_0] : memref<18x288xbf16, #tpu.memory_space<vmem>>, vector<18x288xbf16>
    %c0_1 = arith.constant 0 : index
    %c0_2 = arith.constant 0 : index
    %1 = vector.load %arg2[%c0_1, %c0_2] : memref<288x64xbf16, #tpu.memory_space<vmem>>, vector<288x64xbf16>
    %cst = arith.constant dense<0.000000e+00> : vector<18x64xf32>
    %2 = tpu.matmul %0, %1, %cst {dimension_numbers = #tpu.dot_dimension_numbers<[1], [0], [0], [1], [0, 0, 1, 1], [], []>} : vector<18x288xbf16>, vector<288x64xbf16>, vector<18x64xf32> -> vector<18x64xf32>
    %c0_3 = arith.constant 0 : index
    %c0_4 = arith.constant 0 : index
    %3 = vector.load %arg3[%c0_3, %c0_4] : memref<1x64xf32, #tpu.memory_space<vmem>>, vector<1x64xf32>
    %4 = vector.broadcast %3 : vector<1x64xf32> to vector<18x64xf32>
    %5 = arith.addf %2, %4 : vector<18x64xf32>
    %cst_5 = arith.constant 0.000000e+00 : f32
    %6 = vector.broadcast %cst_5 : f32 to vector<18x64xf32>
    %7 = arith.cmpf ogt, %5, %6 : vector<18x64xf32>
    %cst_6 = arith.constant 0.00999999977 : f32
    %8 = vector.broadcast %cst_6 : f32 to vector<18x64xf32>
    %9 = arith.mulf %8, %5 : vector<18x64xf32>
    %10 = arith.select %7, %5, %9 : vector<18x64xi1>, vector<18x64xf32>
    %11 = arith.truncf %10 : vector<18x64xf32> to vector<18x64xbf16>
    %c0_7 = arith.constant 0 : index
    %c0_8 = arith.constant 0 : index
    %12 = vector.load %arg4[%c0_7, %c0_8] : memref<18x64xbf16, #tpu.memory_space<vmem>>, vector<18x64xbf16>
    tpu.vector_store %arg4[%c0_7, %c0_8], %11 {strides = array<i32>} : memref<18x64xbf16, #tpu.memory_space<vmem>>, vector<18x64xbf16>,
    return
  }
  func.func @transform_0(%arg0: i32) -> (i32, i32) {
    %c0_i32 = arith.constant 0 : i32
    %c0_i32_0 = arith.constant 0 : i32
    return %arg0, %c0_i32 : i32, i32
  }
  func.func @transform_1(%arg0: i32) -> (i32, i32) {
    %c0_i32 = arith.constant 0 : i32
    %c0_i32_0 = arith.constant 0 : i32
    %c0_i32_1 = arith.constant 0 : i32
    return %c0_i32, %c0_i32_0 : i32, i32
  }
  func.func @transform_2(%arg0: i32) -> (i32, i32) {
    %c0_i32 = arith.constant 0 : i32
    %c0_i32_0 = arith.constant 0 : i32
    %c0_i32_1 = arith.constant 0 : i32
    return %c0_i32, %c0_i32_0 : i32, i32
  }
  func.func @transform_3(%arg0: i32) -> (i32, i32) {
    %c0_i32 = arith.constant 0 : i32
    %c0_i32_0 = arith.constant 0 : i32
    return %arg0, %c0_i32 : i32, i32
  }
}

module attributes {stable_mosaic.version = 11 : i64} {
  func.func @_conv5_head_kernel(%arg0: i32, %arg1: memref<2x576xbf16, #tpu.memory_space<vmem>>, %arg2: memref<576x64xbf16, #tpu.memory_space<vmem>>, %arg3: memref<1x64xf32, #tpu.memory_space<vmem>>, %arg4: memref<64x1024xbf16, #tpu.memory_space<vmem>>, %arg5: memref<1x1024xf32, #tpu.memory_space<vmem>>, %arg6: memref<1024x128xbf16, #tpu.memory_space<vmem>>, %arg7: memref<1x128xf32, #tpu.memory_space<vmem>>, %arg8: memref<2x128xf32, #tpu.memory_space<vmem>>) attributes {dimension_semantics = [#tpu.dimension_semantics<parallel>], iteration_bounds = array<i64: 1>, scalar_prefetch = 0 : i64, scratch_operands = 0 : i64, tpu.core_type = #tpu.core_type<tc>, window_params = [{transform_indices = @transform_0, window_bounds = array<i64: 2, 576>}, {pipeline_mode = #tpu.pipeline_mode<synchronous>, transform_indices = @transform_1, window_bounds = array<i64: 576, 64>}, {pipeline_mode = #tpu.pipeline_mode<synchronous>, transform_indices = @transform_2, window_bounds = array<i64: 1, 64>}, {pipeline_mode = #tpu.pipeline_mode<synchronous>, transform_indices = @transform_3, window_bounds = array<i64: 64, 1024>}, {pipeline_mode = #tpu.pipeline_mode<synchronous>, transform_indices = @transform_4, window_bounds = array<i64: 1, 1024>}, {pipeline_mode = #tpu.pipeline_mode<synchronous>, transform_indices = @transform_5, window_bounds = array<i64: 1024, 128>}, {pipeline_mode = #tpu.pipeline_mode<synchronous>, transform_indices = @transform_6, window_bounds = array<i64: 1, 128>}, {transform_indices = @transform_7, window_bounds = array<i64: 2, 128>}]} {
    %c0 = arith.constant 0 : index
    %c0_0 = arith.constant 0 : index
    %0 = vector.load %arg1[%c0, %c0_0] : memref<2x576xbf16, #tpu.memory_space<vmem>>, vector<2x576xbf16>
    %c0_1 = arith.constant 0 : index
    %c0_2 = arith.constant 0 : index
    %1 = vector.load %arg2[%c0_1, %c0_2] : memref<576x64xbf16, #tpu.memory_space<vmem>>, vector<576x64xbf16>
    %cst = arith.constant dense<0.000000e+00> : vector<2x64xf32>
    %2 = tpu.matmul %0, %1, %cst {dimension_numbers = #tpu.dot_dimension_numbers<[1], [0], [0], [1], [0, 0, 1, 1], [], []>} : vector<2x576xbf16>, vector<576x64xbf16>, vector<2x64xf32> -> vector<2x64xf32>
    %c0_3 = arith.constant 0 : index
    %c0_4 = arith.constant 0 : index
    %3 = vector.load %arg3[%c0_3, %c0_4] : memref<1x64xf32, #tpu.memory_space<vmem>>, vector<1x64xf32>
    %4 = vector.broadcast %3 : vector<1x64xf32> to vector<2x64xf32>
    %5 = arith.addf %2, %4 : vector<2x64xf32>
    %cst_5 = arith.constant 0.000000e+00 : f32
    %6 = vector.broadcast %cst_5 : f32 to vector<2x64xf32>
    %7 = arith.cmpf ogt, %5, %6 : vector<2x64xf32>
    %cst_6 = arith.constant 0.00999999977 : f32
    %8 = vector.broadcast %cst_6 : f32 to vector<2x64xf32>
    %9 = arith.mulf %8, %5 : vector<2x64xf32>
    %10 = arith.select %7, %5, %9 : vector<2x64xi1>, vector<2x64xf32>
    %11 = arith.truncf %10 : vector<2x64xf32> to vector<2x64xbf16>
    %c0_7 = arith.constant 0 : index
    %c0_8 = arith.constant 0 : index
    %12 = vector.load %arg4[%c0_7, %c0_8] : memref<64x1024xbf16, #tpu.memory_space<vmem>>, vector<64x1024xbf16>
    %c0_9 = arith.constant 0 : index
    %c0_10 = arith.constant 0 : index
    %13 = vector.load %arg5[%c0_9, %c0_10] : memref<1x1024xf32, #tpu.memory_space<vmem>>, vector<1x1024xf32>
    %c0_11 = arith.constant 0 : index
    %c0_12 = arith.constant 0 : index
    %14 = vector.load %arg6[%c0_11, %c0_12] : memref<1024x128xbf16, #tpu.memory_space<vmem>>, vector<1024x128xbf16>
    %c0_13 = arith.constant 0 : index
    %c0_14 = arith.constant 0 : index
    %15 = vector.load %arg7[%c0_13, %c0_14] : memref<1x128xf32, #tpu.memory_space<vmem>>, vector<1x128xf32>
    %cst_15 = arith.constant dense<0.000000e+00> : vector<2x1024xf32>
    %16 = tpu.matmul %11, %12, %cst_15 {dimension_numbers = #tpu.dot_dimension_numbers<[1], [0], [0], [1], [0, 0, 1, 1], [], []>} : vector<2x64xbf16>, vector<64x1024xbf16>, vector<2x1024xf32> -> vector<2x1024xf32>
    %17 = vector.broadcast %13 : vector<1x1024xf32> to vector<2x1024xf32>
    %18 = arith.addf %16, %17 : vector<2x1024xf32>
    %cst_16 = arith.constant 0.000000e+00 : f32
    %19 = vector.broadcast %cst_16 : f32 to vector<2x1024xf32>
    %20 = arith.cmpf ogt, %18, %19 : vector<2x1024xf32>
    %cst_17 = arith.constant 0.00999999977 : f32
    %21 = vector.broadcast %cst_17 : f32 to vector<2x1024xf32>
    %22 = arith.mulf %21, %18 : vector<2x1024xf32>
    %23 = arith.select %20, %18, %22 : vector<2x1024xi1>, vector<2x1024xf32>
    %24 = arith.truncf %23 : vector<2x1024xf32> to vector<2x1024xbf16>
    %cst_18 = arith.constant dense<0.000000e+00> : vector<2x128xf32>
    %25 = tpu.matmul %24, %14, %cst_18 {dimension_numbers = #tpu.dot_dimension_numbers<[1], [0], [0], [1], [0, 0, 1, 1], [], []>} : vector<2x1024xbf16>, vector<1024x128xbf16>, vector<2x128xf32> -> vector<2x128xf32>
    %26 = vector.broadcast %15 : vector<1x128xf32> to vector<2x128xf32>
    %27 = arith.addf %25, %26 : vector<2x128xf32>
    %28 = tpu.iota {dimensions = array<i32: 1>} : vector<1x128xi32>
    %c6_i32 = arith.constant 6 : i32
    %29 = vector.broadcast %c6_i32 : i32 to vector<1x128xi32>
    %30 = arith.cmpi slt, %28, %29 : vector<1x128xi32>
    %cst_19 = arith.constant 0.000000e+00 : f32
    %31 = vector.shape_cast %30 : vector<1x128xi1> to vector<1x128xi1>
    %32 = vector.broadcast %31 : vector<1x128xi1> to vector<2x128xi1>
    %33 = vector.broadcast %cst_19 : f32 to vector<2x128xf32>
    %34 = arith.select %32, %27, %33 : vector<2x128xi1>, vector<2x128xf32>
    %cst_20 = arith.constant dense<0.000000e+00> : vector<2xf32>
    %35 = vector.multi_reduction <add>, %34, %cst_20 [1] : vector<2x128xf32> to vector<2xf32>
    %36 = vector.shape_cast %35 : vector<2xf32> to vector<2x1xf32>
    %c127_i32 = arith.constant 127 : i32
    %37 = vector.broadcast %c127_i32 : i32 to vector<1x128xi32>
    %38 = arith.cmpi eq, %28, %37 : vector<1x128xi32>
    %cst_21 = arith.constant 0.000000e+00 : f32
    %39 = vector.shape_cast %38 : vector<1x128xi1> to vector<1x128xi1>
    %40 = vector.broadcast %39 : vector<1x128xi1> to vector<2x128xi1>
    %41 = vector.broadcast %cst_21 : f32 to vector<2x128xf32>
    %42 = arith.select %40, %27, %41 : vector<2x128xi1>, vector<2x128xf32>
    %cst_22 = arith.constant dense<0.000000e+00> : vector<2xf32>
    %43 = vector.multi_reduction <add>, %42, %cst_22 [1] : vector<2x128xf32> to vector<2xf32>
    %44 = vector.shape_cast %43 : vector<2xf32> to vector<2x1xf32>
    %45 = vector.broadcast %44 : vector<2x1xf32> to vector<2x128xf32>
    %46 = arith.addf %45, %27 : vector<2x128xf32>
    %cst_23 = arith.constant 0.166666672 : f32
    %47 = vector.broadcast %cst_23 : f32 to vector<2x1xf32>
    %48 = arith.mulf %36, %47 : vector<2x1xf32>
    %49 = vector.broadcast %48 : vector<2x1xf32> to vector<2x128xf32>
    %50 = arith.subf %46, %49 : vector<2x128xf32>
    %c0_24 = arith.constant 0 : index
    %c0_25 = arith.constant 0 : index
    %51 = vector.load %arg8[%c0_24, %c0_25] : memref<2x128xf32, #tpu.memory_space<vmem>>, vector<2x128xf32>
    tpu.vector_store %arg8[%c0_24, %c0_25], %50 {strides = array<i32>} : memref<2x128xf32, #tpu.memory_space<vmem>>, vector<2x128xf32>,
    return
  }
  func.func @transform_0(%arg0: i32) -> (i32, i32) {
    %c0_i32 = arith.constant 0 : i32
    %c0_i32_0 = arith.constant 0 : i32
    return %arg0, %c0_i32 : i32, i32
  }
  func.func @transform_1(%arg0: i32) -> (i32, i32) {
    %c0_i32 = arith.constant 0 : i32
    %c0_i32_0 = arith.constant 0 : i32
    %c0_i32_1 = arith.constant 0 : i32
    return %c0_i32, %c0_i32_0 : i32, i32
  }
  func.func @transform_2(%arg0: i32) -> (i32, i32) {
    %c0_i32 = arith.constant 0 : i32
    %c0_i32_0 = arith.constant 0 : i32
    %c0_i32_1 = arith.constant 0 : i32
    return %c0_i32, %c0_i32_0 : i32, i32
  }
  func.func @transform_3(%arg0: i32) -> (i32, i32) {
    %c0_i32 = arith.constant 0 : i32
    %c0_i32_0 = arith.constant 0 : i32
    %c0_i32_1 = arith.constant 0 : i32
    return %c0_i32, %c0_i32_0 : i32, i32
  }
  func.func @transform_4(%arg0: i32) -> (i32, i32) {
    %c0_i32 = arith.constant 0 : i32
    %c0_i32_0 = arith.constant 0 : i32
    %c0_i32_1 = arith.constant 0 : i32
    return %c0_i32, %c0_i32_0 : i32, i32
  }
  func.func @transform_5(%arg0: i32) -> (i32, i32) {
    %c0_i32 = arith.constant 0 : i32
    %c0_i32_0 = arith.constant 0 : i32
    %c0_i32_1 = arith.constant 0 : i32
    return %c0_i32, %c0_i32_0 : i32, i32
  }
  func.func @transform_6(%arg0: i32) -> (i32, i32) {
    %c0_i32 = arith.constant 0 : i32
    %c0_i32_0 = arith.constant 0 : i32
    %c0_i32_1 = arith.constant 0 : i32
    return %c0_i32, %c0_i32_0 : i32, i32
  }
  func.func @transform_7(%arg0: i32) -> (i32, i32) {
    %c0_i32 = arith.constant 0 : i32
    %c0_i32_0 = arith.constant 0 : i32
    return %arg0, %c0_i32 : i32, i32
  }
}

</mosaic_0001>

<llo_original>
// kernel: dqn_forward.5
$region0: #{dqn_forward.5}
  #allocation0 [shape = 'u32[]', space=smem, size = 0x4, offset = 0x4, fixed_abs, tag = 'smem constant byte address 0x4 - core index']
  #allocation1 [shape = 'u32[72,128]{1,0:T(1,128)}', space=vmem, size = 0x9000, scoped, tag = 'internal scratch']
  %s0 = inlined_call_operand.vmem [shape: bf16[1922,27], index: 0, kind: input, shape index: {}]
  %s1 = inlined_call_operand.vmem [shape: bf16[27,16], index: 1, kind: input, shape index: {}]
  %s2 = inlined_call_operand.vmem [shape: f32[1,16], index: 2, kind: input, shape index: {}]
  %s3 = inlined_call_operand.vmem [shape: bf16[1922,16], index: 3, kind: output, shape index: {}]
  %s4 = sld [smem:[#allocation0]]
  $region22: #{dqn_forward.5} parent=0
    _
  %s6 = ssub.s32 1, %s4
  %s7 = scalar_select 0, %s6, %s4
  // Predicated region
  $region2: #{dqn_forward.5} parent=0 // pred_check
    _
  $region3: #{dqn_forward.5} parent=0 // pred_check_branch
    %9 = sbr.rel (0) target = $region5
  $region4: #{dqn_forward.5} parent=0 // pred_region
    _
  $region5: #{dqn_forward.5} parent=0 // pred_fallthru
    _
  // Predicated region
  $region6: #{dqn_forward.5} parent=0 // pred_check
    _
  $region7: #{dqn_forward.5} parent=0 // pred_check_branch
    %11 = sbr.rel (0) target = $region9
  $region8: #{dqn_forward.5} parent=0 // pred_region
    _
  $region9: #{dqn_forward.5} parent=0 // pred_fallthru
    _
  // Predicated region
  $region10: #{dqn_forward.5} parent=0 // pred_check
    _
  $region11: #{dqn_forward.5} parent=0 // pred_check_branch
    %13 = sbr.rel (0) target = $region13
  $region12: #{dqn_forward.5} parent=0 // pred_region
    _
  $region13: #{dqn_forward.5} parent=0 // pred_fallthru
    _
  %v15 = vld [vmem:[%s0] sm:$0xf]
  %v16 = vld [vmem:[%s0 + $0x4] sm:$0xf]
  %v17 = vld [vmem:[%s0 + $0x8] sm:$0xf]
  %v18 = vld [vmem:[%s0 + $0xc] sm:$0xf]
  %v19 = vld [vmem:[%s0 + $0x10] sm:$0xf]
  %v20 = vld [vmem:[%s0 + $0x14] sm:$0xf]
  %v21 = vld [vmem:[%s0 + $0x18] sm:$0xf]
  %v22 = vld [vmem:[%s0 + $0x1c] sm:$0xf]
  %v23 = vld [vmem:[%s0 + $0x20] sm:$0xf]
  %v24 = vld [vmem:[%s0 + $0x24] sm:$0xf]
  %v25 = vld [vmem:[%s0 + $0x28] sm:$0xf]
  %v26 = vld [vmem:[%s0 + $0x2c] sm:$0xf]
  %v27 = vld [vmem:[%s0 + $0x30] sm:$0xf]
  %v28 = vld [vmem:[%s0 + $0x34] sm:$0xf]
  %v29 = vld [vmem:[%s0 + $0x38] sm:$0xf]
  %v30 = vld [vmem:[%s0 + $0x3c] sm:$0xf]
  %v31 = vld [vmem:[%s0 + $0x40] sm:$0xf]
  %v32 = vld [vmem:[%s0 + $0x44] sm:$0xf]
  %v33 = vld [vmem:[%s0 + $0x48] sm:$0xf]
  %v34 = vld [vmem:[%s0 + $0x4c] sm:$0xf]
  %v35 = vld [vmem:[%s0 + $0x50] sm:$0xf]
  %v36 = vld [vmem:[%s0 + $0x54] sm:$0xf]
  %v37 = vld [vmem:[%s0 + $0x58] sm:$0xf]
  %v38 = vld [vmem:[%s0 + $0x5c] sm:$0xf]
  %v39 = vld [vmem:[%s0 + $0x60] sm:$0xf]
  %v40 = vld [vmem:[%s0 + $0x64] sm:$0xf]
  %v41 = vld [vmem:[%s0 + $0x68] sm:$0xf]
  %v42 = vld [vmem:[%s0 + $0x6c] sm:$0xf]
  %v43 = vld [vmem:[%s0 + $0x70] sm:$0xf]
  %v44 = vld [vmem:[%s0 + $0x74] sm:$0xf]
  %v45 = vld [vmem:[%s0 + $0x78] sm:$0xf]
  %v46 = vld [vmem:[%s0 + $0x7c] sm:$0xf]
  %v47 = vld [vmem:[%s0 + $0x80] sm:$0xf]
  %v48 = vld [vmem:[%s0 + $0x84] sm:$0xf]
  %v49 = vld [vmem:[%s0 + $0x88] sm:$0xf]
  %v50 = vld [vmem:[%s0 + $0x8c] sm:$0xf]
  %v51 = vld [vmem:[%s0 + $0x90] sm:$0xf]
  %v52 = vld [vmem:[%s0 + $0x94] sm:$0xf]
  %v53 = vld [vmem:[%s0 + $0x98] sm:$0xf]
  %v54 = vld [vmem:[%s0 + $0x9c] sm:$0xf]
  %v55 = vld [vmem:[%s0 + $0xa0] sm:$0xf]
  %v56 = vld [vmem:[%s0 + $0xa4] sm:$0xf]
  %v57 = vld [vmem:[%s0 + $0xa8] sm:$0xf]
  %v58 = vld [vmem:[%s0 + $0xac] sm:$0xf]
  %v59 = vld [vmem:[%s0 + $0xb0] sm:$0xf]
  %v60 = vld [vmem:[%s0 + $0xb4] sm:$0xf]
  %v61 = vld [vmem:[%s0 + $0xb8] sm:$0xf]
  %v62 = vld [vmem:[%s0 + $0xbc] sm:$0xf]
  %v63 = vld [vmem:[%s0 + $0xc0] sm:$0xf]
  %v64 = vld [vmem:[%s0 + $0xc4] sm:$0xf]
  %v65 = vld [vmem:[%s0 + $0xc8] sm:$0xf]
  %v66 = vld [vmem:[%s0 + $0xcc] sm:$0xf]
  %v67 = vld [vmem:[%s0 + $0xd0] sm:$0xf]
  %v68 = vld [vmem:[%s0 + $0xd4] sm:$0xf]
  %v69 = vld [vmem:[%s0 + $0xd8] sm:$0xf]
  %v70 = vld [vmem:[%s0 + $0xdc] sm:$0xf]
  %v71 = vld [vmem:[%s0 + $0xe0] sm:$0xf]
  %v72 = vld [vmem:[%s0 + $0xe4] sm:$0xf]
  %v73 = vld [vmem:[%s0 + $0xe8] sm:$0xf]
  %v74 = vld [vmem:[%s0 + $0xec] sm:$0xf]
  %v75 = vld [vmem:[%s0 + $0xf0] sm:$0xf]
  %v76 = vld [vmem:[%s0 + $0xf4] sm:$0xf]
  %v77 = vld [vmem:[%s0 + $0xf8] sm:$0xf]
  %v78 = vld [vmem:[%s0 + $0xfc] sm:$0xf]
  %v79 = vld [vmem:[%s0 + $0x100] sm:$0xf]
  %v80 = vld [vmem:[%s0 + $0x104] sm:$0xf]
  %v81 = vld [vmem:[%s0 + $0x108] sm:$0xf]
  %v82 = vld [vmem:[%s0 + $0x10c] sm:$0xf]
  %v83 = vld [vmem:[%s0 + $0x110] sm:$0xf]
  %v84 = vld [vmem:[%s0 + $0x114] sm:$0xf]
  %v85 = vld [vmem:[%s0 + $0x118] sm:$0xf]
  %v86 = vld [vmem:[%s0 + $0x11c] sm:$0xf]
  %v87 = vld [vmem:[%s0 + $0x120] sm:$0xf]
  %v88 = vld [vmem:[%s0 + $0x124] sm:$0xf]
  %v89 = vld [vmem:[%s0 + $0x128] sm:$0xf]
  %v90 = vld [vmem:[%s0 + $0x12c] sm:$0xf]
  %v91 = vld [vmem:[%s0 + $0x130] sm:$0xf]
  %v92 = vld [vmem:[%s0 + $0x134] sm:$0xf]
  %v93 = vld [vmem:[%s0 + $0x138] sm:$0xf]
  %v94 = vld [vmem:[%s0 + $0x13c] sm:$0xf]
  %v95 = vld [vmem:[%s0 + $0x140] sm:$0xf]
  %v96 = vld [vmem:[%s0 + $0x144] sm:$0xf]
  %v97 = vld [vmem:[%s0 + $0x148] sm:$0xf]
  %v98 = vld [vmem:[%s0 + $0x14c] sm:$0xf]
  %v99 = vld [vmem:[%s0 + $0x150] sm:$0xf]
  %v100 = vld [vmem:[%s0 + $0x154] sm:$0xf]
  %v101 = vld [vmem:[%s0 + $0x158] sm:$0xf]
  %v102 = vld [vmem:[%s0 + $0x15c] sm:$0xf]
  %v103 = vld [vmem:[%s0 + $0x160] sm:$0xf]
  %v104 = vld [vmem:[%s0 + $0x164] sm:$0xf]
  %v105 = vld [vmem:[%s0 + $0x168] sm:$0xf]
  %v106 = vld [vmem:[%s0 + $0x16c] sm:$0xf]
  %v107 = vld [vmem:[%s0 + $0x170] sm:$0xf]
  %v108 = vld [vmem:[%s0 + $0x174] sm:$0xf]
  %v109 = vld [vmem:[%s0 + $0x178] sm:$0xf]
  %v110 = vld [vmem:[%s0 + $0x17c] sm:$0xf]
  %v111 = vld [vmem:[%s0 + $0x180] sm:$0xf]
  %v112 = vld [vmem:[%s0 + $0x184] sm:$0xf]
  %v113 = vld [vmem:[%s0 + $0x188] sm:$0xf]
  %v114 = vld [vmem:[%s0 + $0x18c] sm:$0xf]
  %v115 = vld [vmem:[%s0 + $0x190] sm:$0xf]
  %v116 = vld [vmem:[%s0 + $0x194] sm:$0xf]
  %v117 = vld [vmem:[%s0 + $0x198] sm:$0xf]
  %v118 = vld [vmem:[%s0 + $0x19c] sm:$0xf]
  %v119 = vld [vmem:[%s0 + $0x1a0] sm:$0xf]
  %v120 = vld [vmem:[%s0 + $0x1a4] sm:$0xf]
  %v121 = vld [vmem:[%s0 + $0x1a8] sm:$0xf]
  %v122 = vld [vmem:[%s0 + $0x1ac] sm:$0xf]
  %v123 = vld [vmem:[%s0 + $0x1b0] sm:$0xf]
  %v124 = vld [vmem:[%s0 + $0x1b4] sm:$0xf]
  %v125 = vld [vmem:[%s0 + $0x1b8] sm:$0xf]
  %v126 = vld [vmem:[%s0 + $0x1bc] sm:$0xf]
  %v127 = vld [vmem:[%s0 + $0x1c0] sm:$0xf]
  %v128 = vld [vmem:[%s0 + $0x1c4] sm:$0xf]
  %v129 = vld [vmem:[%s0 + $0x1c8] sm:$0xf]
  %v130 = vld [vmem:[%s0 + $0x1cc] sm:$0xf]
  %v131 = vld [vmem:[%s0 + $0x1d0] sm:$0xf]
  %v132 = vld [vmem:[%s0 + $0x1d4] sm:$0xf]
  %v133 = vld [vmem:[%s0 + $0x1d8] sm:$0xf]
  %v134 = vld [vmem:[%s0 + $0x1dc] sm:$0xf]
  %v135 = vld [vmem:[%s0 + $0x1e0] sm:$0xf]
  %v136 = vld [vmem:[%s0 + $0x1e4] sm:$0xf]
  %v137 = vld [vmem:[%s0 + $0x1e8] sm:$0xf]
  %v138 = vld [vmem:[%s0 + $0x1ec] sm:$0xf]
  %v139 = vld [vmem:[%s0 + $0x1f0] sm:$0xf]
  %v140 = vld [vmem:[%s0 + $0x1f4] sm:$0xf]
  %v141 = vld [vmem:[%s0 + $0x1f8] sm:$0xf]
  %v142 = vld [vmem:[%s0 + $0x1fc] sm:$0xf]
  %v143 = vld [vmem:[%s0 + $0x200] sm:$0xf]
  %v144 = vld [vmem:[%s0 + $0x204] sm:$0xf]
  %v145 = vld [vmem:[%s0 + $0x208] sm:$0xf]
  %v146 = vld [vmem:[%s0 + $0x20c] sm:$0xf]
  %v147 = vld [vmem:[%s0 + $0x210] sm:$0xf]
  %v148 = vld [vmem:[%s0 + $0x214] sm:$0xf]
  %v149 = vld [vmem:[%s0 + $0x218] sm:$0xf]
  %v150 = vld [vmem:[%s0 + $0x21c] sm:$0xf]
  %v151 = vld [vmem:[%s0 + $0x220] sm:$0xf]
  %v152 = vld [vmem:[%s0 + $0x224] sm:$0xf]
  %v153 = vld [vmem:[%s0 + $0x228] sm:$0xf]
  %v154 = vld [vmem:[%s0 + $0x22c] sm:$0xf]
  %v155 = vld [vmem:[%s0 + $0x230] sm:$0xf]
  %v156 = vld [vmem:[%s0 + $0x234] sm:$0xf]
  %v157 = vld [vmem:[%s0 + $0x238] sm:$0xf]
  %v158 = vld [vmem:[%s0 + $0x23c] sm:$0xf]
  %v159 = vld [vmem:[%s0 + $0x240] sm:$0xf]
  %v160 = vld [vmem:[%s0 + $0x244] sm:$0xf]
  %v161 = vld [vmem:[%s0 + $0x248] sm:$0xf]
  %v162 = vld [vmem:[%s0 + $0x24c] sm:$0xf]
  %v163 = vld [vmem:[%s0 + $0x250] sm:$0xf]
  %v164 = vld [vmem:[%s0 + $0x254] sm:$0xf]
  %v165 = vld [vmem:[%s0 + $0x258] sm:$0xf]
  %v166 = vld [vmem:[%s0 + $0x25c] sm:$0xf]
  %v167 = vld [vmem:[%s0 + $0x260] sm:$0xf]
  %v168 = vld [vmem:[%s0 + $0x264] sm:$0xf]
  %v169 = vld [vmem:[%s0 + $0x268] sm:$0xf]
  %v170 = vld [vmem:[%s0 + $0x26c] sm:$0xf]
  %v171 = vld [vmem:[%s0 + $0x270] sm:$0xf]
  %v172 = vld [vmem:[%s0 + $0x274] sm:$0xf]
  %v173 = vld [vmem:[%s0 + $0x278] sm:$0xf]
  %v174 = vld [vmem:[%s0 + $0x27c] sm:$0xf]
  %v175 = vld [vmem:[%s0 + $0x280] sm:$0xf]
  %v176 = vld [vmem:[%s0 + $0x284] sm:$0xf]
  %v177 = vld [vmem:[%s0 + $0x288] sm:$0xf]
  %v178 = vld [vmem:[%s0 + $0x28c] sm:$0xf]
  %v179 = vld [vmem:[%s0 + $0x290] sm:$0xf]
  %v180 = vld [vmem:[%s0 + $0x294] sm:$0xf]
  %v181 = vld [vmem:[%s0 + $0x298] sm:$0xf]
  %v182 = vld [vmem:[%s0 + $0x29c] sm:$0xf]
  %v183 = vld [vmem:[%s0 + $0x2a0] sm:$0xf]
  %v184 = vld [vmem:[%s0 + $0x2a4] sm:$0xf]
  %v185 = vld [vmem:[%s0 + $0x2a8] sm:$0xf]
  %v186 = vld [vmem:[%s0 + $0x2ac] sm:$0xf]
  %v187 = vld [vmem:[%s0 + $0x2b0] sm:$0xf]
  %v188 = vld [vmem:[%s0 + $0x2b4] sm:$0xf]
  %v189 = vld [vmem:[%s0 + $0x2b8] sm:$0xf]
  %v190 = vld [vmem:[%s0 + $0x2bc] sm:$0xf]
  %v191 = vld [vmem:[%s0 + $0x2c0] sm:$0xf]
  %v192 = vld [vmem:[%s0 + $0x2c4] sm:$0xf]
  %v193 = vld [vmem:[%s0 + $0x2c8] sm:$0xf]
  %v194 = vld [vmem:[%s0 + $0x2cc] sm:$0xf]
  %v195 = vld [vmem:[%s0 + $0x2d0] sm:$0xf]
  %v196 = vld [vmem:[%s0 + $0x2d4] sm:$0xf]
  %v197 = vld [vmem:[%s0 + $0x2d8] sm:$0xf]
  %v198 = vld [vmem:[%s0 + $0x2dc] sm:$0xf]
  %v199 = vld [vmem:[%s0 + $0x2e0] sm:$0xf]
  %v200 = vld [vmem:[%s0 + $0x2e4] sm:$0xf]
  %v201 = vld [vmem:[%s0 + $0x2e8] sm:$0xf]
  %v202 = vld [vmem:[%s0 + $0x2ec] sm:$0xf]
  %v203 = vld [vmem:[%s0 + $0x2f0] sm:$0xf]
  %v204 = vld [vmem:[%s0 + $0x2f4] sm:$0xf]
  %v205 = vld [vmem:[%s0 + $0x2f8] sm:$0xf]
  %v206 = vld [vmem:[%s0 + $0x2fc] sm:$0xf]
  %v207 = vld [vmem:[%s0 + $0x300] sm:$0xf]
  %v208 = vld [vmem:[%s0 + $0x304] sm:$0xf]
  %v209 = vld [vmem:[%s0 + $0x308] sm:$0xf]
  %v210 = vld [vmem:[%s0 + $0x30c] sm:$0xf]
  %v211 = vld [vmem:[%s0 + $0x310] sm:$0xf]
  %v212 = vld [vmem:[%s0 + $0x314] sm:$0xf]
  %v213 = vld [vmem:[%s0 + $0x318] sm:$0xf]
  %v214 = vld [vmem:[%s0 + $0x31c] sm:$0xf]
  %v215 = vld [vmem:[%s0 + $0x320] sm:$0xf]
  %v216 = vld [vmem:[%s0 + $0x324] sm:$0xf]
  %v217 = vld [vmem:[%s0 + $0x328] sm:$0xf]
  %v218 = vld [vmem:[%s0 + $0x32c] sm:$0xf]
  %v219 = vld [vmem:[%s0 + $0x330] sm:$0xf]
  %v220 = vld [vmem:[%s0 + $0x334] sm:$0xf]
  %v221 = vld [vmem:[%s0 + $0x338] sm:$0xf]
  %v222 = vld [vmem:[%s0 + $0x33c] sm:$0xf]
  %v223 = vld [vmem:[%s0 + $0x340] sm:$0xf]
  %v224 = vld [vmem:[%s0 + $0x344] sm:$0xf]
  %v225 = vld [vmem:[%s0 + $0x348] sm:$0xf]
  %v226 = vld [vmem:[%s0 + $0x34c] sm:$0xf]
  %v227 = vld [vmem:[%s0 + $0x350] sm:$0xf]
  %v228 = vld [vmem:[%s0 + $0x354] sm:$0xf]
  %v229 = vld [vmem:[%s0 + $0x358] sm:$0xf]
  %v230 = vld [vmem:[%s0 + $0x35c] sm:$0xf]
  %v231 = vld [vmem:[%s0 + $0x360] sm:$0xf]
  %v232 = vld [vmem:[%s0 + $0x364] sm:$0xf]
  %v233 = vld [vmem:[%s0 + $0x368] sm:$0xf]
  %v234 = vld [vmem:[%s0 + $0x36c] sm:$0xf]
  %v235 = vld [vmem:[%s0 + $0x370] sm:$0xf]
  %v236 = vld [vmem:[%s0 + $0x374] sm:$0xf]
  %v237 = vld [vmem:[%s0 + $0x378] sm:$0xf]
  %v238 = vld [vmem:[%s0 + $0x37c] sm:$0xf]
  %v239 = vld [vmem:[%s0 + $0x380] sm:$0xf]
  %v240 = vld [vmem:[%s0 + $0x384] sm:$0xf]
  %v241 = vld [vmem:[%s0 + $0x388] sm:$0xf]
  %v242 = vld [vmem:[%s0 + $0x38c] sm:$0xf]
  %v243 = vld [vmem:[%s0 + $0x390] sm:$0xf]
  %v244 = vld [vmem:[%s0 + $0x394] sm:$0xf]
  %v245 = vld [vmem:[%s0 + $0x398] sm:$0xf]
  %v246 = vld [vmem:[%s0 + $0x39c] sm:$0xf]
  %v247 = vld [vmem:[%s0 + $0x3a0] sm:$0xf]
  %v248 = vld [vmem:[%s0 + $0x3a4] sm:$0xf]
  %v249 = vld [vmem:[%s0 + $0x3a8] sm:$0xf]
  %v250 = vld [vmem:[%s0 + $0x3ac] sm:$0xf]
  %v251 = vld [vmem:[%s0 + $0x3b0] sm:$0xf]
  %v252 = vld [vmem:[%s0 + $0x3b4] sm:$0xf]
  %v253 = vld [vmem:[%s0 + $0x3b8] sm:$0xf]
  %v254 = vld [vmem:[%s0 + $0x3bc] sm:$0xf]
  %v255 = vld [vmem:[%s0 + $0x3c0] sm:$0x1]
  %v256 = vld [vmem:[%s1] sm:$0xf]
  %v257 = vld [vmem:[%s1 + $0x4] sm:$0xf]
  %v258 = vld [vmem:[%s1 + $0x8] sm:$0xf]
  %v259 = vld [vmem:[%s1 + $0xc] sm:$0x3]
  %v260 = vld [vmem:[%s2] sm:$0x1]
  %v262 = vperm.slane %v260, 0
  %v505 = vunpack.c.l.b16 %v15
  %v506 = vunpack.c.l.b16 %v16
  %v507 = vunpack.c.l.b16 %v17
  %v508 = vunpack.c.l.b16 %v18
  %v509 = vunpack.c.l.b16 %v19
  %v510 = vunpack.c.l.b16 %v20
  %v511 = vunpack.c.l.b16 %v21
  %v512 = vunpack.c.l.b16 %v22
  %v513 = vunpack.c.l.b16 %v23
  %v514 = vunpack.c.l.b16 %v24
  %v515 = vunpack.c.l.b16 %v25
  %v516 = vunpack.c.l.b16 %v26
  %v517 = vunpack.c.l.b16 %v27
  %v518 = vunpack.c.l.b16 %v28
  %v519 = vunpack.c.l.b16 %v29
  %v520 = vunpack.c.l.b16 %v30
  %v521 = vunpack.c.l.b16 %v31
  %v522 = vunpack.c.l.b16 %v32
  %v523 = vunpack.c.l.b16 %v33
  %v524 = vunpack.c.l.b16 %v34
  %v525 = vunpack.c.l.b16 %v35
  %v526 = vunpack.c.l.b16 %v36
  %v527 = vunpack.c.l.b16 %v37
  %v528 = vunpack.c.l.b16 %v38
  %v529 = vunpack.c.l.b16 %v39
  %v530 = vunpack.c.l.b16 %v40
  %v531 = vunpack.c.l.b16 %v41
  %v532 = vunpack.c.l.b16 %v42
  %v533 = vunpack.c.l.b16 %v43
  %v534 = vunpack.c.l.b16 %v44
  %v535 = vunpack.c.l.b16 %v45
  %v536 = vunpack.c.l.b16 %v46
  %v537 = vunpack.c.l.b16 %v47
  %v538 = vunpack.c.l.b16 %v48
  %v539 = vunpack.c.l.b16 %v49
  %v540 = vunpack.c.l.b16 %v50
  %v541 = vunpack.c.l.b16 %v51
  %v542 = vunpack.c.l.b16 %v52
  %v543 = vunpack.c.l.b16 %v53
  %v544 = vunpack.c.l.b16 %v54
  %v545 = vunpack.c.l.b16 %v55
  %v546 = vunpack.c.l.b16 %v56
  %v547 = vunpack.c.l.b16 %v57
  %v548 = vunpack.c.l.b16 %v58
  %v549 = vunpack.c.l.b16 %v59
  %v550 = vunpack.c.l.b16 %v60
  %v551 = vunpack.c.l.b16 %v61
  %v552 = vunpack.c.l.b16 %v62
  %v553 = vunpack.c.l.b16 %v63
  %v554 = vunpack.c.l.b16 %v64
  %v555 = vunpack.c.l.b16 %v65
  %v556 = vunpack.c.l.b16 %v66
  %v557 = vunpack.c.l.b16 %v67
  %v558 = vunpack.c.l.b16 %v68
  %v559 = vunpack.c.l.b16 %v69
  %v560 = vunpack.c.l.b16 %v70
  %v561 = vunpack.c.l.b16 %v71
  %v562 = vunpack.c.l.b16 %v72
  %v563 = vunpack.c.l.b16 %v73
  %v564 = vunpack.c.l.b16 %v74
  %v565 = vunpack.c.l.b16 %v75
  %v566 = vunpack.c.l.b16 %v76
  %v567 = vunpack.c.l.b16 %v77
  %v568 = vunpack.c.l.b16 %v78
  %v569 = vunpack.c.l.b16 %v79
  %v570 = vunpack.c.l.b16 %v80
  %v571 = vunpack.c.l.b16 %v81
  %v572 = vunpack.c.l.b16 %v82
  %v573 = vunpack.c.l.b16 %v83
  %v574 = vunpack.c.l.b16 %v84
  %v575 = vunpack.c.l.b16 %v85
  %v576 = vunpack.c.l.b16 %v86
  %v577 = vunpack.c.l.b16 %v87
  %v578 = vunpack.c.l.b16 %v88
  %v579 = vunpack.c.l.b16 %v89
  %v580 = vunpack.c.l.b16 %v90
  %v581 = vunpack.c.l.b16 %v91
  %v582 = vunpack.c.l.b16 %v92
  %v583 = vunpack.c.l.b16 %v93
  %v584 = vunpack.c.l.b16 %v94
  %v585 = vunpack.c.l.b16 %v95
  %v586 = vunpack.c.l.b16 %v96
  %v587 = vunpack.c.l.b16 %v97
  %v588 = vunpack.c.l.b16 %v98
  %v589 = vunpack.c.l.b16 %v99
  %v590 = vunpack.c.l.b16 %v100
  %v591 = vunpack.c.l.b16 %v101
  %v592 = vunpack.c.l.b16 %v102
  %v593 = vunpack.c.l.b16 %v103
  %v594 = vunpack.c.l.b16 %v104
  %v595 = vunpack.c.l.b16 %v105
  %v596 = vunpack.c.l.b16 %v106
  %v597 = vunpack.c.l.b16 %v107
  %v598 = vunpack.c.l.b16 %v108
  %v599 = vunpack.c.l.b16 %v109
  %v600 = vunpack.c.l.b16 %v110
  %v601 = vunpack.c.l.b16 %v111
  %v602 = vunpack.c.l.b16 %v112
  %v603 = vunpack.c.l.b16 %v113
  %v604 = vunpack.c.l.b16 %v114
  %v605 = vunpack.c.l.b16 %v115
  %v606 = vunpack.c.l.b16 %v116
  %v607 = vunpack.c.l.b16 %v117
  %v608 = vunpack.c.l.b16 %v118
  %v609 = vunpack.c.l.b16 %v119
  %v610 = vunpack.c.l.b16 %v120
  %v611 = vunpack.c.l.b16 %v121
  %v612 = vunpack.c.l.b16 %v122
  %v613 = vunpack.c.l.b16 %v123
  %v614 = vunpack.c.l.b16 %v124
  %v615 = vunpack.c.l.b16 %v125
  %v616 = vunpack.c.l.b16 %v126
  %v617 = vunpack.c.l.b16 %v127
  %v618 = vunpack.c.l.b16 %v128
  %v619 = vunpack.c.l.b16 %v129
  %v620 = vunpack.c.l.b16 %v130
  %v621 = vunpack.c.l.b16 %v131
  %v622 = vunpack.c.l.b16 %v132
  %v623 = vunpack.c.l.b16 %v133
  %v624 = vunpack.c.l.b16 %v134
  %v625 = vunpack.c.l.b16 %v135
  %v626 = vunpack.c.l.b16 %v136
  %v627 = vunpack.c.l.b16 %v137
  %v628 = vunpack.c.l.b16 %v138
  %v629 = vunpack.c.l.b16 %v139
  %v630 = vunpack.c.l.b16 %v140
  %v631 = vunpack.c.l.b16 %v141
  %v632 = vunpack.c.l.b16 %v142
  %v633 = vunpack.c.l.b16 %v143
  %v634 = vunpack.c.l.b16 %v144
  %v635 = vunpack.c.l.b16 %v145
  %v636 = vunpack.c.l.b16 %v146
  %v637 = vunpack.c.l.b16 %v147
  %v638 = vunpack.c.l.b16 %v148
  %v639 = vunpack.c.l.b16 %v149
  %v640 = vunpack.c.l.b16 %v150
  %v641 = vunpack.c.l.b16 %v151
  %v642 = vunpack.c.l.b16 %v152
  %v643 = vunpack.c.l.b16 %v153
  %v644 = vunpack.c.l.b16 %v154
  %v645 = vunpack.c.l.b16 %v155
  %v646 = vunpack.c.l.b16 %v156
  %v647 = vunpack.c.l.b16 %v157
  %v648 = vunpack.c.l.b16 %v158
  %v649 = vunpack.c.l.b16 %v159
  %v650 = vunpack.c.l.b16 %v160
  %v651 = vunpack.c.l.b16 %v161
  %v652 = vunpack.c.l.b16 %v162
  %v653 = vunpack.c.l.b16 %v163
  %v654 = vunpack.c.l.b16 %v164
  %v655 = vunpack.c.l.b16 %v165
  %v656 = vunpack.c.l.b16 %v166
  %v657 = vunpack.c.l.b16 %v167
  %v658 = vunpack.c.l.b16 %v168
  %v659 = vunpack.c.l.b16 %v169
  %v660 = vunpack.c.l.b16 %v170
  %v661 = vunpack.c.l.b16 %v171
  %v662 = vunpack.c.l.b16 %v172
  %v663 = vunpack.c.l.b16 %v173
  %v664 = vunpack.c.l.b16 %v174
  %v665 = vunpack.c.l.b16 %v175
  %v666 = vunpack.c.l.b16 %v176
  %v667 = vunpack.c.l.b16 %v177
  %v668 = vunpack.c.l.b16 %v178
  %v669 = vunpack.c.l.b16 %v179
  %v670 = vunpack.c.l.b16 %v180
  %v671 = vunpack.c.l.b16 %v181
  %v672 = vunpack.c.l.b16 %v182
  %v673 = vunpack.c.l.b16 %v183
  %v674 = vunpack.c.l.b16 %v184
  %v675 = vunpack.c.l.b16 %v185
  %v676 = vunpack.c.l.b16 %v186
  %v677 = vunpack.c.l.b16 %v187
  %v678 = vunpack.c.l.b16 %v188
  %v679 = vunpack.c.l.b16 %v189
  %v680 = vunpack.c.l.b16 %v190
  %v681 = vunpack.c.l.b16 %v191
  %v682 = vunpack.c.l.b16 %v192
  %v683 = vunpack.c.l.b16 %v193
  %v684 = vunpack.c.l.b16 %v194
  %v685 = vunpack.c.l.b16 %v195
  %v686 = vunpack.c.l.b16 %v196
  %v687 = vunpack.c.l.b16 %v197
  %v688 = vunpack.c.l.b16 %v198
  %v689 = vunpack.c.l.b16 %v199
  %v690 = vunpack.c.l.b16 %v200
  %v691 = vunpack.c.l.b16 %v201
  %v692 = vunpack.c.l.b16 %v202
  %v693 = vunpack.c.l.b16 %v203
  %v694 = vunpack.c.l.b16 %v204
  %v695 = vunpack.c.l.b16 %v205
  %v696 = vunpack.c.l.b16 %v206
  %v697 = vunpack.c.l.b16 %v207
  %v698 = vunpack.c.l.b16 %v208
  %v699 = vunpack.c.l.b16 %v209
  %v700 = vunpack.c.l.b16 %v210
  %v701 = vunpack.c.l.b16 %v211
  %v702 = vunpack.c.l.b16 %v212
  %v703 = vunpack.c.l.b16 %v213
  %v704 = vunpack.c.l.b16 %v214
  %v705 = vunpack.c.l.b16 %v215
  %v706 = vunpack.c.l.b16 %v216
  %v707 = vunpack.c.l.b16 %v217
  %v708 = vunpack.c.l.b16 %v218
  %v709 = vunpack.c.l.b16 %v219
  %v710 = vunpack.c.l.b16 %v220
  %v711 = vunpack.c.l.b16 %v221
  %v712 = vunpack.c.l.b16 %v222
  %v713 = vunpack.c.l.b16 %v223
  %v714 = vunpack.c.l.b16 %v224
  %v715 = vunpack.c.l.b16 %v225
  %v716 = vunpack.c.l.b16 %v226
  %v717 = vunpack.c.l.b16 %v227
  %v718 = vunpack.c.l.b16 %v228
  %v719 = vunpack.c.l.b16 %v229
  %v720 = vunpack.c.l.b16 %v230
  %v721 = vunpack.c.l.b16 %v231
  %v722 = vunpack.c.l.b16 %v232
  %v723 = vunpack.c.l.b16 %v233
  %v724 = vunpack.c.l.b16 %v234
  %v725 = vunpack.c.l.b16 %v235
  %v726 = vunpack.c.l.b16 %v236
  %v727 = vunpack.c.l.b16 %v237
  %v728 = vunpack.c.l.b16 %v238
  %v729 = vunpack.c.l.b16 %v239
  %v730 = vunpack.c.l.b16 %v240
  %v731 = vunpack.c.l.b16 %v241
  %v732 = vunpack.c.l.b16 %v242
  %v733 = vunpack.c.l.b16 %v243
  %v734 = vunpack.c.l.b16 %v244
  %v735 = vunpack.c.l.b16 %v245
  %v736 = vunpack.c.l.b16 %v246
  %v737 = vunpack.c.l.b16 %v247
  %v738 = vunpack.c.l.b16 %v248
  %v739 = vunpack.c.l.b16 %v249
  %v740 = vunpack.c.l.b16 %v250
  %v741 = vunpack.c.l.b16 %v251
  %v742 = vunpack.c.l.b16 %v252
  %v743 = vunpack.c.l.b16 %v253
  %v744 = vunpack.c.l.b16 %v254
  %v745 = vunpack.c.l.b16 %v255
  %v746 = vpack.c.b16 %v506, %v505
  %v747 = vpack.c.b16 %v508, %v507
  %v748 = vpack.c.b16 %v510, %v509
  %v749 = vpack.c.b16 %v512, %v511
  %v750 = vpack.c.b16 %v514, %v513
  %v751 = vpack.c.b16 %v516, %v515
  %v752 = vpack.c.b16 %v518, %v517
  %v753 = vpack.c.b16 %v520, %v519
  %v754 = vpack.c.b16 %v522, %v521
  %v755 = vpack.c.b16 %v524, %v523
  %v756 = vpack.c.b16 %v526, %v525
  %v757 = vpack.c.b16 %v528, %v527
  %v758 = vpack.c.b16 %v530, %v529
  %v759 = vpack.c.b16 %v532, %v531
  %v760 = vpack.c.b16 %v534, %v533
  %v761 = vpack.c.b16 %v536, %v535
  %v762 = vpack.c.b16 %v538, %v537
  %v763 = vpack.c.b16 %v540, %v539
  %v764 = vpack.c.b16 %v542, %v541
  %v765 = vpack.c.b16 %v544, %v543
  %v766 = vpack.c.b16 %v546, %v545
  %v767 = vpack.c.b16 %v548, %v547
  %v768 = vpack.c.b16 %v550, %v549
  %v769 = vpack.c.b16 %v552, %v551
  %v770 = vpack.c.b16 %v554, %v553
  %v771 = vpack.c.b16 %v556, %v555
  %v772 = vpack.c.b16 %v558, %v557
  %v773 = vpack.c.b16 %v560, %v559
  %v774 = vpack.c.b16 %v562, %v561
  %v775 = vpack.c.b16 %v564, %v563
  %v776 = vpack.c.b16 %v566, %v565
  %v777 = vpack.c.b16 %v568, %v567
  %v778 = vpack.c.b16 %v570, %v569
  %v779 = vpack.c.b16 %v572, %v571
  %v780 = vpack.c.b16 %v574, %v573
  %v781 = vpack.c.b16 %v576, %v575
  %v782 = vpack.c.b16 %v578, %v577
  %v783 = vpack.c.b16 %v580, %v579
  %v784 = vpack.c.b16 %v582, %v581
  %v785 = vpack.c.b16 %v584, %v583
  %v786 = vpack.c.b16 %v586, %v585
  %v787 = vpack.c.b16 %v588, %v587
  %v788 = vpack.c.b16 %v590, %v589
  %v789 = vpack.c.b16 %v592, %v591
  %v790 = vpack.c.b16 %v594, %v593
  %v791 = vpack.c.b16 %v596, %v595
  %v792 = vpack.c.b16 %v598, %v597
  %v793 = vpack.c.b16 %v600, %v599
  %v794 = vpack.c.b16 %v602, %v601
  %v795 = vpack.c.b16 %v604, %v603
  %v796 = vpack.c.b16 %v606, %v605
  %v797 = vpack.c.b16 %v608, %v607
  %v798 = vpack.c.b16 %v610, %v609
  %v799 = vpack.c.b16 %v612, %v611
  %v800 = vpack.c.b16 %v614, %v613
  %v801 = vpack.c.b16 %v616, %v615
  %v802 = vpack.c.b16 %v618, %v617
  %v803 = vpack.c.b16 %v620, %v619
  %v804 = vpack.c.b16 %v622, %v621
  %v805 = vpack.c.b16 %v624, %v623
  %v806 = vpack.c.b16 %v626, %v625
  %v807 = vpack.c.b16 %v628, %v627
  %v808 = vpack.c.b16 %v630, %v629
  %v809 = vpack.c.b16 %v632, %v631
  %v810 = vpack.c.b16 %v634, %v633
  %v811 = vpack.c.b16 %v636, %v635
  %v812 = vpack.c.b16 %v638, %v637
  %v813 = vpack.c.b16 %v640, %v639
  %v814 = vpack.c.b16 %v642, %v641
  %v815 = vpack.c.b16 %v644, %v643
  %v816 = vpack.c.b16 %v646, %v645
  %v817 = vpack.c.b16 %v648, %v647
  %v818 = vpack.c.b16 %v650, %v649
  %v819 = vpack.c.b16 %v652, %v651
  %v820 = vpack.c.b16 %v654, %v653
  %v821 = vpack.c.b16 %v656, %v655
  %v822 = vpack.c.b16 %v658, %v657
  %v823 = vpack.c.b16 %v660, %v659
  %v824 = vpack.c.b16 %v662, %v661
  %v825 = vpack.c.b16 %v664, %v663
  %v826 = vpack.c.b16 %v666, %v665
  %v827 = vpack.c.b16 %v668, %v667
  %v828 = vpack.c.b16 %v670, %v669
  %v829 = vpack.c.b16 %v672, %v671
  %v830 = vpack.c.b16 %v674, %v673
  %v831 = vpack.c.b16 %v676, %v675
  %v832 = vpack.c.b16 %v678, %v677
  %v833 = vpack.c.b16 %v680, %v679
  %v834 = vpack.c.b16 %v682, %v681
  %v835 = vpack.c.b16 %v684, %v683
  %v836 = vpack.c.b16 %v686, %v685
  %v837 = vpack.c.b16 %v688, %v687
  %v838 = vpack.c.b16 %v690, %v689
  %v839 = vpack.c.b16 %v692, %v691
  %v840 = vpack.c.b16 %v694, %v693
  %v841 = vpack.c.b16 %v696, %v695
  %v842 = vpack.c.b16 %v698, %v697
  %v843 = vpack.c.b16 %v700, %v699
  %v844 = vpack.c.b16 %v702, %v701
  %v845 = vpack.c.b16 %v704, %v703
  %v846 = vpack.c.b16 %v706, %v705
  %v847 = vpack.c.b16 %v708, %v707
  %v848 = vpack.c.b16 %v710, %v709
  %v849 = vpack.c.b16 %v712, %v711
  %v850 = vpack.c.b16 %v714, %v713
  %v851 = vpack.c.b16 %v716, %v715
  %v852 = vpack.c.b16 %v718, %v717
  %v853 = vpack.c.b16 %v720, %v719
  %v854 = vpack.c.b16 %v722, %v721
  %v855 = vpack.c.b16 %v724, %v723
  %v856 = vpack.c.b16 %v726, %v725
  %v857 = vpack.c.b16 %v728, %v727
  %v858 = vpack.c.b16 %v730, %v729
  %v859 = vpack.c.b16 %v732, %v731
  %v860 = vpack.c.b16 %v734, %v733
  %v861 = vpack.c.b16 %v736, %v735
  %v862 = vpack.c.b16 %v738, %v737
  %v863 = vpack.c.b16 %v740, %v739
  %v864 = vpack.c.b16 %v742, %v741
  %v865 = vpack.c.b16 %v744, %v743
  %v866 = vpack.c.b16 %v745, %v745
  %v871 = vunpack.c.l.b16 %v256
  %v872 = vunpack.c.l.b16 %v257
  %v873 = vunpack.c.l.b16 %v258
  %v874 = vunpack.c.l.b16 %v259
  %v875 = vpack.c.b16 %v872, %v871
  %v876 = vpack.c.b16 %v874, %v873
  %vm878 = vcmask 220160
  %v880 = vsel %vm878, %v746, 0
  %v883 = vsel %vm878, %v747, 0
  %v886 = vsel %vm878, %v748, 0
  %v889 = vsel %vm878, %v749, 0
  %v892 = vsel %vm878, %v750, 0
  %v895 = vsel %vm878, %v751, 0
  %v898 = vsel %vm878, %v752, 0
  %v901 = vsel %vm878, %v753, 0
  %v904 = vsel %vm878, %v754, 0
  %v907 = vsel %vm878, %v755, 0
  %v910 = vsel %vm878, %v756, 0
  %v913 = vsel %vm878, %v757, 0
  %v916 = vsel %vm878, %v758, 0
  %v919 = vsel %vm878, %v759, 0
  %v922 = vsel %vm878, %v760, 0
  %v925 = vsel %vm878, %v761, 0
  %v928 = vsel %vm878, %v762, 0
  %v931 = vsel %vm878, %v763, 0
  %v934 = vsel %vm878, %v764, 0
  %v937 = vsel %vm878, %v765, 0
  %v940 = vsel %vm878, %v766, 0
  %v943 = vsel %vm878, %v767, 0
  %v946 = vsel %vm878, %v768, 0
  %v949 = vsel %vm878, %v769, 0
  %v952 = vsel %vm878, %v770, 0
  %v955 = vsel %vm878, %v771, 0
  %v958 = vsel %vm878, %v772, 0
  %v961 = vsel %vm878, %v773, 0
  %v964 = vsel %vm878, %v774, 0
  %v967 = vsel %vm878, %v775, 0
  %v970 = vsel %vm878, %v776, 0
  %v973 = vsel %vm878, %v777, 0
  %v976 = vsel %vm878, %v778, 0
  %v979 = vsel %vm878, %v779, 0
  %v982 = vsel %vm878, %v780, 0
  %v985 = vsel %vm878, %v781, 0
  %v988 = vsel %vm878, %v782, 0
  %v991 = vsel %vm878, %v783, 0
  %v994 = vsel %vm878, %v784, 0
  %v997 = vsel %vm878, %v785, 0
  %v1000 = vsel %vm878, %v786, 0
  %v1003 = vsel %vm878, %v787, 0
  %v1006 = vsel %vm878, %v788, 0
  %v1009 = vsel %vm878, %v789, 0
  %v1012 = vsel %vm878, %v790, 0
  %v1015 = vsel %vm878, %v791, 0
  %v1018 = vsel %vm878, %v792, 0
  %v1021 = vsel %vm878, %v793, 0
  %v1024 = vsel %vm878, %v794, 0
  %v1027 = vsel %vm878, %v795, 0
  %v1030 = vsel %vm878, %v796, 0
  %v1033 = vsel %vm878, %v797, 0
  %v1036 = vsel %vm878, %v798, 0
  %v1039 = vsel %vm878, %v799, 0
  %v1042 = vsel %vm878, %v800, 0
  %v1045 = vsel %vm878, %v801, 0
  %v1048 = vsel %vm878, %v802, 0
  %v1051 = vsel %vm878, %v803, 0
  %v1054 = vsel %vm878, %v804, 0
  %v1057 = vsel %vm878, %v805, 0
  %v1060 = vsel %vm878, %v806, 0
  %v1063 = vsel %vm878, %v807, 0
  %v1066 = vsel %vm878, %v808, 0
  %v1069 = vsel %vm878, %v809, 0
  %v1072 = vsel %vm878, %v810, 0
  %v1075 = vsel %vm878, %v811, 0
  %v1078 = vsel %vm878, %v812, 0
  %v1081 = vsel %vm878, %v813, 0
  %v1084 = vsel %vm878, %v814, 0
  %v1087 = vsel %vm878, %v815, 0
  %v1090 = vsel %vm878, %v816, 0
  %v1093 = vsel %vm878, %v817, 0
  %v1096 = vsel %vm878, %v818, 0
  %v1099 = vsel %vm878, %v819, 0
  %v1102 = vsel %vm878, %v820, 0
  %v1105 = vsel %vm878, %v821, 0
  %v1108 = vsel %vm878, %v822, 0
  %v1111 = vsel %vm878, %v823, 0
  %v1114 = vsel %vm878, %v824, 0
  %v1117 = vsel %vm878, %v825, 0
  %v1120 = vsel %vm878, %v826, 0
  %v1123 = vsel %vm878, %v827, 0
  %v1126 = vsel %vm878, %v828, 0
  %v1129 = vsel %vm878, %v829, 0
  %v1132 = vsel %vm878, %v830, 0
  %v1135 = vsel %vm878, %v831, 0
  %v1138 = vsel %vm878, %v832, 0
  %v1141 = vsel %vm878, %v833, 0
  %v1144 = vsel %vm878, %v834, 0
  %v1147 = vsel %vm878, %v835, 0
  %v1150 = vsel %vm878, %v836, 0
  %v1153 = vsel %vm878, %v837, 0
  %v1156 = vsel %vm878, %v838, 0
  %v1159 = vsel %vm878, %v839, 0
  %v1162 = vsel %vm878, %v840, 0
  %v1165 = vsel %vm878, %v841, 0
  %v1168 = vsel %vm878, %v842, 0
  %v1171 = vsel %vm878, %v843, 0
  %v1174 = vsel %vm878, %v844, 0
  %v1177 = vsel %vm878, %v845, 0
  %v1180 = vsel %vm878, %v846, 0
  %v1183 = vsel %vm878, %v847, 0
  %v1186 = vsel %vm878, %v848, 0
  %v1189 = vsel %vm878, %v849, 0
  %v1192 = vsel %vm878, %v850, 0
  %v1195 = vsel %vm878, %v851, 0
  %v1198 = vsel %vm878, %v852, 0
  %v1201 = vsel %vm878, %v853, 0
  %v1204 = vsel %vm878, %v854, 0
  %v1207 = vsel %vm878, %v855, 0
  %v1210 = vsel %vm878, %v856, 0
  %v1213 = vsel %vm878, %v857, 0
  %v1216 = vsel %vm878, %v858, 0
  %v1219 = vsel %vm878, %v859, 0
  %v1222 = vsel %vm878, %v860, 0
  %v1225 = vsel %vm878, %v861, 0
  %v1228 = vsel %vm878, %v862, 0
  %v1231 = vsel %vm878, %v863, 0
  %v1234 = vsel %vm878, %v864, 0
  %v1237 = vsel %vm878, %v865, 0
  %v1240 = vsel %vm878, %v866, 0
  %vm1242 = vcmask 1044480
  %vm1243 = vcmask 1045504
  %v1244 = vsel %vm1242, 4294967295, 65535
  %v1245 = vsel %vm1243, %v1244, 0
  %v1247 = vand.u32 %v876, %v1245
  %1249 = vmatpush.bf16.msra.mxu0 0
  %1250 = vmatpush.bf16.msra.mxu0 0
  %1251 = vmatpush.bf16.msra.mxu0 0
  %1252 = vmatpush.bf16.msra.mxu0 0
  %1253 = vmatpush.bf16.msra.mxu0 0
  %1254 = vmatpush.bf16.msra.mxu0 0
  %1255 = vmatpush.bf16.msra.mxu0 %v1247
  %1256 = vmatpush.bf16.msra.mxu0 %v875
  %1257 = vmatmul.bf16.gmra.mxu0 %v880
  %v1258 = vpop.f32.mrf.mxu0
  %v1259 = vadd.f32 %v262, %v1258
  %v1260 = vpop.f32.mrf.mxu0
  %v1261 = vadd.f32 %v262, %v1260
  %1262 = vmatmul.bf16.gmra.mxu0 %v883
  %v1263 = vpop.f32.mrf.mxu0
  %v1264 = vadd.f32 %v262, %v1263
  %v1265 = vpop.f32.mrf.mxu0
  %v1266 = vadd.f32 %v262, %v1265
  %1267 = vmatmul.bf16.gmra.mxu0 %v886
  %v1268 = vpop.f32.mrf.mxu0
  %v1269 = vadd.f32 %v262, %v1268
  %v1270 = vpop.f32.mrf.mxu0
  %v1271 = vadd.f32 %v262, %v1270
  %1272 = vmatmul.bf16.gmra.mxu0 %v889
  %v1273 = vpop.f32.mrf.mxu0
  %v1274 = vadd.f32 %v262, %v1273
  %v1275 = vpop.f32.mrf.mxu0
  %v1276 = vadd.f32 %v262, %v1275
  %1277 = vmatmul.bf16.gmra.mxu0 %v892
  %v1278 = vpop.f32.mrf.mxu0
  %v1279 = vadd.f32 %v262, %v1278
  %v1280 = vpop.f32.mrf.mxu0
  %v1281 = vadd.f32 %v262, %v1280
  %1282 = vmatmul.bf16.gmra.mxu0 %v895
  %v1283 = vpop.f32.mrf.mxu0
  %v1284 = vadd.f32 %v262, %v1283
  %v1285 = vpop.f32.mrf.mxu0
  %v1286 = vadd.f32 %v262, %v1285
  %1287 = vmatmul.bf16.gmra.mxu0 %v898
  %v1288 = vpop.f32.mrf.mxu0
  %v1289 = vadd.f32 %v262, %v1288
  %v1290 = vpop.f32.mrf.mxu0
  %v1291 = vadd.f32 %v262, %v1290
  %1292 = vmatmul.bf16.gmra.mxu0 %v901
  %v1293 = vpop.f32.mrf.mxu0
  %v1294 = vadd.f32 %v262, %v1293
  %v1295 = vpop.f32.mrf.mxu0
  %v1296 = vadd.f32 %v262, %v1295
  %1297 = vmatmul.bf16.gmra.mxu0 %v904
  %v1298 = vpop.f32.mrf.mxu0
  %v1299 = vadd.f32 %v262, %v1298
  %v1300 = vpop.f32.mrf.mxu0
  %v1301 = vadd.f32 %v262, %v1300
  %1302 = vmatmul.bf16.gmra.mxu0 %v907
  %v1303 = vpop.f32.mrf.mxu0
  %v1304 = vadd.f32 %v262, %v1303
  %v1305 = vpop.f32.mrf.mxu0
  %v1306 = vadd.f32 %v262, %v1305
  %1307 = vmatmul.bf16.gmra.mxu0 %v910
  %v1308 = vpop.f32.mrf.mxu0
  %v1309 = vadd.f32 %v262, %v1308
  %v1310 = vpop.f32.mrf.mxu0
  %v1311 = vadd.f32 %v262, %v1310
  %1312 = vmatmul.bf16.gmra.mxu0 %v913
  %v1313 = vpop.f32.mrf.mxu0
  %v1314 = vadd.f32 %v262, %v1313
  %v1315 = vpop.f32.mrf.mxu0
  %v1316 = vadd.f32 %v262, %v1315
  %1317 = vmatmul.bf16.gmra.mxu0 %v916
  %v1318 = vpop.f32.mrf.mxu0
  %v1319 = vadd.f32 %v262, %v1318
  %v1320 = vpop.f32.mrf.mxu0
  %v1321 = vadd.f32 %v262, %v1320
  %1322 = vmatmul.bf16.gmra.mxu0 %v919
  %v1323 = vpop.f32.mrf.mxu0
  %v1324 = vadd.f32 %v262, %v1323
  %v1325 = vpop.f32.mrf.mxu0
  %v1326 = vadd.f32 %v262, %v1325
  %1327 = vmatmul.bf16.gmra.mxu0 %v922
  %v1328 = vpop.f32.mrf.mxu0
  %v1329 = vadd.f32 %v262, %v1328
  %v1330 = vpop.f32.mrf.mxu0
  %v1331 = vadd.f32 %v262, %v1330
  %1332 = vmatmul.bf16.gmra.mxu0 %v925
  %v1333 = vpop.f32.mrf.mxu0
  %v1334 = vadd.f32 %v262, %v1333
  %v1335 = vpop.f32.mrf.mxu0
  %v1336 = vadd.f32 %v262, %v1335
  %1337 = vmatmul.bf16.gmra.mxu0 %v928
  %v1338 = vpop.f32.mrf.mxu0
  %v1339 = vadd.f32 %v262, %v1338
  %v1340 = vpop.f32.mrf.mxu0
  %v1341 = vadd.f32 %v262, %v1340
  %1342 = vmatmul.bf16.gmra.mxu0 %v931
  %v1343 = vpop.f32.mrf.mxu0
  %v1344 = vadd.f32 %v262, %v1343
  %v1345 = vpop.f32.mrf.mxu0
  %v1346 = vadd.f32 %v262, %v1345
  %1347 = vmatmul.bf16.gmra.mxu0 %v934
  %v1348 = vpop.f32.mrf.mxu0
  %v1349 = vadd.f32 %v262, %v1348
  %v1350 = vpop.f32.mrf.mxu0
  %v1351 = vadd.f32 %v262, %v1350
  %1352 = vmatmul.bf16.gmra.mxu0 %v937
  %v1353 = vpop.f32.mrf.mxu0
  %v1354 = vadd.f32 %v262, %v1353
  %v1355 = vpop.f32.mrf.mxu0
  %v1356 = vadd.f32 %v262, %v1355
  %1357 = vmatmul.bf16.gmra.mxu0 %v940
  %v1358 = vpop.f32.mrf.mxu0
  %v1359 = vadd.f32 %v262, %v1358
  %v1360 = vpop.f32.mrf.mxu0
  %v1361 = vadd.f32 %v262, %v1360
  %1362 = vmatmul.bf16.gmra.mxu0 %v943
  %v1363 = vpop.f32.mrf.mxu0
  %v1364 = vadd.f32 %v262, %v1363
  %v1365 = vpop.f32.mrf.mxu0
  %v1366 = vadd.f32 %v262, %v1365
  %1367 = vmatmul.bf16.gmra.mxu0 %v946
  %v1368 = vpop.f32.mrf.mxu0
  %v1369 = vadd.f32 %v262, %v1368
  %v1370 = vpop.f32.mrf.mxu0
  %v1371 = vadd.f32 %v262, %v1370
  %1372 = vmatmul.bf16.gmra.mxu0 %v949
  %v1373 = vpop.f32.mrf.mxu0
  %v1374 = vadd.f32 %v262, %v1373
  %v1375 = vpop.f32.mrf.mxu0
  %v1376 = vadd.f32 %v262, %v1375
  %1377 = vmatmul.bf16.gmra.mxu0 %v952
  %v1378 = vpop.f32.mrf.mxu0
  %v1379 = vadd.f32 %v262, %v1378
  %v1380 = vpop.f32.mrf.mxu0
  %v1381 = vadd.f32 %v262, %v1380
  %1382 = vmatmul.bf16.gmra.mxu0 %v955
  %v1383 = vpop.f32.mrf.mxu0
  %v1384 = vadd.f32 %v262, %v1383
  %v1385 = vpop.f32.mrf.mxu0
  %v1386 = vadd.f32 %v262, %v1385
  %1387 = vmatmul.bf16.gmra.mxu0 %v958
  %v1388 = vpop.f32.mrf.mxu0
  %v1389 = vadd.f32 %v262, %v1388
  %v1390 = vpop.f32.mrf.mxu0
  %v1391 = vadd.f32 %v262, %v1390
  %1392 = vmatmul.bf16.gmra.mxu0 %v961
  %v1393 = vpop.f32.mrf.mxu0
  %v1394 = vadd.f32 %v262, %v1393
  %v1395 = vpop.f32.mrf.mxu0
  %v1396 = vadd.f32 %v262, %v1395
  %1397 = vmatmul.bf16.gmra.mxu0 %v964
  %v1398 = vpop.f32.mrf.mxu0
  %v1399 = vadd.f32 %v262, %v1398
  %v1400 = vpop.f32.mrf.mxu0
  %v1401 = vadd.f32 %v262, %v1400
  %1402 = vmatmul.bf16.gmra.mxu0 %v967
  %v1403 = vpop.f32.mrf.mxu0
  %v1404 = vadd.f32 %v262, %v1403
  %v1405 = vpop.f32.mrf.mxu0
  %v1406 = vadd.f32 %v262, %v1405
  %1407 = vmatmul.bf16.gmra.mxu0 %v970
  %v1408 = vpop.f32.mrf.mxu0
  %v1409 = vadd.f32 %v262, %v1408
  %v1410 = vpop.f32.mrf.mxu0
  %v1411 = vadd.f32 %v262, %v1410
  %1412 = vmatmul.bf16.gmra.mxu0 %v973
  %v1413 = vpop.f32.mrf.mxu0
  %v1414 = vadd.f32 %v262, %v1413
  %v1415 = vpop.f32.mrf.mxu0
  %v1416 = vadd.f32 %v262, %v1415
  %1417 = vmatmul.bf16.gmra.mxu0 %v976
  %v1418 = vpop.f32.mrf.mxu0
  %v1419 = vadd.f32 %v262, %v1418
  %v1420 = vpop.f32.mrf.mxu0
  %v1421 = vadd.f32 %v262, %v1420
  %1422 = vmatmul.bf16.gmra.mxu0 %v979
  %v1423 = vpop.f32.mrf.mxu0
  %v1424 = vadd.f32 %v262, %v1423
  %v1425 = vpop.f32.mrf.mxu0
  %v1426 = vadd.f32 %v262, %v1425
  %1427 = vmatmul.bf16.gmra.mxu0 %v982
  %v1428 = vpop.f32.mrf.mxu0
  %v1429 = vadd.f32 %v262, %v1428
  %v1430 = vpop.f32.mrf.mxu0
  %v1431 = vadd.f32 %v262, %v1430
  %1432 = vmatmul.bf16.gmra.mxu0 %v985
  %v1433 = vpop.f32.mrf.mxu0
  %v1434 = vadd.f32 %v262, %v1433
  %v1435 = vpop.f32.mrf.mxu0
  %v1436 = vadd.f32 %v262, %v1435
  %1437 = vmatmul.bf16.gmra.mxu0 %v988
  %v1438 = vpop.f32.mrf.mxu0
  %v1439 = vadd.f32 %v262, %v1438
  %v1440 = vpop.f32.mrf.mxu0
  %v1441 = vadd.f32 %v262, %v1440
  %1442 = vmatmul.bf16.gmra.mxu0 %v991
  %v1443 = vpop.f32.mrf.mxu0
  %v1444 = vadd.f32 %v262, %v1443
  %v1445 = vpop.f32.mrf.mxu0
  %v1446 = vadd.f32 %v262, %v1445
  %1447 = vmatmul.bf16.gmra.mxu0 %v994
  %v1448 = vpop.f32.mrf.mxu0
  %v1449 = vadd.f32 %v262, %v1448
  %v1450 = vpop.f32.mrf.mxu0
  %v1451 = vadd.f32 %v262, %v1450
  %1452 = vmatmul.bf16.gmra.mxu0 %v997
  %v1453 = vpop.f32.mrf.mxu0
  %v1454 = vadd.f32 %v262, %v1453
  %v1455 = vpop.f32.mrf.mxu0
  %v1456 = vadd.f32 %v262, %v1455
  %1457 = vmatmul.bf16.gmra.mxu0 %v1000
  %v1458 = vpop.f32.mrf.mxu0
  %v1459 = vadd.f32 %v262, %v1458
  %v1460 = vpop.f32.mrf.mxu0
  %v1461 = vadd.f32 %v262, %v1460
  %1462 = vmatmul.bf16.gmra.mxu0 %v1003
  %v1463 = vpop.f32.mrf.mxu0
  %v1464 = vadd.f32 %v262, %v1463
  %v1465 = vpop.f32.mrf.mxu0
  %v1466 = vadd.f32 %v262, %v1465
  %1467 = vmatmul.bf16.gmra.mxu0 %v1006
  %v1468 = vpop.f32.mrf.mxu0
  %v1469 = vadd.f32 %v262, %v1468
  %v1470 = vpop.f32.mrf.mxu0
  %v1471 = vadd.f32 %v262, %v1470
  %1472 = vmatmul.bf16.gmra.mxu0 %v1009
  %v1473 = vpop.f32.mrf.mxu0
  %v1474 = vadd.f32 %v262, %v1473
  %v1475 = vpop.f32.mrf.mxu0
  %v1476 = vadd.f32 %v262, %v1475
  %1477 = vmatmul.bf16.gmra.mxu0 %v1012
  %v1478 = vpop.f32.mrf.mxu0
  %v1479 = vadd.f32 %v262, %v1478
  %v1480 = vpop.f32.mrf.mxu0
  %v1481 = vadd.f32 %v262, %v1480
  %1482 = vmatmul.bf16.gmra.mxu0 %v1015
  %v1483 = vpop.f32.mrf.mxu0
  %v1484 = vadd.f32 %v262, %v1483
  %v1485 = vpop.f32.mrf.mxu0
  %v1486 = vadd.f32 %v262, %v1485
  %1487 = vmatmul.bf16.gmra.mxu0 %v1018
  %v1488 = vpop.f32.mrf.mxu0
  %v1489 = vadd.f32 %v262, %v1488
  %v1490 = vpop.f32.mrf.mxu0
  %v1491 = vadd.f32 %v262, %v1490
  %1492 = vmatmul.bf16.gmra.mxu0 %v1021
  %v1493 = vpop.f32.mrf.mxu0
  %v1494 = vadd.f32 %v262, %v1493
  %v1495 = vpop.f32.mrf.mxu0
  %v1496 = vadd.f32 %v262, %v1495
  %1497 = vmatmul.bf16.gmra.mxu0 %v1024
  %v1498 = vpop.f32.mrf.mxu0
  %v1499 = vadd.f32 %v262, %v1498
  %v1500 = vpop.f32.mrf.mxu0
  %v1501 = vadd.f32 %v262, %v1500
  %1502 = vmatmul.bf16.gmra.mxu0 %v1027
  %v1503 = vpop.f32.mrf.mxu0
  %v1504 = vadd.f32 %v262, %v1503
  %v1505 = vpop.f32.mrf.mxu0
  %v1506 = vadd.f32 %v262, %v1505
  %1507 = vmatmul.bf16.gmra.mxu0 %v1030
  %v1508 = vpop.f32.mrf.mxu0
  %v1509 = vadd.f32 %v262, %v1508
  %v1510 = vpop.f32.mrf.mxu0
  %v1511 = vadd.f32 %v262, %v1510
  %1512 = vmatmul.bf16.gmra.mxu0 %v1033
  %v1513 = vpop.f32.mrf.mxu0
  %v1514 = vadd.f32 %v262, %v1513
  %v1515 = vpop.f32.mrf.mxu0
  %v1516 = vadd.f32 %v262, %v1515
  %1517 = vmatmul.bf16.gmra.mxu0 %v1036
  %v1518 = vpop.f32.mrf.mxu0
  %v1519 = vadd.f32 %v262, %v1518
  %v1520 = vpop.f32.mrf.mxu0
  %v1521 = vadd.f32 %v262, %v1520
  %1522 = vmatmul.bf16.gmra.mxu0 %v1039
  %v1523 = vpop.f32.mrf.mxu0
  %v1524 = vadd.f32 %v262, %v1523
  %v1525 = vpop.f32.mrf.mxu0
  %v1526 = vadd.f32 %v262, %v1525
  %1527 = vmatmul.bf16.gmra.mxu0 %v1042
  %v1528 = vpop.f32.mrf.mxu0
  %v1529 = vadd.f32 %v262, %v1528
  %v1530 = vpop.f32.mrf.mxu0
  %v1531 = vadd.f32 %v262, %v1530
  %1532 = vmatmul.bf16.gmra.mxu0 %v1045
  %v1533 = vpop.f32.mrf.mxu0
  %v1534 = vadd.f32 %v262, %v1533
  %v1535 = vpop.f32.mrf.mxu0
  %v1536 = vadd.f32 %v262, %v1535
  %1537 = vmatmul.bf16.gmra.mxu0 %v1048
  %v1538 = vpop.f32.mrf.mxu0
  %v1539 = vadd.f32 %v262, %v1538
  %v1540 = vpop.f32.mrf.mxu0
  %v1541 = vadd.f32 %v262, %v1540
  %1542 = vmatmul.bf16.gmra.mxu0 %v1051
  %v1543 = vpop.f32.mrf.mxu0
  %v1544 = vadd.f32 %v262, %v1543
  %v1545 = vpop.f32.mrf.mxu0
  %v1546 = vadd.f32 %v262, %v1545
  %1547 = vmatmul.bf16.gmra.mxu0 %v1054
  %v1548 = vpop.f32.mrf.mxu0
  %v1549 = vadd.f32 %v262, %v1548
  %v1550 = vpop.f32.mrf.mxu0
  %v1551 = vadd.f32 %v262, %v1550
  %1552 = vmatmul.bf16.gmra.mxu0 %v1057
  %v1553 = vpop.f32.mrf.mxu0
  %v1554 = vadd.f32 %v262, %v1553
  %v1555 = vpop.f32.mrf.mxu0
  %v1556 = vadd.f32 %v262, %v1555
  %1557 = vmatmul.bf16.gmra.mxu0 %v1060
  %v1558 = vpop.f32.mrf.mxu0
  %v1559 = vadd.f32 %v262, %v1558
  %v1560 = vpop.f32.mrf.mxu0
  %v1561 = vadd.f32 %v262, %v1560
  %1562 = vmatmul.bf16.gmra.mxu0 %v1063
  %v1563 = vpop.f32.mrf.mxu0
  %v1564 = vadd.f32 %v262, %v1563
  %v1565 = vpop.f32.mrf.mxu0
  %v1566 = vadd.f32 %v262, %v1565
  %1567 = vmatmul.bf16.gmra.mxu0 %v1066
  %v1568 = vpop.f32.mrf.mxu0
  %v1569 = vadd.f32 %v262, %v1568
  %v1570 = vpop.f32.mrf.mxu0
  %v1571 = vadd.f32 %v262, %v1570
  %1572 = vmatmul.bf16.gmra.mxu0 %v1069
  %v1573 = vpop.f32.mrf.mxu0
  %v1574 = vadd.f32 %v262, %v1573
  %v1575 = vpop.f32.mrf.mxu0
  %v1576 = vadd.f32 %v262, %v1575
  %1577 = vmatmul.bf16.gmra.mxu0 %v1072
  %v1578 = vpop.f32.mrf.mxu0
  %v1579 = vadd.f32 %v262, %v1578
  %v1580 = vpop.f32.mrf.mxu0
  %v1581 = vadd.f32 %v262, %v1580
  %1582 = vmatmul.bf16.gmra.mxu0 %v1075
  %v1583 = vpop.f32.mrf.mxu0
  %v1584 = vadd.f32 %v262, %v1583
  %v1585 = vpop.f32.mrf.mxu0
  %v1586 = vadd.f32 %v262, %v1585
  %1587 = vmatmul.bf16.gmra.mxu0 %v1078
  %v1588 = vpop.f32.mrf.mxu0
  %v1589 = vadd.f32 %v262, %v1588
  %v1590 = vpop.f32.mrf.mxu0
  %v1591 = vadd.f32 %v262, %v1590
  %1592 = vmatmul.bf16.gmra.mxu0 %v1081
  %v1593 = vpop.f32.mrf.mxu0
  %v1594 = vadd.f32 %v262, %v1593
  %v1595 = vpop.f32.mrf.mxu0
  %v1596 = vadd.f32 %v262, %v1595
  %1597 = vmatmul.bf16.gmra.mxu0 %v1084
  %v1598 = vpop.f32.mrf.mxu0
  %v1599 = vadd.f32 %v262, %v1598
  %v1600 = vpop.f32.mrf.mxu0
  %v1601 = vadd.f32 %v262, %v1600
  %1602 = vmatmul.bf16.gmra.mxu0 %v1087
  %v1603 = vpop.f32.mrf.mxu0
  %v1604 = vadd.f32 %v262, %v1603
  %v1605 = vpop.f32.mrf.mxu0
  %v1606 = vadd.f32 %v262, %v1605
  %1607 = vmatmul.bf16.gmra.mxu0 %v1090
  %v1608 = vpop.f32.mrf.mxu0
  %v1609 = vadd.f32 %v262, %v1608
  %v1610 = vpop.f32.mrf.mxu0
  %v1611 = vadd.f32 %v262, %v1610
  %1612 = vmatmul.bf16.gmra.mxu0 %v1093
  %v1613 = vpop.f32.mrf.mxu0
  %v1614 = vadd.f32 %v262, %v1613
  %v1615 = vpop.f32.mrf.mxu0
  %v1616 = vadd.f32 %v262, %v1615
  %1617 = vmatmul.bf16.gmra.mxu0 %v1096
  %v1618 = vpop.f32.mrf.mxu0
  %v1619 = vadd.f32 %v262, %v1618
  %v1620 = vpop.f32.mrf.mxu0
  %v1621 = vadd.f32 %v262, %v1620
  %1622 = vmatmul.bf16.gmra.mxu0 %v1099
  %v1623 = vpop.f32.mrf.mxu0
  %v1624 = vadd.f32 %v262, %v1623
  %v1625 = vpop.f32.mrf.mxu0
  %v1626 = vadd.f32 %v262, %v1625
  %1627 = vmatmul.bf16.gmra.mxu0 %v1102
  %v1628 = vpop.f32.mrf.mxu0
  %v1629 = vadd.f32 %v262, %v1628
  %v1630 = vpop.f32.mrf.mxu0
  %v1631 = vadd.f32 %v262, %v1630
  %1632 = vmatmul.bf16.gmra.mxu0 %v1105
  %v1633 = vpop.f32.mrf.mxu0
  %v1634 = vadd.f32 %v262, %v1633
  %v1635 = vpop.f32.mrf.mxu0
  %v1636 = vadd.f32 %v262, %v1635
  %1637 = vmatmul.bf16.gmra.mxu0 %v1108
  %v1638 = vpop.f32.mrf.mxu0
  %v1639 = vadd.f32 %v262, %v1638
  %v1640 = vpop.f32.mrf.mxu0
  %v1641 = vadd.f32 %v262, %v1640
  %1642 = vmatmul.bf16.gmra.mxu0 %v1111
  %v1643 = vpop.f32.mrf.mxu0
  %v1644 = vadd.f32 %v262, %v1643
  %v1645 = vpop.f32.mrf.mxu0
  %v1646 = vadd.f32 %v262, %v1645
  %1647 = vmatmul.bf16.gmra.mxu0 %v1114
  %v1648 = vpop.f32.mrf.mxu0
  %v1649 = vadd.f32 %v262, %v1648
  %v1650 = vpop.f32.mrf.mxu0
  %v1651 = vadd.f32 %v262, %v1650
  %1652 = vmatmul.bf16.gmra.mxu0 %v1117
  %v1653 = vpop.f32.mrf.mxu0
  %v1654 = vadd.f32 %v262, %v1653
  %v1655 = vpop.f32.mrf.mxu0
  %v1656 = vadd.f32 %v262, %v1655
  %1657 = vmatmul.bf16.gmra.mxu0 %v1120
  %v1658 = vpop.f32.mrf.mxu0
  %v1659 = vadd.f32 %v262, %v1658
  %v1660 = vpop.f32.mrf.mxu0
  %v1661 = vadd.f32 %v262, %v1660
  %1662 = vmatmul.bf16.gmra.mxu0 %v1123
  %v1663 = vpop.f32.mrf.mxu0
  %v1664 = vadd.f32 %v262, %v1663
  %v1665 = vpop.f32.mrf.mxu0
  %v1666 = vadd.f32 %v262, %v1665
  %1667 = vmatmul.bf16.gmra.mxu0 %v1126
  %v1668 = vpop.f32.mrf.mxu0
  %v1669 = vadd.f32 %v262, %v1668
  %v1670 = vpop.f32.mrf.mxu0
  %v1671 = vadd.f32 %v262, %v1670
  %1672 = vmatmul.bf16.gmra.mxu0 %v1129
  %v1673 = vpop.f32.mrf.mxu0
  %v1674 = vadd.f32 %v262, %v1673
  %v1675 = vpop.f32.mrf.mxu0
  %v1676 = vadd.f32 %v262, %v1675
  %1677 = vmatmul.bf16.gmra.mxu0 %v1132
  %v1678 = vpop.f32.mrf.mxu0
  %v1679 = vadd.f32 %v262, %v1678
  %v1680 = vpop.f32.mrf.mxu0
  %v1681 = vadd.f32 %v262, %v1680
  %1682 = vmatmul.bf16.gmra.mxu0 %v1135
  %v1683 = vpop.f32.mrf.mxu0
  %v1684 = vadd.f32 %v262, %v1683
  %v1685 = vpop.f32.mrf.mxu0
  %v1686 = vadd.f32 %v262, %v1685
  %1687 = vmatmul.bf16.gmra.mxu0 %v1138
  %v1688 = vpop.f32.mrf.mxu0
  %v1689 = vadd.f32 %v262, %v1688
  %v1690 = vpop.f32.mrf.mxu0
  %v1691 = vadd.f32 %v262, %v1690
  %1692 = vmatmul.bf16.gmra.mxu0 %v1141
  %v1693 = vpop.f32.mrf.mxu0
  %v1694 = vadd.f32 %v262, %v1693
  %v1695 = vpop.f32.mrf.mxu0
  %v1696 = vadd.f32 %v262, %v1695
  %1697 = vmatmul.bf16.gmra.mxu0 %v1144
  %v1698 = vpop.f32.mrf.mxu0
  %v1699 = vadd.f32 %v262, %v1698
  %v1700 = vpop.f32.mrf.mxu0
  %v1701 = vadd.f32 %v262, %v1700
  %1702 = vmatmul.bf16.gmra.mxu0 %v1147
  %v1703 = vpop.f32.mrf.mxu0
  %v1704 = vadd.f32 %v262, %v1703
  %v1705 = vpop.f32.mrf.mxu0
  %v1706 = vadd.f32 %v262, %v1705
  %1707 = vmatmul.bf16.gmra.mxu0 %v1150
  %v1708 = vpop.f32.mrf.mxu0
  %v1709 = vadd.f32 %v262, %v1708
  %v1710 = vpop.f32.mrf.mxu0
  %v1711 = vadd.f32 %v262, %v1710
  %1712 = vmatmul.bf16.gmra.mxu0 %v1153
  %v1713 = vpop.f32.mrf.mxu0
  %v1714 = vadd.f32 %v262, %v1713
  %v1715 = vpop.f32.mrf.mxu0
  %v1716 = vadd.f32 %v262, %v1715
  %1717 = vmatmul.bf16.gmra.mxu0 %v1156
  %v1718 = vpop.f32.mrf.mxu0
  %v1719 = vadd.f32 %v262, %v1718
  %v1720 = vpop.f32.mrf.mxu0
  %v1721 = vadd.f32 %v262, %v1720
  %1722 = vmatmul.bf16.gmra.mxu0 %v1159
  %v1723 = vpop.f32.mrf.mxu0
  %v1724 = vadd.f32 %v262, %v1723
  %v1725 = vpop.f32.mrf.mxu0
  %v1726 = vadd.f32 %v262, %v1725
  %1727 = vmatmul.bf16.gmra.mxu0 %v1162
  %v1728 = vpop.f32.mrf.mxu0
  %v1729 = vadd.f32 %v262, %v1728
  %v1730 = vpop.f32.mrf.mxu0
  %v1731 = vadd.f32 %v262, %v1730
  %1732 = vmatmul.bf16.gmra.mxu0 %v1165
  %v1733 = vpop.f32.mrf.mxu0
  %v1734 = vadd.f32 %v262, %v1733
  %v1735 = vpop.f32.mrf.mxu0
  %v1736 = vadd.f32 %v262, %v1735
  %1737 = vmatmul.bf16.gmra.mxu0 %v1168
  %v1738 = vpop.f32.mrf.mxu0
  %v1739 = vadd.f32 %v262, %v1738
  %v1740 = vpop.f32.mrf.mxu0
  %v1741 = vadd.f32 %v262, %v1740
  %1742 = vmatmul.bf16.gmra.mxu0 %v1171
  %v1743 = vpop.f32.mrf.mxu0
  %v1744 = vadd.f32 %v262, %v1743
  %v1745 = vpop.f32.mrf.mxu0
  %v1746 = vadd.f32 %v262, %v1745
  %1747 = vmatmul.bf16.gmra.mxu0 %v1174
  %v1748 = vpop.f32.mrf.mxu0
  %v1749 = vadd.f32 %v262, %v1748
  %v1750 = vpop.f32.mrf.mxu0
  %v1751 = vadd.f32 %v262, %v1750
  %1752 = vmatmul.bf16.gmra.mxu0 %v1177
  %v1753 = vpop.f32.mrf.mxu0
  %v1754 = vadd.f32 %v262, %v1753
  %v1755 = vpop.f32.mrf.mxu0
  %v1756 = vadd.f32 %v262, %v1755
  %1757 = vmatmul.bf16.gmra.mxu0 %v1180
  %v1758 = vpop.f32.mrf.mxu0
  %v1759 = vadd.f32 %v262, %v1758
  %v1760 = vpop.f32.mrf.mxu0
  %v1761 = vadd.f32 %v262, %v1760
  %1762 = vmatmul.bf16.gmra.mxu0 %v1183
  %v1763 = vpop.f32.mrf.mxu0
  %v1764 = vadd.f32 %v262, %v1763
  %v1765 = vpop.f32.mrf.mxu0
  %v1766 = vadd.f32 %v262, %v1765
  %1767 = vmatmul.bf16.gmra.mxu0 %v1186
  %v1768 = vpop.f32.mrf.mxu0
  %v1769 = vadd.f32 %v262, %v1768
  %v1770 = vpop.f32.mrf.mxu0
  %v1771 = vadd.f32 %v262, %v1770
  %1772 = vmatmul.bf16.gmra.mxu0 %v1189
  %v1773 = vpop.f32.mrf.mxu0
  %v1774 = vadd.f32 %v262, %v1773
  %v1775 = vpop.f32.mrf.mxu0
  %v1776 = vadd.f32 %v262, %v1775
  %1777 = vmatmul.bf16.gmra.mxu0 %v1192
  %v1778 = vpop.f32.mrf.mxu0
  %v1779 = vadd.f32 %v262, %v1778
  %v1780 = vpop.f32.mrf.mxu0
  %v1781 = vadd.f32 %v262, %v1780
  %1782 = vmatmul.bf16.gmra.mxu0 %v1195
  %v1783 = vpop.f32.mrf.mxu0
  %v1784 = vadd.f32 %v262, %v1783
  %v1785 = vpop.f32.mrf.mxu0
  %v1786 = vadd.f32 %v262, %v1785
  %1787 = vmatmul.bf16.gmra.mxu0 %v1198
  %v1788 = vpop.f32.mrf.mxu0
  %v1789 = vadd.f32 %v262, %v1788
  %v1790 = vpop.f32.mrf.mxu0
  %v1791 = vadd.f32 %v262, %v1790
  %1792 = vmatmul.bf16.gmra.mxu0 %v1201
  %v1793 = vpop.f32.mrf.mxu0
  %v1794 = vadd.f32 %v262, %v1793
  %v1795 = vpop.f32.mrf.mxu0
  %v1796 = vadd.f32 %v262, %v1795
  %1797 = vmatmul.bf16.gmra.mxu0 %v1204
  %v1798 = vpop.f32.mrf.mxu0
  %v1799 = vadd.f32 %v262, %v1798
  %v1800 = vpop.f32.mrf.mxu0
  %v1801 = vadd.f32 %v262, %v1800
  %1802 = vmatmul.bf16.gmra.mxu0 %v1207
  %v1803 = vpop.f32.mrf.mxu0
  %v1804 = vadd.f32 %v262, %v1803
  %v1805 = vpop.f32.mrf.mxu0
  %v1806 = vadd.f32 %v262, %v1805
  %1807 = vmatmul.bf16.gmra.mxu0 %v1210
  %v1808 = vpop.f32.mrf.mxu0
  %v1809 = vadd.f32 %v262, %v1808
  %v1810 = vpop.f32.mrf.mxu0
  %v1811 = vadd.f32 %v262, %v1810
  %1812 = vmatmul.bf16.gmra.mxu0 %v1213
  %v1813 = vpop.f32.mrf.mxu0
  %v1814 = vadd.f32 %v262, %v1813
  %v1815 = vpop.f32.mrf.mxu0
  %v1816 = vadd.f32 %v262, %v1815
  %1817 = vmatmul.bf16.gmra.mxu0 %v1216
  %v1818 = vpop.f32.mrf.mxu0
  %v1819 = vadd.f32 %v262, %v1818
  %v1820 = vpop.f32.mrf.mxu0
  %v1821 = vadd.f32 %v262, %v1820
  %1822 = vmatmul.bf16.gmra.mxu0 %v1219
  %v1823 = vpop.f32.mrf.mxu0
  %v1824 = vadd.f32 %v262, %v1823
  %v1825 = vpop.f32.mrf.mxu0
  %v1826 = vadd.f32 %v262, %v1825
  %1827 = vmatmul.bf16.gmra.mxu0 %v1222
  %v1828 = vpop.f32.mrf.mxu0
  %v1829 = vadd.f32 %v262, %v1828
  %v1830 = vpop.f32.mrf.mxu0
  %v1831 = vadd.f32 %v262, %v1830
  %1832 = vmatmul.bf16.gmra.mxu0 %v1225
  %v1833 = vpop.f32.mrf.mxu0
  %v1834 = vadd.f32 %v262, %v1833
  %v1835 = vpop.f32.mrf.mxu0
  %v1836 = vadd.f32 %v262, %v1835
  %1837 = vmatmul.bf16.gmra.mxu0 %v1228
  %v1838 = vpop.f32.mrf.mxu0
  %v1839 = vadd.f32 %v262, %v1838
  %v1840 = vpop.f32.mrf.mxu0
  %v1841 = vadd.f32 %v262, %v1840
  %1842 = vmatmul.bf16.gmra.mxu0 %v1231
  %v1843 = vpop.f32.mrf.mxu0
  %v1844 = vadd.f32 %v262, %v1843
  %v1845 = vpop.f32.mrf.mxu0
  %v1846 = vadd.f32 %v262, %v1845
  %1847 = vmatmul.bf16.gmra.mxu0 %v1234
  %v1848 = vpop.f32.mrf.mxu0
  %v1849 = vadd.f32 %v262, %v1848
  %v1850 = vpop.f32.mrf.mxu0
  %v1851 = vadd.f32 %v262, %v1850
  %1852 = vmatmul.bf16.gmra.mxu0 %v1237
  %v1853 = vpop.f32.mrf.mxu0
  %v1854 = vadd.f32 %v262, %v1853
  %v1855 = vpop.f32.mrf.mxu0
  %v1856 = vadd.f32 %v262, %v1855
  %1857 = vmatmul.bf16.gmra.mxu0 %v1240
  %v1858 = vpop.f32.mrf.mxu0
  %v1859 = vadd.f32 %v262, %v1858
  %v1860 = vpop.f32.mrf.mxu0
  %1861 = vdwg.mxu0
  %vm1862 = vcmp.gt.f32.partialorder %v1259, 0.0
  %vm1863 = vcmp.gt.f32.partialorder %v1261, 0.0
  %vm1864 = vcmp.gt.f32.partialorder %v1264, 0.0
  %vm1865 = vcmp.gt.f32.partialorder %v1266, 0.0
  %vm1866 = vcmp.gt.f32.partialorder %v1269, 0.0
  %vm1867 = vcmp.gt.f32.partialorder %v1271, 0.0
  %vm1868 = vcmp.gt.f32.partialorder %v1274, 0.0
  %vm1869 = vcmp.gt.f32.partialorder %v1276, 0.0
  %vm1870 = vcmp.gt.f32.partialorder %v1279, 0.0
  %vm1871 = vcmp.gt.f32.partialorder %v1281, 0.0
  %vm1872 = vcmp.gt.f32.partialorder %v1284, 0.0
  %vm1873 = vcmp.gt.f32.partialorder %v1286, 0.0
  %vm1874 = vcmp.gt.f32.partialorder %v1289, 0.0
  %vm1875 = vcmp.gt.f32.partialorder %v1291, 0.0
  %vm1876 = vcmp.gt.f32.partialorder %v1294, 0.0
  %vm1877 = vcmp.gt.f32.partialorder %v1296, 0.0
  %vm1878 = vcmp.gt.f32.partialorder %v1299, 0.0
  %vm1879 = vcmp.gt.f32.partialorder %v1301, 0.0
  %vm1880 = vcmp.gt.f32.partialorder %v1304, 0.0
  %vm1881 = vcmp.gt.f32.partialorder %v1306, 0.0
  %vm1882 = vcmp.gt.f32.partialorder %v1309, 0.0
  %vm1883 = vcmp.gt.f32.partialorder %v1311, 0.0
  %vm1884 = vcmp.gt.f32.partialorder %v1314, 0.0
  %vm1885 = vcmp.gt.f32.partialorder %v1316, 0.0
  %vm1886 = vcmp.gt.f32.partialorder %v1319, 0.0
  %vm1887 = vcmp.gt.f32.partialorder %v1321, 0.0
  %vm1888 = vcmp.gt.f32.partialorder %v1324, 0.0
  %vm1889 = vcmp.gt.f32.partialorder %v1326, 0.0
  %vm1890 = vcmp.gt.f32.partialorder %v1329, 0.0
  %vm1891 = vcmp.gt.f32.partialorder %v1331, 0.0
  %vm1892 = vcmp.gt.f32.partialorder %v1334, 0.0
  %vm1893 = vcmp.gt.f32.partialorder %v1336, 0.0
  %vm1894 = vcmp.gt.f32.partialorder %v1339, 0.0
  %vm1895 = vcmp.gt.f32.partialorder %v1341, 0.0
  %vm1896 = vcmp.gt.f32.partialorder %v1344, 0.0
  %vm1897 = vcmp.gt.f32.partialorder %v1346, 0.0
  %vm1898 = vcmp.gt.f32.partialorder %v1349, 0.0
  %vm1899 = vcmp.gt.f32.partialorder %v1351, 0.0
  %vm1900 = vcmp.gt.f32.partialorder %v1354, 0.0
  %vm1901 = vcmp.gt.f32.partialorder %v1356, 0.0
  %vm1902 = vcmp.gt.f32.partialorder %v1359, 0.0
  %vm1903 = vcmp.gt.f32.partialorder %v1361, 0.0
  %vm1904 = vcmp.gt.f32.partialorder %v1364, 0.0
  %vm1905 = vcmp.gt.f32.partialorder %v1366, 0.0
  %vm1906 = vcmp.gt.f32.partialorder %v1369, 0.0
  %vm1907 = vcmp.gt.f32.partialorder %v1371, 0.0
  %vm1908 = vcmp.gt.f32.partialorder %v1374, 0.0
  %vm1909 = vcmp.gt.f32.partialorder %v1376, 0.0
  %vm1910 = vcmp.gt.f32.partialorder %v1379, 0.0
  %vm1911 = vcmp.gt.f32.partialorder %v1381, 0.0
  %vm1912 = vcmp.gt.f32.partialorder %v1384, 0.0
  %vm1913 = vcmp.gt.f32.partialorder %v1386, 0.0
  %vm1914 = vcmp.gt.f32.partialorder %v1389, 0.0
  %vm1915 = vcmp.gt.f32.partialorder %v1391, 0.0
  %vm1916 = vcmp.gt.f32.partialorder %v1394, 0.0
  %vm1917 = vcmp.gt.f32.partialorder %v1396, 0.0
  %vm1918 = vcmp.gt.f32.partialorder %v1399, 0.0
  %vm1919 = vcmp.gt.f32.partialorder %v1401, 0.0
  %vm1920 = vcmp.gt.f32.partialorder %v1404, 0.0
  %vm1921 = vcmp.gt.f32.partialorder %v1406, 0.0
  %vm1922 = vcmp.gt.f32.partialorder %v1409, 0.0
  %vm1923 = vcmp.gt.f32.partialorder %v1411, 0.0
  %vm1924 = vcmp.gt.f32.partialorder %v1414, 0.0
  %vm1925 = vcmp.gt.f32.partialorder %v1416, 0.0
  %vm1926 = vcmp.gt.f32.partialorder %v1419, 0.0
  %vm1927 = vcmp.gt.f32.partialorder %v1421, 0.0
  %vm1928 = vcmp.gt.f32.partialorder %v1424, 0.0
  %vm1929 = vcmp.gt.f32.partialorder %v1426, 0.0
  %vm1930 = vcmp.gt.f32.partialorder %v1429, 0.0
  %vm1931 = vcmp.gt.f32.partialorder %v1431, 0.0
  %vm1932 = vcmp.gt.f32.partialorder %v1434, 0.0
  %vm1933 = vcmp.gt.f32.partialorder %v1436, 0.0
  %vm1934 = vcmp.gt.f32.partialorder %v1439, 0.0
  %vm1935 = vcmp.gt.f32.partialorder %v1441, 0.0
  %vm1936 = vcmp.gt.f32.partialorder %v1444, 0.0
  %vm1937 = vcmp.gt.f32.partialorder %v1446, 0.0
  %vm1938 = vcmp.gt.f32.partialorder %v1449, 0.0
  %vm1939 = vcmp.gt.f32.partialorder %v1451, 0.0
  %vm1940 = vcmp.gt.f32.partialorder %v1454, 0.0
  %vm1941 = vcmp.gt.f32.partialorder %v1456, 0.0
  %vm1942 = vcmp.gt.f32.partialorder %v1459, 0.0
  %vm1943 = vcmp.gt.f32.partialorder %v1461, 0.0
  %vm1944 = vcmp.gt.f32.partialorder %v1464, 0.0
  %vm1945 = vcmp.gt.f32.partialorder %v1466, 0.0
  %vm1946 = vcmp.gt.f32.partialorder %v1469, 0.0
  %vm1947 = vcmp.gt.f32.partialorder %v1471, 0.0
  %vm1948 = vcmp.gt.f32.partialorder %v1474, 0.0
  %vm1949 = vcmp.gt.f32.partialorder %v1476, 0.0
  %vm1950 = vcmp.gt.f32.partialorder %v1479, 0.0
  %vm1951 = vcmp.gt.f32.partialorder %v1481, 0.0
  %vm1952 = vcmp.gt.f32.partialorder %v1484, 0.0
  %vm1953 = vcmp.gt.f32.partialorder %v1486, 0.0
  %vm1954 = vcmp.gt.f32.partialorder %v1489, 0.0
  %vm1955 = vcmp.gt.f32.partialorder %v1491, 0.0
  %vm1956 = vcmp.gt.f32.partialorder %v1494, 0.0
  %vm1957 = vcmp.gt.f32.partialorder %v1496, 0.0
  %vm1958 = vcmp.gt.f32.partialorder %v1499, 0.0
  %vm1959 = vcmp.gt.f32.partialorder %v1501, 0.0
  %vm1960 = vcmp.gt.f32.partialorder %v1504, 0.0
  %vm1961 = vcmp.gt.f32.partialorder %v1506, 0.0
  %vm1962 = vcmp.gt.f32.partialorder %v1509, 0.0
  %vm1963 = vcmp.gt.f32.partialorder %v1511, 0.0
  %vm1964 = vcmp.gt.f32.partialorder %v1514, 0.0
  %vm1965 = vcmp.gt.f32.partialorder %v1516, 0.0
  %vm1966 = vcmp.gt.f32.partialorder %v1519, 0.0
  %vm1967 = vcmp.gt.f32.partialorder %v1521, 0.0
  %vm1968 = vcmp.gt.f32.partialorder %v1524, 0.0
  %vm1969 = vcmp.gt.f32.partialorder %v1526, 0.0
  %vm1970 = vcmp.gt.f32.partialorder %v1529, 0.0
  %vm1971 = vcmp.gt.f32.partialorder %v1531, 0.0
  %vm1972 = vcmp.gt.f32.partialorder %v1534, 0.0
  %vm1973 = vcmp.gt.f32.partialorder %v1536, 0.0
  %vm1974 = vcmp.gt.f32.partialorder %v1539, 0.0
  %vm1975 = vcmp.gt.f32.partialorder %v1541, 0.0
  %vm1976 = vcmp.gt.f32.partialorder %v1544, 0.0
  %vm1977 = vcmp.gt.f32.partialorder %v1546, 0.0
  %vm1978 = vcmp.gt.f32.partialorder %v1549, 0.0
  %vm1979 = vcmp.gt.f32.partialorder %v1551, 0.0
  %vm1980 = vcmp.gt.f32.partialorder %v1554, 0.0
  %vm1981 = vcmp.gt.f32.partialorder %v1556, 0.0
  %vm1982 = vcmp.gt.f32.partialorder %v1559, 0.0
  %vm1983 = vcmp.gt.f32.partialorder %v1561, 0.0
  %vm1984 = vcmp.gt.f32.partialorder %v1564, 0.0
  %vm1985 = vcmp.gt.f32.partialorder %v1566, 0.0
  %vm1986 = vcmp.gt.f32.partialorder %v1569, 0.0
  %vm1987 = vcmp.gt.f32.partialorder %v1571, 0.0
  %vm1988 = vcmp.gt.f32.partialorder %v1574, 0.0
  %vm1989 = vcmp.gt.f32.partialorder %v1576, 0.0
  %vm1990 = vcmp.gt.f32.partialorder %v1579, 0.0
  %vm1991 = vcmp.gt.f32.partialorder %v1581, 0.0
  %vm1992 = vcmp.gt.f32.partialorder %v1584, 0.0
  %vm1993 = vcmp.gt.f32.partialorder %v1586, 0.0
  %vm1994 = vcmp.gt.f32.partialorder %v1589, 0.0
  %vm1995 = vcmp.gt.f32.partialorder %v1591, 0.0
  %vm1996 = vcmp.gt.f32.partialorder %v1594, 0.0
  %vm1997 = vcmp.gt.f32.partialorder %v1596, 0.0
  %vm1998 = vcmp.gt.f32.partialorder %v1599, 0.0
  %vm1999 = vcmp.gt.f32.partialorder %v1601, 0.0
  %vm2000 = vcmp.gt.f32.partialorder %v1604, 0.0
  %vm2001 = vcmp.gt.f32.partialorder %v1606, 0.0
  %vm2002 = vcmp.gt.f32.partialorder %v1609, 0.0
  %vm2003 = vcmp.gt.f32.partialorder %v1611, 0.0
  %vm2004 = vcmp.gt.f32.partialorder %v1614, 0.0
  %vm2005 = vcmp.gt.f32.partialorder %v1616, 0.0
  %vm2006 = vcmp.gt.f32.partialorder %v1619, 0.0
  %vm2007 = vcmp.gt.f32.partialorder %v1621, 0.0
  %vm2008 = vcmp.gt.f32.partialorder %v1624, 0.0
  %vm2009 = vcmp.gt.f32.partialorder %v1626, 0.0
  %vm2010 = vcmp.gt.f32.partialorder %v1629, 0.0
  %vm2011 = vcmp.gt.f32.partialorder %v1631, 0.0
  %vm2012 = vcmp.gt.f32.partialorder %v1634, 0.0
  %vm2013 = vcmp.gt.f32.partialorder %v1636, 0.0
  %vm2014 = vcmp.gt.f32.partialorder %v1639, 0.0
  %vm2015 = vcmp.gt.f32.partialorder %v1641, 0.0
  %vm2016 = vcmp.gt.f32.partialorder %v1644, 0.0
  %vm2017 = vcmp.gt.f32.partialorder %v1646, 0.0
  %vm2018 = vcmp.gt.f32.partialorder %v1649, 0.0
  %vm2019 = vcmp.gt.f32.partialorder %v1651, 0.0
  %vm2020 = vcmp.gt.f32.partialorder %v1654, 0.0
  %vm2021 = vcmp.gt.f32.partialorder %v1656, 0.0
  %vm2022 = vcmp.gt.f32.partialorder %v1659, 0.0
  %vm2023 = vcmp.gt.f32.partialorder %v1661, 0.0
  %vm2024 = vcmp.gt.f32.partialorder %v1664, 0.0
  %vm2025 = vcmp.gt.f32.partialorder %v1666, 0.0
  %vm2026 = vcmp.gt.f32.partialorder %v1669, 0.0
  %vm2027 = vcmp.gt.f32.partialorder %v1671, 0.0
  %vm2028 = vcmp.gt.f32.partialorder %v1674, 0.0
  %vm2029 = vcmp.gt.f32.partialorder %v1676, 0.0
  %vm2030 = vcmp.gt.f32.partialorder %v1679, 0.0
  %vm2031 = vcmp.gt.f32.partialorder %v1681, 0.0
  %vm2032 = vcmp.gt.f32.partialorder %v1684, 0.0
  %vm2033 = vcmp.gt.f32.partialorder %v1686, 0.0
  %vm2034 = vcmp.gt.f32.partialorder %v1689, 0.0
  %vm2035 = vcmp.gt.f32.partialorder %v1691, 0.0
  %vm2036 = vcmp.gt.f32.partialorder %v1694, 0.0
  %vm2037 = vcmp.gt.f32.partialorder %v1696, 0.0
  %vm2038 = vcmp.gt.f32.partialorder %v1699, 0.0
  %vm2039 = vcmp.gt.f32.partialorder %v1701, 0.0
  %vm2040 = vcmp.gt.f32.partialorder %v1704, 0.0
  %vm2041 = vcmp.gt.f32.partialorder %v1706, 0.0
  %vm2042 = vcmp.gt.f32.partialorder %v1709, 0.0
  %vm2043 = vcmp.gt.f32.partialorder %v1711, 0.0
  %vm2044 = vcmp.gt.f32.partialorder %v1714, 0.0
  %vm2045 = vcmp.gt.f32.partialorder %v1716, 0.0
  %vm2046 = vcmp.gt.f32.partialorder %v1719, 0.0
  %vm2047 = vcmp.gt.f32.partialorder %v1721, 0.0
  %vm2048 = vcmp.gt.f32.partialorder %v1724, 0.0
  %vm2049 = vcmp.gt.f32.partialorder %v1726, 0.0
  %vm2050 = vcmp.gt.f32.partialorder %v1729, 0.0
  %vm2051 = vcmp.gt.f32.partialorder %v1731, 0.0
  %vm2052 = vcmp.gt.f32.partialorder %v1734, 0.0
  %vm2053 = vcmp.gt.f32.partialorder %v1736, 0.0
  %vm2054 = vcmp.gt.f32.partialorder %v1739, 0.0
  %vm2055 = vcmp.gt.f32.partialorder %v1741, 0.0
  %vm2056 = vcmp.gt.f32.partialorder %v1744, 0.0
  %vm2057 = vcmp.gt.f32.partialorder %v1746, 0.0
  %vm2058 = vcmp.gt.f32.partialorder %v1749, 0.0
  %vm2059 = vcmp.gt.f32.partialorder %v1751, 0.0
  %vm2060 = vcmp.gt.f32.partialorder %v1754, 0.0
  %vm2061 = vcmp.gt.f32.partialorder %v1756, 0.0
  %vm2062 = vcmp.gt.f32.partialorder %v1759, 0.0
  %vm2063 = vcmp.gt.f32.partialorder %v1761, 0.0
  %vm2064 = vcmp.gt.f32.partialorder %v1764, 0.0
  %vm2065 = vcmp.gt.f32.partialorder %v1766, 0.0
  %vm2066 = vcmp.gt.f32.partialorder %v1769, 0.0
  %vm2067 = vcmp.gt.f32.partialorder %v1771, 0.0
  %vm2068 = vcmp.gt.f32.partialorder %v1774, 0.0
  %vm2069 = vcmp.gt.f32.partialorder %v1776, 0.0
  %vm2070 = vcmp.gt.f32.partialorder %v1779, 0.0
  %vm2071 = vcmp.gt.f32.partialorder %v1781, 0.0
  %vm2072 = vcmp.gt.f32.partialorder %v1784, 0.0
  %vm2073 = vcmp.gt.f32.partialorder %v1786, 0.0
  %vm2074 = vcmp.gt.f32.partialorder %v1789, 0.0
  %vm2075 = vcmp.gt.f32.partialorder %v1791, 0.0
  %vm2076 = vcmp.gt.f32.partialorder %v1794, 0.0
  %vm2077 = vcmp.gt.f32.partialorder %v1796, 0.0
  %vm2078 = vcmp.gt.f32.partialorder %v1799, 0.0
  %vm2079 = vcmp.gt.f32.partialorder %v1801, 0.0
  %vm2080 = vcmp.gt.f32.partialorder %v1804, 0.0
  %vm2081 = vcmp.gt.f32.partialorder %v1806, 0.0
  %vm2082 = vcmp.gt.f32.partialorder %v1809, 0.0
  %vm2083 = vcmp.gt.f32.partialorder %v1811, 0.0
  %vm2084 = vcmp.gt.f32.partialorder %v1814, 0.0
  %vm2085 = vcmp.gt.f32.partialorder %v1816, 0.0
  %vm2086 = vcmp.gt.f32.partialorder %v1819, 0.0
  %vm2087 = vcmp.gt.f32.partialorder %v1821, 0.0
  %vm2088 = vcmp.gt.f32.partialorder %v1824, 0.0
  %vm2089 = vcmp.gt.f32.partialorder %v1826, 0.0
  %vm2090 = vcmp.gt.f32.partialorder %v1829, 0.0
  %vm2091 = vcmp.gt.f32.partialorder %v1831, 0.0
  %vm2092 = vcmp.gt.f32.partialorder %v1834, 0.0
  %vm2093 = vcmp.gt.f32.partialorder %v1836, 0.0
  %vm2094 = vcmp.gt.f32.partialorder %v1839, 0.0
  %vm2095 = vcmp.gt.f32.partialorder %v1841, 0.0
  %vm2096 = vcmp.gt.f32.partialorder %v1844, 0.0
  %vm2097 = vcmp.gt.f32.partialorder %v1846, 0.0
  %vm2098 = vcmp.gt.f32.partialorder %v1849, 0.0
  %vm2099 = vcmp.gt.f32.partialorder %v1851, 0.0
  %vm2100 = vcmp.gt.f32.partialorder %v1854, 0.0
  %vm2101 = vcmp.gt.f32.partialorder %v1856, 0.0
  %vm2102 = vcmp.gt.f32.partialorder %v1859, 0.0
  %v2103 = vmul.f32 %v1259, 0.01
  %v2104 = vmul.f32 %v1261, 0.01
  %v2105 = vmul.f32 %v1264, 0.01
  %v2106 = vmul.f32 %v1266, 0.01
  %v2107 = vmul.f32 %v1269, 0.01
  %v2108 = vmul.f32 %v1271, 0.01
  %v2109 = vmul.f32 %v1274, 0.01
  %v2110 = vmul.f32 %v1276, 0.01
  %v2111 = vmul.f32 %v1279, 0.01
  %v2112 = vmul.f32 %v1281, 0.01
  %v2113 = vmul.f32 %v1284, 0.01
  %v2114 = vmul.f32 %v1286, 0.01
  %v2115 = vmul.f32 %v1289, 0.01
  %v2116 = vmul.f32 %v1291, 0.01
  %v2117 = vmul.f32 %v1294, 0.01
  %v2118 = vmul.f32 %v1296, 0.01
  %v2119 = vmul.f32 %v1299, 0.01
  %v2120 = vmul.f32 %v1301, 0.01
  %v2121 = vmul.f32 %v1304, 0.01
  %v2122 = vmul.f32 %v1306, 0.01
  %v2123 = vmul.f32 %v1309, 0.01
  %v2124 = vmul.f32 %v1311, 0.01
  %v2125 = vmul.f32 %v1314, 0.01
  %v2126 = vmul.f32 %v1316, 0.01
  %v2127 = vmul.f32 %v1319, 0.01
  %v2128 = vmul.f32 %v1321, 0.01
  %v2129 = vmul.f32 %v1324, 0.01
  %v2130 = vmul.f32 %v1326, 0.01
  %v2131 = vmul.f32 %v1329, 0.01
  %v2132 = vmul.f32 %v1331, 0.01
  %v2133 = vmul.f32 %v1334, 0.01
  %v2134 = vmul.f32 %v1336, 0.01
  %v2135 = vmul.f32 %v1339, 0.01
  %v2136 = vmul.f32 %v1341, 0.01
  %v2137 = vmul.f32 %v1344, 0.01
  %v2138 = vmul.f32 %v1346, 0.01
  %v2139 = vmul.f32 %v1349, 0.01
  %v2140 = vmul.f32 %v1351, 0.01
  %v2141 = vmul.f32 %v1354, 0.01
  %v2142 = vmul.f32 %v1356, 0.01
  %v2143 = vmul.f32 %v1359, 0.01
  %v2144 = vmul.f32 %v1361, 0.01
  %v2145 = vmul.f32 %v1364, 0.01
  %v2146 = vmul.f32 %v1366, 0.01
  %v2147 = vmul.f32 %v1369, 0.01
  %v2148 = vmul.f32 %v1371, 0.01
  %v2149 = vmul.f32 %v1374, 0.01
  %v2150 = vmul.f32 %v1376, 0.01
  %v2151 = vmul.f32 %v1379, 0.01
  %v2152 = vmul.f32 %v1381, 0.01
  %v2153 = vmul.f32 %v1384, 0.01
  %v2154 = vmul.f32 %v1386, 0.01
  %v2155 = vmul.f32 %v1389, 0.01
  %v2156 = vmul.f32 %v1391, 0.01
  %v2157 = vmul.f32 %v1394, 0.01
  %v2158 = vmul.f32 %v1396, 0.01
  %v2159 = vmul.f32 %v1399, 0.01
  %v2160 = vmul.f32 %v1401, 0.01
  %v2161 = vmul.f32 %v1404, 0.01
  %v2162 = vmul.f32 %v1406, 0.01
  %v2163 = vmul.f32 %v1409, 0.01
  %v2164 = vmul.f32 %v1411, 0.01
  %v2165 = vmul.f32 %v1414, 0.01
  %v2166 = vmul.f32 %v1416, 0.01
  %v2167 = vmul.f32 %v1419, 0.01
  %v2168 = vmul.f32 %v1421, 0.01
  %v2169 = vmul.f32 %v1424, 0.01
  %v2170 = vmul.f32 %v1426, 0.01
  %v2171 = vmul.f32 %v1429, 0.01
  %v2172 = vmul.f32 %v1431, 0.01
  %v2173 = vmul.f32 %v1434, 0.01
  %v2174 = vmul.f32 %v1436, 0.01
  %v2175 = vmul.f32 %v1439, 0.01
  %v2176 = vmul.f32 %v1441, 0.01
  %v2177 = vmul.f32 %v1444, 0.01
  %v2178 = vmul.f32 %v1446, 0.01
  %v2179 = vmul.f32 %v1449, 0.01
  %v2180 = vmul.f32 %v1451, 0.01
  %v2181 = vmul.f32 %v1454, 0.01
  %v2182 = vmul.f32 %v1456, 0.01
  %v2183 = vmul.f32 %v1459, 0.01
  %v2184 = vmul.f32 %v1461, 0.01
  %v2185 = vmul.f32 %v1464, 0.01
  %v2186 = vmul.f32 %v1466, 0.01
  %v2187 = vmul.f32 %v1469, 0.01
  %v2188 = vmul.f32 %v1471, 0.01
  %v2189 = vmul.f32 %v1474, 0.01
  %v2190 = vmul.f32 %v1476, 0.01
  %v2191 = vmul.f32 %v1479, 0.01
  %v2192 = vmul.f32 %v1481, 0.01
  %v2193 = vmul.f32 %v1484, 0.01
  %v2194 = vmul.f32 %v1486, 0.01
  %v2195 = vmul.f32 %v1489, 0.01
  %v2196 = vmul.f32 %v1491, 0.01
  %v2197 = vmul.f32 %v1494, 0.01
  %v2198 = vmul.f32 %v1496, 0.01
  %v2199 = vmul.f32 %v1499, 0.01
  %v2200 = vmul.f32 %v1501, 0.01
  %v2201 = vmul.f32 %v1504, 0.01
  %v2202 = vmul.f32 %v1506, 0.01
  %v2203 = vmul.f32 %v1509, 0.01
  %v2204 = vmul.f32 %v1511, 0.01
  %v2205 = vmul.f32 %v1514, 0.01
  %v2206 = vmul.f32 %v1516, 0.01
  %v2207 = vmul.f32 %v1519, 0.01
  %v2208 = vmul.f32 %v1521, 0.01
  %v2209 = vmul.f32 %v1524, 0.01
  %v2210 = vmul.f32 %v1526, 0.01
  %v2211 = vmul.f32 %v1529, 0.01
  %v2212 = vmul.f32 %v1531, 0.01
  %v2213 = vmul.f32 %v1534, 0.01
  %v2214 = vmul.f32 %v1536, 0.01
  %v2215 = vmul.f32 %v1539, 0.01
  %v2216 = vmul.f32 %v1541, 0.01
  %v2217 = vmul.f32 %v1544, 0.01
  %v2218 = vmul.f32 %v1546, 0.01
  %v2219 = vmul.f32 %v1549, 0.01
  %v2220 = vmul.f32 %v1551, 0.01
  %v2221 = vmul.f32 %v1554, 0.01
  %v2222 = vmul.f32 %v1556, 0.01
  %v2223 = vmul.f32 %v1559, 0.01
  %v2224 = vmul.f32 %v1561, 0.01
  %v2225 = vmul.f32 %v1564, 0.01
  %v2226 = vmul.f32 %v1566, 0.01
  %v2227 = vmul.f32 %v1569, 0.01
  %v2228 = vmul.f32 %v1571, 0.01
  %v2229 = vmul.f32 %v1574, 0.01
  %v2230 = vmul.f32 %v1576, 0.01
  %v2231 = vmul.f32 %v1579, 0.01
  %v2232 = vmul.f32 %v1581, 0.01
  %v2233 = vmul.f32 %v1584, 0.01
  %v2234 = vmul.f32 %v1586, 0.01
  %v2235 = vmul.f32 %v1589, 0.01
  %v2236 = vmul.f32 %v1591, 0.01
  %v2237 = vmul.f32 %v1594, 0.01
  %v2238 = vmul.f32 %v1596, 0.01
  %v2239 = vmul.f32 %v1599, 0.01
  %v2240 = vmul.f32 %v1601, 0.01
  %v2241 = vmul.f32 %v1604, 0.01
  %v2242 = vmul.f32 %v1606, 0.01
  %v2243 = vmul.f32 %v1609, 0.01
  %v2244 = vmul.f32 %v1611, 0.01
  %v2245 = vmul.f32 %v1614, 0.01
  %v2246 = vmul.f32 %v1616, 0.01
  %v2247 = vmul.f32 %v1619, 0.01
  %v2248 = vmul.f32 %v1621, 0.01
  %v2249 = vmul.f32 %v1624, 0.01
  %v2250 = vmul.f32 %v1626, 0.01
  %v2251 = vmul.f32 %v1629, 0.01
  %v2252 = vmul.f32 %v1631, 0.01
  %v2253 = vmul.f32 %v1634, 0.01
  %v2254 = vmul.f32 %v1636, 0.01
  %v2255 = vmul.f32 %v1639, 0.01
  %v2256 = vmul.f32 %v1641, 0.01
  %v2257 = vmul.f32 %v1644, 0.01
  %v2258 = vmul.f32 %v1646, 0.01
  %v2259 = vmul.f32 %v1649, 0.01
  %v2260 = vmul.f32 %v1651, 0.01
  %v2261 = vmul.f32 %v1654, 0.01
  %v2262 = vmul.f32 %v1656, 0.01
  %v2263 = vmul.f32 %v1659, 0.01
  %v2264 = vmul.f32 %v1661, 0.01
  %v2265 = vmul.f32 %v1664, 0.01
  %v2266 = vmul.f32 %v1666, 0.01
  %v2267 = vmul.f32 %v1669, 0.01
  %v2268 = vmul.f32 %v1671, 0.01
  %v2269 = vmul.f32 %v1674, 0.01
  %v2270 = vmul.f32 %v1676, 0.01
  %v2271 = vmul.f32 %v1679, 0.01
  %v2272 = vmul.f32 %v1681, 0.01
  %v2273 = vmul.f32 %v1684, 0.01
  %v2274 = vmul.f32 %v1686, 0.01
  %v2275 = vmul.f32 %v1689, 0.01
  %v2276 = vmul.f32 %v1691, 0.01
  %v2277 = vmul.f32 %v1694, 0.01
  %v2278 = vmul.f32 %v1696, 0.01
  %v2279 = vmul.f32 %v1699, 0.01
  %v2280 = vmul.f32 %v1701, 0.01
  %v2281 = vmul.f32 %v1704, 0.01
  %v2282 = vmul.f32 %v1706, 0.01
  %v2283 = vmul.f32 %v1709, 0.01
  %v2284 = vmul.f32 %v1711, 0.01
  %v2285 = vmul.f32 %v1714, 0.01
  %v2286 = vmul.f32 %v1716, 0.01
  %v2287 = vmul.f32 %v1719, 0.01
  %v2288 = vmul.f32 %v1721, 0.01
  %v2289 = vmul.f32 %v1724, 0.01
  %v2290 = vmul.f32 %v1726, 0.01
  %v2291 = vmul.f32 %v1729, 0.01
  %v2292 = vmul.f32 %v1731, 0.01
  %v2293 = vmul.f32 %v1734, 0.01
  %v2294 = vmul.f32 %v1736, 0.01
  %v2295 = vmul.f32 %v1739, 0.01
  %v2296 = vmul.f32 %v1741, 0.01
  %v2297 = vmul.f32 %v1744, 0.01
  %v2298 = vmul.f32 %v1746, 0.01
  %v2299 = vmul.f32 %v1749, 0.01
  %v2300 = vmul.f32 %v1751, 0.01
  %v2301 = vmul.f32 %v1754, 0.01
  %v2302 = vmul.f32 %v1756, 0.01
  %v2303 = vmul.f32 %v1759, 0.01
  %v2304 = vmul.f32 %v1761, 0.01
  %v2305 = vmul.f32 %v1764, 0.01
  %v2306 = vmul.f32 %v1766, 0.01
  %v2307 = vmul.f32 %v1769, 0.01
  %v2308 = vmul.f32 %v1771, 0.01
  %v2309 = vmul.f32 %v1774, 0.01
  %v2310 = vmul.f32 %v1776, 0.01
  %v2311 = vmul.f32 %v1779, 0.01
  %v2312 = vmul.f32 %v1781, 0.01
  %v2313 = vmul.f32 %v1784, 0.01
  %v2314 = vmul.f32 %v1786, 0.01
  %v2315 = vmul.f32 %v1789, 0.01
  %v2316 = vmul.f32 %v1791, 0.01
  %v2317 = vmul.f32 %v1794, 0.01
  %v2318 = vmul.f32 %v1796, 0.01
  %v2319 = vmul.f32 %v1799, 0.01
  %v2320 = vmul.f32 %v1801, 0.01
  %v2321 = vmul.f32 %v1804, 0.01
  %v2322 = vmul.f32 %v1806, 0.01
  %v2323 = vmul.f32 %v1809, 0.01
  %v2324 = vmul.f32 %v1811, 0.01
  %v2325 = vmul.f32 %v1814, 0.01
  %v2326 = vmul.f32 %v1816, 0.01
  %v2327 = vmul.f32 %v1819, 0.01
  %v2328 = vmul.f32 %v1821, 0.01
  %v2329 = vmul.f32 %v1824, 0.01
  %v2330 = vmul.f32 %v1826, 0.01
  %v2331 = vmul.f32 %v1829, 0.01
  %v2332 = vmul.f32 %v1831, 0.01
  %v2333 = vmul.f32 %v1834, 0.01
  %v2334 = vmul.f32 %v1836, 0.01
  %v2335 = vmul.f32 %v1839, 0.01
  %v2336 = vmul.f32 %v1841, 0.01
  %v2337 = vmul.f32 %v1844, 0.01
  %v2338 = vmul.f32 %v1846, 0.01
  %v2339 = vmul.f32 %v1849, 0.01
  %v2340 = vmul.f32 %v1851, 0.01
  %v2341 = vmul.f32 %v1854, 0.01
  %v2342 = vmul.f32 %v1856, 0.01
  %v2343 = vmul.f32 %v1859, 0.01
  %v2344 = vsel %vm1862, %v1259, %v2103
  %v2345 = vsel %vm1863, %v1261, %v2104
  %v2346 = vsel %vm1864, %v1264, %v2105
  %v2347 = vsel %vm1865, %v1266, %v2106
  %v2348 = vsel %vm1866, %v1269, %v2107
  %v2349 = vsel %vm1867, %v1271, %v2108
  %v2350 = vsel %vm1868, %v1274, %v2109
  %v2351 = vsel %vm1869, %v1276, %v2110
  %v2352 = vsel %vm1870, %v1279, %v2111
  %v2353 = vsel %vm1871, %v1281, %v2112
  %v2354 = vsel %vm1872, %v1284, %v2113
  %v2355 = vsel %vm1873, %v1286, %v2114
  %v2356 = vsel %vm1874, %v1289, %v2115
  %v2357 = vsel %vm1875, %v1291, %v2116
  %v2358 = vsel %vm1876, %v1294, %v2117
  %v2359 = vsel %vm1877, %v1296, %v2118
  %v2360 = vsel %vm1878, %v1299, %v2119
  %v2361 = vsel %vm1879, %v1301, %v2120
  %v2362 = vsel %vm1880, %v1304, %v2121
  %v2363 = vsel %vm1881, %v1306, %v2122
  %v2364 = vsel %vm1882, %v1309, %v2123
  %v2365 = vsel %vm1883, %v1311, %v2124
  %v2366 = vsel %vm1884, %v1314, %v2125
  %v2367 = vsel %vm1885, %v1316, %v2126
  %v2368 = vsel %vm1886, %v1319, %v2127
  %v2369 = vsel %vm1887, %v1321, %v2128
  %v2370 = vsel %vm1888, %v1324, %v2129
  %v2371 = vsel %vm1889, %v1326, %v2130
  %v2372 = vsel %vm1890, %v1329, %v2131
  %v2373 = vsel %vm1891, %v1331, %v2132
  %v2374 = vsel %vm1892, %v1334, %v2133
  %v2375 = vsel %vm1893, %v1336, %v2134
  %v2376 = vsel %vm1894, %v1339, %v2135
  %v2377 = vsel %vm1895, %v1341, %v2136
  %v2378 = vsel %vm1896, %v1344, %v2137
  %v2379 = vsel %vm1897, %v1346, %v2138
  %v2380 = vsel %vm1898, %v1349, %v2139
  %v2381 = vsel %vm1899, %v1351, %v2140
  %v2382 = vsel %vm1900, %v1354, %v2141
  %v2383 = vsel %vm1901, %v1356, %v2142
  %v2384 = vsel %vm1902, %v1359, %v2143
  %v2385 = vsel %vm1903, %v1361, %v2144
  %v2386 = vsel %vm1904, %v1364, %v2145
  %v2387 = vsel %vm1905, %v1366, %v2146
  %v2388 = vsel %vm1906, %v1369, %v2147
  %v2389 = vsel %vm1907, %v1371, %v2148
  %v2390 = vsel %vm1908, %v1374, %v2149
  %v2391 = vsel %vm1909, %v1376, %v2150
  %v2392 = vsel %vm1910, %v1379, %v2151
  %v2393 = vsel %vm1911, %v1381, %v2152
  %v2394 = vsel %vm1912, %v1384, %v2153
  %v2395 = vsel %vm1913, %v1386, %v2154
  %v2396 = vsel %vm1914, %v1389, %v2155
  %v2397 = vsel %vm1915, %v1391, %v2156
  %v2398 = vsel %vm1916, %v1394, %v2157
  %v2399 = vsel %vm1917, %v1396, %v2158
  %v2400 = vsel %vm1918, %v1399, %v2159
  %v2401 = vsel %vm1919, %v1401, %v2160
  %v2402 = vsel %vm1920, %v1404, %v2161
  %v2403 = vsel %vm1921, %v1406, %v2162
  %v2404 = vsel %vm1922, %v1409, %v2163
  %v2405 = vsel %vm1923, %v1411, %v2164
  %v2406 = vsel %vm1924, %v1414, %v2165
  %v2407 = vsel %vm1925, %v1416, %v2166
  %v2408 = vsel %vm1926, %v1419, %v2167
  %v2409 = vsel %vm1927, %v1421, %v2168
  %v2410 = vsel %vm1928, %v1424, %v2169
  %v2411 = vsel %vm1929, %v1426, %v2170
  %v2412 = vsel %vm1930, %v1429, %v2171
  %v2413 = vsel %vm1931, %v1431, %v2172
  %v2414 = vsel %vm1932, %v1434, %v2173
  %v2415 = vsel %vm1933, %v1436, %v2174
  %v2416 = vsel %vm1934, %v1439, %v2175
  %v2417 = vsel %vm1935, %v1441, %v2176
  %v2418 = vsel %vm1936, %v1444, %v2177
  %v2419 = vsel %vm1937, %v1446, %v2178
  %v2420 = vsel %vm1938, %v1449, %v2179
  %v2421 = vsel %vm1939, %v1451, %v2180
  %v2422 = vsel %vm1940, %v1454, %v2181
  %v2423 = vsel %vm1941, %v1456, %v2182
  %v2424 = vsel %vm1942, %v1459, %v2183
  %v2425 = vsel %vm1943, %v1461, %v2184
  %v2426 = vsel %vm1944, %v1464, %v2185
  %v2427 = vsel %vm1945, %v1466, %v2186
  %v2428 = vsel %vm1946, %v1469, %v2187
  %v2429 = vsel %vm1947, %v1471, %v2188
  %v2430 = vsel %vm1948, %v1474, %v2189
  %v2431 = vsel %vm1949, %v1476, %v2190
  %v2432 = vsel %vm1950, %v1479, %v2191
  %v2433 = vsel %vm1951, %v1481, %v2192
  %v2434 = vsel %vm1952, %v1484, %v2193
  %v2435 = vsel %vm1953, %v1486, %v2194
  %v2436 = vsel %vm1954, %v1489, %v2195
  %v2437 = vsel %vm1955, %v1491, %v2196
  %v2438 = vsel %vm1956, %v1494, %v2197
  %v2439 = vsel %vm1957, %v1496, %v2198
  %v2440 = vsel %vm1958, %v1499, %v2199
  %v2441 = vsel %vm1959, %v1501, %v2200
  %v2442 = vsel %vm1960, %v1504, %v2201
  %v2443 = vsel %vm1961, %v1506, %v2202
  %v2444 = vsel %vm1962, %v1509, %v2203
  %v2445 = vsel %vm1963, %v1511, %v2204
  %v2446 = vsel %vm1964, %v1514, %v2205
  %v2447 = vsel %vm1965, %v1516, %v2206
  %v2448 = vsel %vm1966, %v1519, %v2207
  %v2449 = vsel %vm1967, %v1521, %v2208
  %v2450 = vsel %vm1968, %v1524, %v2209
  %v2451 = vsel %vm1969, %v1526, %v2210
  %v2452 = vsel %vm1970, %v1529, %v2211
  %v2453 = vsel %vm1971, %v1531, %v2212
  %v2454 = vsel %vm1972, %v1534, %v2213
  %v2455 = vsel %vm1973, %v1536, %v2214
  %v2456 = vsel %vm1974, %v1539, %v2215
  %v2457 = vsel %vm1975, %v1541, %v2216
  %v2458 = vsel %vm1976, %v1544, %v2217
  %v2459 = vsel %vm1977, %v1546, %v2218
  %v2460 = vsel %vm1978, %v1549, %v2219
  %v2461 = vsel %vm1979, %v1551, %v2220
  %v2462 = vsel %vm1980, %v1554, %v2221
  %v2463 = vsel %vm1981, %v1556, %v2222
  %v2464 = vsel %vm1982, %v1559, %v2223
  %v2465 = vsel %vm1983, %v1561, %v2224
  %v2466 = vsel %vm1984, %v1564, %v2225
  %v2467 = vsel %vm1985, %v1566, %v2226
  %v2468 = vsel %vm1986, %v1569, %v2227
  %v2469 = vsel %vm1987, %v1571, %v2228
  %v2470 = vsel %vm1988, %v1574, %v2229
  %v2471 = vsel %vm1989, %v1576, %v2230
  %v2472 = vsel %vm1990, %v1579, %v2231
  %v2473 = vsel %vm1991, %v1581, %v2232
  %v2474 = vsel %vm1992, %v1584, %v2233
  %v2475 = vsel %vm1993, %v1586, %v2234
  %v2476 = vsel %vm1994, %v1589, %v2235
  %v2477 = vsel %vm1995, %v1591, %v2236
  %v2478 = vsel %vm1996, %v1594, %v2237
  %v2479 = vsel %vm1997, %v1596, %v2238
  %v2480 = vsel %vm1998, %v1599, %v2239
  %v2481 = vsel %vm1999, %v1601, %v2240
  %v2482 = vsel %vm2000, %v1604, %v2241
  %v2483 = vsel %vm2001, %v1606, %v2242
  %v2484 = vsel %vm2002, %v1609, %v2243
  %v2485 = vsel %vm2003, %v1611, %v2244
  %v2486 = vsel %vm2004, %v1614, %v2245
  %v2487 = vsel %vm2005, %v1616, %v2246
  %v2488 = vsel %vm2006, %v1619, %v2247
  %v2489 = vsel %vm2007, %v1621, %v2248
  %v2490 = vsel %vm2008, %v1624, %v2249
  %v2491 = vsel %vm2009, %v1626, %v2250
  %v2492 = vsel %vm2010, %v1629, %v2251
  %v2493 = vsel %vm2011, %v1631, %v2252
  %v2494 = vsel %vm2012, %v1634, %v2253
  %v2495 = vsel %vm2013, %v1636, %v2254
  %v2496 = vsel %vm2014, %v1639, %v2255
  %v2497 = vsel %vm2015, %v1641, %v2256
  %v2498 = vsel %vm2016, %v1644, %v2257
  %v2499 = vsel %vm2017, %v1646, %v2258
  %v2500 = vsel %vm2018, %v1649, %v2259
  %v2501 = vsel %vm2019, %v1651, %v2260
  %v2502 = vsel %vm2020, %v1654, %v2261
  %v2503 = vsel %vm2021, %v1656, %v2262
  %v2504 = vsel %vm2022, %v1659, %v2263
  %v2505 = vsel %vm2023, %v1661, %v2264
  %v2506 = vsel %vm2024, %v1664, %v2265
  %v2507 = vsel %vm2025, %v1666, %v2266
  %v2508 = vsel %vm2026, %v1669, %v2267
  %v2509 = vsel %vm2027, %v1671, %v2268
  %v2510 = vsel %vm2028, %v1674, %v2269
  %v2511 = vsel %vm2029, %v1676, %v2270
  %v2512 = vsel %vm2030, %v1679, %v2271
  %v2513 = vsel %vm2031, %v1681, %v2272
  %v2514 = vsel %vm2032, %v1684, %v2273
  %v2515 = vsel %vm2033, %v1686, %v2274
  %v2516 = vsel %vm2034, %v1689, %v2275
  %v2517 = vsel %vm2035, %v1691, %v2276
  %v2518 = vsel %vm2036, %v1694, %v2277
  %v2519 = vsel %vm2037, %v1696, %v2278
  %v2520 = vsel %vm2038, %v1699, %v2279
  %v2521 = vsel %vm2039, %v1701, %v2280
  %v2522 = vsel %vm2040, %v1704, %v2281
  %v2523 = vsel %vm2041, %v1706, %v2282
  %v2524 = vsel %vm2042, %v1709, %v2283
  %v2525 = vsel %vm2043, %v1711, %v2284
  %v2526 = vsel %vm2044, %v1714, %v2285
  %v2527 = vsel %vm2045, %v1716, %v2286
  %v2528 = vsel %vm2046, %v1719, %v2287
  %v2529 = vsel %vm2047, %v1721, %v2288
  %v2530 = vsel %vm2048, %v1724, %v2289
  %v2531 = vsel %vm2049, %v1726, %v2290
  %v2532 = vsel %vm2050, %v1729, %v2291
  %v2533 = vsel %vm2051, %v1731, %v2292
  %v2534 = vsel %vm2052, %v1734, %v2293
  %v2535 = vsel %vm2053, %v1736, %v2294
  %v2536 = vsel %vm2054, %v1739, %v2295
  %v2537 = vsel %vm2055, %v1741, %v2296
  %v2538 = vsel %vm2056, %v1744, %v2297
  %v2539 = vsel %vm2057, %v1746, %v2298
  %v2540 = vsel %vm2058, %v1749, %v2299
  %v2541 = vsel %vm2059, %v1751, %v2300
  %v2542 = vsel %vm2060, %v1754, %v2301
  %v2543 = vsel %vm2061, %v1756, %v2302
  %v2544 = vsel %vm2062, %v1759, %v2303
  %v2545 = vsel %vm2063, %v1761, %v2304
  %v2546 = vsel %vm2064, %v1764, %v2305
  %v2547 = vsel %vm2065, %v1766, %v2306
  %v2548 = vsel %vm2066, %v1769, %v2307
  %v2549 = vsel %vm2067, %v1771, %v2308
  %v2550 = vsel %vm2068, %v1774, %v2309
  %v2551 = vsel %vm2069, %v1776, %v2310
  %v2552 = vsel %vm2070, %v1779, %v2311
  %v2553 = vsel %vm2071, %v1781, %v2312
  %v2554 = vsel %vm2072, %v1784, %v2313
  %v2555 = vsel %vm2073, %v1786, %v2314
  %v2556 = vsel %vm2074, %v1789, %v2315
  %v2557 = vsel %vm2075, %v1791, %v2316
  %v2558 = vsel %vm2076, %v1794, %v2317
  %v2559 = vsel %vm2077, %v1796, %v2318
  %v2560 = vsel %vm2078, %v1799, %v2319
  %v2561 = vsel %vm2079, %v1801, %v2320
  %v2562 = vsel %vm2080, %v1804, %v2321
  %v2563 = vsel %vm2081, %v1806, %v2322
  %v2564 = vsel %vm2082, %v1809, %v2323
  %v2565 = vsel %vm2083, %v1811, %v2324
  %v2566 = vsel %vm2084, %v1814, %v2325
  %v2567 = vsel %vm2085, %v1816, %v2326
  %v2568 = vsel %vm2086, %v1819, %v2327
  %v2569 = vsel %vm2087, %v1821, %v2328
  %v2570 = vsel %vm2088, %v1824, %v2329
  %v2571 = vsel %vm2089, %v1826, %v2330
  %v2572 = vsel %vm2090, %v1829, %v2331
  %v2573 = vsel %vm2091, %v1831, %v2332
  %v2574 = vsel %vm2092, %v1834, %v2333
  %v2575 = vsel %vm2093, %v1836, %v2334
  %v2576 = vsel %vm2094, %v1839, %v2335
  %v2577 = vsel %vm2095, %v1841, %v2336
  %v2578 = vsel %vm2096, %v1844, %v2337
  %v2579 = vsel %vm2097, %v1846, %v2338
  %v2580 = vsel %vm2098, %v1849, %v2339
  %v2581 = vsel %vm2099, %v1851, %v2340
  %v2582 = vsel %vm2100, %v1854, %v2341
  %v2583 = vsel %vm2101, %v1856, %v2342
  %v2584 = vsel %vm2102, %v1859, %v2343
  %v2585 = vpack.c.bf16 %v2344, %v2344
  %v2586 = vpack.c.bf16 %v2345, %v2345
  %v2587 = vpack.c.bf16 %v2346, %v2346
  %v2588 = vpack.c.bf16 %v2347, %v2347
  %v2589 = vpack.c.bf16 %v2348, %v2348
  %v2590 = vpack.c.bf16 %v2349, %v2349
  %v2591 = vpack.c.bf16 %v2350, %v2350
  %v2592 = vpack.c.bf16 %v2351, %v2351
  %v2593 = vpack.c.bf16 %v2352, %v2352
  %v2594 = vpack.c.bf16 %v2353, %v2353
  %v2595 = vpack.c.bf16 %v2354, %v2354
  %v2596 = vpack.c.bf16 %v2355, %v2355
  %v2597 = vpack.c.bf16 %v2356, %v2356
  %v2598 = vpack.c.bf16 %v2357, %v2357
  %v2599 = vpack.c.bf16 %v2358, %v2358
  %v2600 = vpack.c.bf16 %v2359, %v2359
  %v2601 = vpack.c.bf16 %v2360, %v2360
  %v2602 = vpack.c.bf16 %v2361, %v2361
  %v2603 = vpack.c.bf16 %v2362, %v2362
  %v2604 = vpack.c.bf16 %v2363, %v2363
  %v2605 = vpack.c.bf16 %v2364, %v2364
  %v2606 = vpack.c.bf16 %v2365, %v2365
  %v2607 = vpack.c.bf16 %v2366, %v2366
  %v2608 = vpack.c.bf16 %v2367, %v2367
  %v2609 = vpack.c.bf16 %v2368, %v2368
  %v2610 = vpack.c.bf16 %v2369, %v2369
  %v2611 = vpack.c.bf16 %v2370, %v2370
  %v2612 = vpack.c.bf16 %v2371, %v2371
  %v2613 = vpack.c.bf16 %v2372, %v2372
  %v2614 = vpack.c.bf16 %v2373, %v2373
  %v2615 = vpack.c.bf16 %v2374, %v2374
  %v2616 = vpack.c.bf16 %v2375, %v2375
  %v2617 = vpack.c.bf16 %v2376, %v2376
  %v2618 = vpack.c.bf16 %v2377, %v2377
  %v2619 = vpack.c.bf16 %v2378, %v2378
  %v2620 = vpack.c.bf16 %v2379, %v2379
  %v2621 = vpack.c.bf16 %v2380, %v2380
  %v2622 = vpack.c.bf16 %v2381, %v2381
  %v2623 = vpack.c.bf16 %v2382, %v2382
  %v2624 = vpack.c.bf16 %v2383, %v2383
  %v2625 = vpack.c.bf16 %v2384, %v2384
  %v2626 = vpack.c.bf16 %v2385, %v2385
  %v2627 = vpack.c.bf16 %v2386, %v2386
  %v2628 = vpack.c.bf16 %v2387, %v2387
  %v2629 = vpack.c.bf16 %v2388, %v2388
  %v2630 = vpack.c.bf16 %v2389, %v2389
  %v2631 = vpack.c.bf16 %v2390, %v2390
  %v2632 = vpack.c.bf16 %v2391, %v2391
  %v2633 = vpack.c.bf16 %v2392, %v2392
  %v2634 = vpack.c.bf16 %v2393, %v2393
  %v2635 = vpack.c.bf16 %v2394, %v2394
  %v2636 = vpack.c.bf16 %v2395, %v2395
  %v2637 = vpack.c.bf16 %v2396, %v2396
  %v2638 = vpack.c.bf16 %v2397, %v2397
  %v2639 = vpack.c.bf16 %v2398, %v2398
  %v2640 = vpack.c.bf16 %v2399, %v2399
  %v2641 = vpack.c.bf16 %v2400, %v2400
  %v2642 = vpack.c.bf16 %v2401, %v2401
  %v2643 = vpack.c.bf16 %v2402, %v2402
  %v2644 = vpack.c.bf16 %v2403, %v2403
  %v2645 = vpack.c.bf16 %v2404, %v2404
  %v2646 = vpack.c.bf16 %v2405, %v2405
  %v2647 = vpack.c.bf16 %v2406, %v2406
  %v2648 = vpack.c.bf16 %v2407, %v2407
  %v2649 = vpack.c.bf16 %v2408, %v2408
  %v2650 = vpack.c.bf16 %v2409, %v2409
  %v2651 = vpack.c.bf16 %v2410, %v2410
  %v2652 = vpack.c.bf16 %v2411, %v2411
  %v2653 = vpack.c.bf16 %v2412, %v2412
  %v2654 = vpack.c.bf16 %v2413, %v2413
  %v2655 = vpack.c.bf16 %v2414, %v2414
  %v2656 = vpack.c.bf16 %v2415, %v2415
  %v2657 = vpack.c.bf16 %v2416, %v2416
  %v2658 = vpack.c.bf16 %v2417, %v2417
  %v2659 = vpack.c.bf16 %v2418, %v2418
  %v2660 = vpack.c.bf16 %v2419, %v2419
  %v2661 = vpack.c.bf16 %v2420, %v2420
  %v2662 = vpack.c.bf16 %v2421, %v2421
  %v2663 = vpack.c.bf16 %v2422, %v2422
  %v2664 = vpack.c.bf16 %v2423, %v2423
  %v2665 = vpack.c.bf16 %v2424, %v2424
  %v2666 = vpack.c.bf16 %v2425, %v2425
  %v2667 = vpack.c.bf16 %v2426, %v2426
  %v2668 = vpack.c.bf16 %v2427, %v2427
  %v2669 = vpack.c.bf16 %v2428, %v2428
  %v2670 = vpack.c.bf16 %v2429, %v2429
  %v2671 = vpack.c.bf16 %v2430, %v2430
  %v2672 = vpack.c.bf16 %v2431, %v2431
  %v2673 = vpack.c.bf16 %v2432, %v2432
  %v2674 = vpack.c.bf16 %v2433, %v2433
  %v2675 = vpack.c.bf16 %v2434, %v2434
  %v2676 = vpack.c.bf16 %v2435, %v2435
  %v2677 = vpack.c.bf16 %v2436, %v2436
  %v2678 = vpack.c.bf16 %v2437, %v2437
  %v2679 = vpack.c.bf16 %v2438, %v2438
  %v2680 = vpack.c.bf16 %v2439, %v2439
  %v2681 = vpack.c.bf16 %v2440, %v2440
  %v2682 = vpack.c.bf16 %v2441, %v2441
  %v2683 = vpack.c.bf16 %v2442, %v2442
  %v2684 = vpack.c.bf16 %v2443, %v2443
  %v2685 = vpack.c.bf16 %v2444, %v2444
  %v2686 = vpack.c.bf16 %v2445, %v2445
  %v2687 = vpack.c.bf16 %v2446, %v2446
  %v2688 = vpack.c.bf16 %v2447, %v2447
  %v2689 = vpack.c.bf16 %v2448, %v2448
  %v2690 = vpack.c.bf16 %v2449, %v2449
  %v2691 = vpack.c.bf16 %v2450, %v2450
  %v2692 = vpack.c.bf16 %v2451, %v2451
  %v2693 = vpack.c.bf16 %v2452, %v2452
  %v2694 = vpack.c.bf16 %v2453, %v2453
  %v2695 = vpack.c.bf16 %v2454, %v2454
  %v2696 = vpack.c.bf16 %v2455, %v2455
  %v2697 = vpack.c.bf16 %v2456, %v2456
  %v2698 = vpack.c.bf16 %v2457, %v2457
  %v2699 = vpack.c.bf16 %v2458, %v2458
  %v2700 = vpack.c.bf16 %v2459, %v2459
  %v2701 = vpack.c.bf16 %v2460, %v2460
  %v2702 = vpack.c.bf16 %v2461, %v2461
  %v2703 = vpack.c.bf16 %v2462, %v2462
  %v2704 = vpack.c.bf16 %v2463, %v2463
  %v2705 = vpack.c.bf16 %v2464, %v2464
  %v2706 = vpack.c.bf16 %v2465, %v2465
  %v2707 = vpack.c.bf16 %v2466, %v2466
  %v2708 = vpack.c.bf16 %v2467, %v2467
  %v2709 = vpack.c.bf16 %v2468, %v2468
  %v2710 = vpack.c.bf16 %v2469, %v2469
  %v2711 = vpack.c.bf16 %v2470, %v2470
  %v2712 = vpack.c.bf16 %v2471, %v2471
  %v2713 = vpack.c.bf16 %v2472, %v2472
  %v2714 = vpack.c.bf16 %v2473, %v2473
  %v2715 = vpack.c.bf16 %v2474, %v2474
  %v2716 = vpack.c.bf16 %v2475, %v2475
  %v2717 = vpack.c.bf16 %v2476, %v2476
  %v2718 = vpack.c.bf16 %v2477, %v2477
  %v2719 = vpack.c.bf16 %v2478, %v2478
  %v2720 = vpack.c.bf16 %v2479, %v2479
  %v2721 = vpack.c.bf16 %v2480, %v2480
  %v2722 = vpack.c.bf16 %v2481, %v2481
  %v2723 = vpack.c.bf16 %v2482, %v2482
  %v2724 = vpack.c.bf16 %v2483, %v2483
  %v2725 = vpack.c.bf16 %v2484, %v2484
  %v2726 = vpack.c.bf16 %v2485, %v2485
  %v2727 = vpack.c.bf16 %v2486, %v2486
  %v2728 = vpack.c.bf16 %v2487, %v2487
  %v2729 = vpack.c.bf16 %v2488, %v2488
  %v2730 = vpack.c.bf16 %v2489, %v2489
  %v2731 = vpack.c.bf16 %v2490, %v2490
  %v2732 = vpack.c.bf16 %v2491, %v2491
  %v2733 = vpack.c.bf16 %v2492, %v2492
  %v2734 = vpack.c.bf16 %v2493, %v2493
  %v2735 = vpack.c.bf16 %v2494, %v2494
  %v2736 = vpack.c.bf16 %v2495, %v2495
  %v2737 = vpack.c.bf16 %v2496, %v2496
  %v2738 = vpack.c.bf16 %v2497, %v2497
  %v2739 = vpack.c.bf16 %v2498, %v2498
  %v2740 = vpack.c.bf16 %v2499, %v2499
  %v2741 = vpack.c.bf16 %v2500, %v2500
  %v2742 = vpack.c.bf16 %v2501, %v2501
  %v2743 = vpack.c.bf16 %v2502, %v2502
  %v2744 = vpack.c.bf16 %v2503, %v2503
  %v2745 = vpack.c.bf16 %v2504, %v2504
  %v2746 = vpack.c.bf16 %v2505, %v2505
  %v2747 = vpack.c.bf16 %v2506, %v2506
  %v2748 = vpack.c.bf16 %v2507, %v2507
  %v2749 = vpack.c.bf16 %v2508, %v2508
  %v2750 = vpack.c.bf16 %v2509, %v2509
  %v2751 = vpack.c.bf16 %v2510, %v2510
  %v2752 = vpack.c.bf16 %v2511, %v2511
  %v2753 = vpack.c.bf16 %v2512, %v2512
  %v2754 = vpack.c.bf16 %v2513, %v2513
  %v2755 = vpack.c.bf16 %v2514, %v2514
  %v2756 = vpack.c.bf16 %v2515, %v2515
  %v2757 = vpack.c.bf16 %v2516, %v2516
  %v2758 = vpack.c.bf16 %v2517, %v2517
  %v2759 = vpack.c.bf16 %v2518, %v2518
  %v2760 = vpack.c.bf16 %v2519, %v2519
  %v2761 = vpack.c.bf16 %v2520, %v2520
  %v2762 = vpack.c.bf16 %v2521, %v2521
  %v2763 = vpack.c.bf16 %v2522, %v2522
  %v2764 = vpack.c.bf16 %v2523, %v2523
  %v2765 = vpack.c.bf16 %v2524, %v2524
  %v2766 = vpack.c.bf16 %v2525, %v2525
  %v2767 = vpack.c.bf16 %v2526, %v2526
  %v2768 = vpack.c.bf16 %v2527, %v2527
  %v2769 = vpack.c.bf16 %v2528, %v2528
  %v2770 = vpack.c.bf16 %v2529, %v2529
  %v2771 = vpack.c.bf16 %v2530, %v2530
  %v2772 = vpack.c.bf16 %v2531, %v2531
  %v2773 = vpack.c.bf16 %v2532, %v2532
  %v2774 = vpack.c.bf16 %v2533, %v2533
  %v2775 = vpack.c.bf16 %v2534, %v2534
  %v2776 = vpack.c.bf16 %v2535, %v2535
  %v2777 = vpack.c.bf16 %v2536, %v2536
  %v2778 = vpack.c.bf16 %v2537, %v2537
  %v2779 = vpack.c.bf16 %v2538, %v2538
  %v2780 = vpack.c.bf16 %v2539, %v2539
  %v2781 = vpack.c.bf16 %v2540, %v2540
  %v2782 = vpack.c.bf16 %v2541, %v2541
  %v2783 = vpack.c.bf16 %v2542, %v2542
  %v2784 = vpack.c.bf16 %v2543, %v2543
  %v2785 = vpack.c.bf16 %v2544, %v2544
  %v2786 = vpack.c.bf16 %v2545, %v2545
  %v2787 = vpack.c.bf16 %v2546, %v2546
  %v2788 = vpack.c.bf16 %v2547, %v2547
  %v2789 = vpack.c.bf16 %v2548, %v2548
  %v2790 = vpack.c.bf16 %v2549, %v2549
  %v2791 = vpack.c.bf16 %v2550, %v2550
  %v2792 = vpack.c.bf16 %v2551, %v2551
  %v2793 = vpack.c.bf16 %v2552, %v2552
  %v2794 = vpack.c.bf16 %v2553, %v2553
  %v2795 = vpack.c.bf16 %v2554, %v2554
  %v2796 = vpack.c.bf16 %v2555, %v2555
  %v2797 = vpack.c.bf16 %v2556, %v2556
  %v2798 = vpack.c.bf16 %v2557, %v2557
  %v2799 = vpack.c.bf16 %v2558, %v2558
  %v2800 = vpack.c.bf16 %v2559, %v2559
  %v2801 = vpack.c.bf16 %v2560, %v2560
  %v2802 = vpack.c.bf16 %v2561, %v2561
  %v2803 = vpack.c.bf16 %v2562, %v2562
  %v2804 = vpack.c.bf16 %v2563, %v2563
  %v2805 = vpack.c.bf16 %v2564, %v2564
  %v2806 = vpack.c.bf16 %v2565, %v2565
  %v2807 = vpack.c.bf16 %v2566, %v2566
  %v2808 = vpack.c.bf16 %v2567, %v2567
  %v2809 = vpack.c.bf16 %v2568, %v2568
  %v2810 = vpack.c.bf16 %v2569, %v2569
  %v2811 = vpack.c.bf16 %v2570, %v2570
  %v2812 = vpack.c.bf16 %v2571, %v2571
  %v2813 = vpack.c.bf16 %v2572, %v2572
  %v2814 = vpack.c.bf16 %v2573, %v2573
  %v2815 = vpack.c.bf16 %v2574, %v2574
  %v2816 = vpack.c.bf16 %v2575, %v2575
  %v2817 = vpack.c.bf16 %v2576, %v2576
  %v2818 = vpack.c.bf16 %v2577, %v2577
  %v2819 = vpack.c.bf16 %v2578, %v2578
  %v2820 = vpack.c.bf16 %v2579, %v2579
  %v2821 = vpack.c.bf16 %v2580, %v2580
  %v2822 = vpack.c.bf16 %v2581, %v2581
  %v2823 = vpack.c.bf16 %v2582, %v2582
  %v2824 = vpack.c.bf16 %v2583, %v2583
  %v2825 = vpack.c.bf16 %v2584, %v2584
  %vm2826 = vcmask 125952
  %2827 = vst.msk [vmem:[%s3] sm:$0xf] %vm2826, %v2585
  %2828 = vst.msk [vmem:[%s3 + $0x4] sm:$0xf] %vm2826, %v2586
  %2829 = vst.msk [vmem:[%s3 + $0x8] sm:$0xf] %vm2826, %v2587
  %2830 = vst.msk [vmem:[%s3 + $0xc] sm:$0xf] %vm2826, %v2588
  %2831 = vst.msk [vmem:[%s3 + $0x10] sm:$0xf] %vm2826, %v2589
  %2832 = vst.msk [vmem:[%s3 + $0x14] sm:$0xf] %vm2826, %v2590
  %2833 = vst.msk [vmem:[%s3 + $0x18] sm:$0xf] %vm2826, %v2591
  %2834 = vst.msk [vmem:[%s3 + $0x1c] sm:$0xf] %vm2826, %v2592
  %2835 = vst.msk [vmem:[%s3 + $0x20] sm:$0xf] %vm2826, %v2593
  %2836 = vst.msk [vmem:[%s3 + $0x24] sm:$0xf] %vm2826, %v2594
  %2837 = vst.msk [vmem:[%s3 + $0x28] sm:$0xf] %vm2826, %v2595
  %2838 = vst.msk [vmem:[%s3 + $0x2c] sm:$0xf] %vm2826, %v2596
  %2839 = vst.msk [vmem:[%s3 + $0x30] sm:$0xf] %vm2826, %v2597
  %2840 = vst.msk [vmem:[%s3 + $0x34] sm:$0xf] %vm2826, %v2598
  %2841 = vst.msk [vmem:[%s3 + $0x38] sm:$0xf] %vm2826, %v2599
  %2842 = vst.msk [vmem:[%s3 + $0x3c] sm:$0xf] %vm2826, %v2600
  %2843 = vst.msk [vmem:[%s3 + $0x40] sm:$0xf] %vm2826, %v2601
  %2844 = vst.msk [vmem:[%s3 + $0x44] sm:$0xf] %vm2826, %v2602
  %2845 = vst.msk [vmem:[%s3 + $0x48] sm:$0xf] %vm2826, %v2603
  %2846 = vst.msk [vmem:[%s3 + $0x4c] sm:$0xf] %vm2826, %v2604
  %2847 = vst.msk [vmem:[%s3 + $0x50] sm:$0xf] %vm2826, %v2605
  %2848 = vst.msk [vmem:[%s3 + $0x54] sm:$0xf] %vm2826, %v2606
  %2849 = vst.msk [vmem:[%s3 + $0x58] sm:$0xf] %vm2826, %v2607
  %2850 = vst.msk [vmem:[%s3 + $0x5c] sm:$0xf] %vm2826, %v2608
  %2851 = vst.msk [vmem:[%s3 + $0x60] sm:$0xf] %vm2826, %v2609
  %2852 = vst.msk [vmem:[%s3 + $0x64] sm:$0xf] %vm2826, %v2610
  %2853 = vst.msk [vmem:[%s3 + $0x68] sm:$0xf] %vm2826, %v2611
  %2854 = vst.msk [vmem:[%s3 + $0x6c] sm:$0xf] %vm2826, %v2612
  %2855 = vst.msk [vmem:[%s3 + $0x70] sm:$0xf] %vm2826, %v2613
  %2856 = vst.msk [vmem:[%s3 + $0x74] sm:$0xf] %vm2826, %v2614
  %2857 = vst.msk [vmem:[%s3 + $0x78] sm:$0xf] %vm2826, %v2615
  %2858 = vst.msk [vmem:[%s3 + $0x7c] sm:$0xf] %vm2826, %v2616
  %2859 = vst.msk [vmem:[%s3 + $0x80] sm:$0xf] %vm2826, %v2617
  %2860 = vst.msk [vmem:[%s3 + $0x84] sm:$0xf] %vm2826, %v2618
  %2861 = vst.msk [vmem:[%s3 + $0x88] sm:$0xf] %vm2826, %v2619
  %2862 = vst.msk [vmem:[%s3 + $0x8c] sm:$0xf] %vm2826, %v2620
  %2863 = vst.msk [vmem:[%s3 + $0x90] sm:$0xf] %vm2826, %v2621
  %2864 = vst.msk [vmem:[%s3 + $0x94] sm:$0xf] %vm2826, %v2622
  %2865 = vst.msk [vmem:[%s3 + $0x98] sm:$0xf] %vm2826, %v2623
  %2866 = vst.msk [vmem:[%s3 + $0x9c] sm:$0xf] %vm2826, %v2624
  %2867 = vst.msk [vmem:[%s3 + $0xa0] sm:$0xf] %vm2826, %v2625
  %2868 = vst.msk [vmem:[%s3 + $0xa4] sm:$0xf] %vm2826, %v2626
  %2869 = vst.msk [vmem:[%s3 + $0xa8] sm:$0xf] %vm2826, %v2627
  %2870 = vst.msk [vmem:[%s3 + $0xac] sm:$0xf] %vm2826, %v2628
  %2871 = vst.msk [vmem:[%s3 + $0xb0] sm:$0xf] %vm2826, %v2629
  %2872 = vst.msk [vmem:[%s3 + $0xb4] sm:$0xf] %vm2826, %v2630
  %2873 = vst.msk [vmem:[%s3 + $0xb8] sm:$0xf] %vm2826, %v2631
  %2874 = vst.msk [vmem:[%s3 + $0xbc] sm:$0xf] %vm2826, %v2632
  %2875 = vst.msk [vmem:[%s3 + $0xc0] sm:$0xf] %vm2826, %v2633
  %2876 = vst.msk [vmem:[%s3 + $0xc4] sm:$0xf] %vm2826, %v2634
  %2877 = vst.msk [vmem:[%s3 + $0xc8] sm:$0xf] %vm2826, %v2635
  %2878 = vst.msk [vmem:[%s3 + $0xcc] sm:$0xf] %vm2826, %v2636
  %2879 = vst.msk [vmem:[%s3 + $0xd0] sm:$0xf] %vm2826, %v2637
  %2880 = vst.msk [vmem:[%s3 + $0xd4] sm:$0xf] %vm2826, %v2638
  %2881 = vst.msk [vmem:[%s3 + $0xd8] sm:$0xf] %vm2826, %v2639
  %2882 = vst.msk [vmem:[%s3 + $0xdc] sm:$0xf] %vm2826, %v2640
  %2883 = vst.msk [vmem:[%s3 + $0xe0] sm:$0xf] %vm2826, %v2641
  %2884 = vst.msk [vmem:[%s3 + $0xe4] sm:$0xf] %vm2826, %v2642
  %2885 = vst.msk [vmem:[%s3 + $0xe8] sm:$0xf] %vm2826, %v2643
  %2886 = vst.msk [vmem:[%s3 + $0xec] sm:$0xf] %vm2826, %v2644
  %2887 = vst.msk [vmem:[%s3 + $0xf0] sm:$0xf] %vm2826, %v2645
  %2888 = vst.msk [vmem:[%s3 + $0xf4] sm:$0xf] %vm2826, %v2646
  %2889 = vst.msk [vmem:[%s3 + $0xf8] sm:$0xf] %vm2826, %v2647
  %2890 = vst.msk [vmem:[%s3 + $0xfc] sm:$0xf] %vm2826, %v2648
  %2891 = vst.msk [vmem:[%s3 + $0x100] sm:$0xf] %vm2826, %v2649
  %2892 = vst.msk [vmem:[%s3 + $0x104] sm:$0xf] %vm2826, %v2650
  %2893 = vst.msk [vmem:[%s3 + $0x108] sm:$0xf] %vm2826, %v2651
  %2894 = vst.msk [vmem:[%s3 + $0x10c] sm:$0xf] %vm2826, %v2652
  %2895 = vst.msk [vmem:[%s3 + $0x110] sm:$0xf] %vm2826, %v2653
  %2896 = vst.msk [vmem:[%s3 + $0x114] sm:$0xf] %vm2826, %v2654
  %2897 = vst.msk [vmem:[%s3 + $0x118] sm:$0xf] %vm2826, %v2655
  %2898 = vst.msk [vmem:[%s3 + $0x11c] sm:$0xf] %vm2826, %v2656
  %2899 = vst.msk [vmem:[%s3 + $0x120] sm:$0xf] %vm2826, %v2657
  %2900 = vst.msk [vmem:[%s3 + $0x124] sm:$0xf] %vm2826, %v2658
  %2901 = vst.msk [vmem:[%s3 + $0x128] sm:$0xf] %vm2826, %v2659
  %2902 = vst.msk [vmem:[%s3 + $0x12c] sm:$0xf] %vm2826, %v2660
  %2903 = vst.msk [vmem:[%s3 + $0x130] sm:$0xf] %vm2826, %v2661
  %2904 = vst.msk [vmem:[%s3 + $0x134] sm:$0xf] %vm2826, %v2662
  %2905 = vst.msk [vmem:[%s3 + $0x138] sm:$0xf] %vm2826, %v2663
  %2906 = vst.msk [vmem:[%s3 + $0x13c] sm:$0xf] %vm2826, %v2664
  %2907 = vst.msk [vmem:[%s3 + $0x140] sm:$0xf] %vm2826, %v2665
  %2908 = vst.msk [vmem:[%s3 + $0x144] sm:$0xf] %vm2826, %v2666
  %2909 = vst.msk [vmem:[%s3 + $0x148] sm:$0xf] %vm2826, %v2667
  %2910 = vst.msk [vmem:[%s3 + $0x14c] sm:$0xf] %vm2826, %v2668
  %2911 = vst.msk [vmem:[%s3 + $0x150] sm:$0xf] %vm2826, %v2669
  %2912 = vst.msk [vmem:[%s3 + $0x154] sm:$0xf] %vm2826, %v2670
  %2913 = vst.msk [vmem:[%s3 + $0x158] sm:$0xf] %vm2826, %v2671
  %2914 = vst.msk [vmem:[%s3 + $0x15c] sm:$0xf] %vm2826, %v2672
  %2915 = vst.msk [vmem:[%s3 + $0x160] sm:$0xf] %vm2826, %v2673
  %2916 = vst.msk [vmem:[%s3 + $0x164] sm:$0xf] %vm2826, %v2674
  %2917 = vst.msk [vmem:[%s3 + $0x168] sm:$0xf] %vm2826, %v2675
  %2918 = vst.msk [vmem:[%s3 + $0x16c] sm:$0xf] %vm2826, %v2676
  %2919 = vst.msk [vmem:[%s3 + $0x170] sm:$0xf] %vm2826, %v2677
  %2920 = vst.msk [vmem:[%s3 + $0x174] sm:$0xf] %vm2826, %v2678
  %2921 = vst.msk [vmem:[%s3 + $0x178] sm:$0xf] %vm2826, %v2679
  %2922 = vst.msk [vmem:[%s3 + $0x17c] sm:$0xf] %vm2826, %v2680
  %2923 = vst.msk [vmem:[%s3 + $0x180] sm:$0xf] %vm2826, %v2681
  %2924 = vst.msk [vmem:[%s3 + $0x184] sm:$0xf] %vm2826, %v2682
  %2925 = vst.msk [vmem:[%s3 + $0x188] sm:$0xf] %vm2826, %v2683
  %2926 = vst.msk [vmem:[%s3 + $0x18c] sm:$0xf] %vm2826, %v2684
  %2927 = vst.msk [vmem:[%s3 + $0x190] sm:$0xf] %vm2826, %v2685
  %2928 = vst.msk [vmem:[%s3 + $0x194] sm:$0xf] %vm2826, %v2686
  %2929 = vst.msk [vmem:[%s3 + $0x198] sm:$0xf] %vm2826, %v2687
  %2930 = vst.msk [vmem:[%s3 + $0x19c] sm:$0xf] %vm2826, %v2688
  %2931 = vst.msk [vmem:[%s3 + $0x1a0] sm:$0xf] %vm2826, %v2689
  %2932 = vst.msk [vmem:[%s3 + $0x1a4] sm:$0xf] %vm2826, %v2690
  %2933 = vst.msk [vmem:[%s3 + $0x1a8] sm:$0xf] %vm2826, %v2691
  %2934 = vst.msk [vmem:[%s3 + $0x1ac] sm:$0xf] %vm2826, %v2692
  %2935 = vst.msk [vmem:[%s3 + $0x1b0] sm:$0xf] %vm2826, %v2693
  %2936 = vst.msk [vmem:[%s3 + $0x1b4] sm:$0xf] %vm2826, %v2694
  %2937 = vst.msk [vmem:[%s3 + $0x1b8] sm:$0xf] %vm2826, %v2695
  %2938 = vst.msk [vmem:[%s3 + $0x1bc] sm:$0xf] %vm2826, %v2696
  %2939 = vst.msk [vmem:[%s3 + $0x1c0] sm:$0xf] %vm2826, %v2697
  %2940 = vst.msk [vmem:[%s3 + $0x1c4] sm:$0xf] %vm2826, %v2698
  %2941 = vst.msk [vmem:[%s3 + $0x1c8] sm:$0xf] %vm2826, %v2699
  %2942 = vst.msk [vmem:[%s3 + $0x1cc] sm:$0xf] %vm2826, %v2700
  %2943 = vst.msk [vmem:[%s3 + $0x1d0] sm:$0xf] %vm2826, %v2701
  %2944 = vst.msk [vmem:[%s3 + $0x1d4] sm:$0xf] %vm2826, %v2702
  %2945 = vst.msk [vmem:[%s3 + $0x1d8] sm:$0xf] %vm2826, %v2703
  %2946 = vst.msk [vmem:[%s3 + $0x1dc] sm:$0xf] %vm2826, %v2704
  %2947 = vst.msk [vmem:[%s3 + $0x1e0] sm:$0xf] %vm2826, %v2705
  %2948 = vst.msk [vmem:[%s3 + $0x1e4] sm:$0xf] %vm2826, %v2706
  %2949 = vst.msk [vmem:[%s3 + $0x1e8] sm:$0xf] %vm2826, %v2707
  %2950 = vst.msk [vmem:[%s3 + $0x1ec] sm:$0xf] %vm2826, %v2708
  %2951 = vst.msk [vmem:[%s3 + $0x1f0] sm:$0xf] %vm2826, %v2709
  %2952 = vst.msk [vmem:[%s3 + $0x1f4] sm:$0xf] %vm2826, %v2710
  %2953 = vst.msk [vmem:[%s3 + $0x1f8] sm:$0xf] %vm2826, %v2711
  %2954 = vst.msk [vmem:[%s3 + $0x1fc] sm:$0xf] %vm2826, %v2712
  %2955 = vst.msk [vmem:[%s3 + $0x200] sm:$0xf] %vm2826, %v2713
  %2956 = vst.msk [vmem:[%s3 + $0x204] sm:$0xf] %vm2826, %v2714
  %2957 = vst.msk [vmem:[%s3 + $0x208] sm:$0xf] %vm2826, %v2715
  %2958 = vst.msk [vmem:[%s3 + $0x20c] sm:$0xf] %vm2826, %v2716
  %2959 = vst.msk [vmem:[%s3 + $0x210] sm:$0xf] %vm2826, %v2717
  %2960 = vst.msk [vmem:[%s3 + $0x214] sm:$0xf] %vm2826, %v2718
  %2961 = vst.msk [vmem:[%s3 + $0x218] sm:$0xf] %vm2826, %v2719
  %2962 = vst.msk [vmem:[%s3 + $0x21c] sm:$0xf] %vm2826, %v2720
  %2963 = vst.msk [vmem:[%s3 + $0x220] sm:$0xf] %vm2826, %v2721
  %2964 = vst.msk [vmem:[%s3 + $0x224] sm:$0xf] %vm2826, %v2722
  %2965 = vst.msk [vmem:[%s3 + $0x228] sm:$0xf] %vm2826, %v2723
  %2966 = vst.msk [vmem:[%s3 + $0x22c] sm:$0xf] %vm2826, %v2724
  %2967 = vst.msk [vmem:[%s3 + $0x230] sm:$0xf] %vm2826, %v2725
  %2968 = vst.msk [vmem:[%s3 + $0x234] sm:$0xf] %vm2826, %v2726
  %2969 = vst.msk [vmem:[%s3 + $0x238] sm:$0xf] %vm2826, %v2727
  %2970 = vst.msk [vmem:[%s3 + $0x23c] sm:$0xf] %vm2826, %v2728
  %2971 = vst.msk [vmem:[%s3 + $0x240] sm:$0xf] %vm2826, %v2729
  %2972 = vst.msk [vmem:[%s3 + $0x244] sm:$0xf] %vm2826, %v2730
  %2973 = vst.msk [vmem:[%s3 + $0x248] sm:$0xf] %vm2826, %v2731
  %2974 = vst.msk [vmem:[%s3 + $0x24c] sm:$0xf] %vm2826, %v2732
  %2975 = vst.msk [vmem:[%s3 + $0x250] sm:$0xf] %vm2826, %v2733
  %2976 = vst.msk [vmem:[%s3 + $0x254] sm:$0xf] %vm2826, %v2734
  %2977 = vst.msk [vmem:[%s3 + $0x258] sm:$0xf] %vm2826, %v2735
  %2978 = vst.msk [vmem:[%s3 + $0x25c] sm:$0xf] %vm2826, %v2736
  %2979 = vst.msk [vmem:[%s3 + $0x260] sm:$0xf] %vm2826, %v2737
  %2980 = vst.msk [vmem:[%s3 + $0x264] sm:$0xf] %vm2826, %v2738
  %2981 = vst.msk [vmem:[%s3 + $0x268] sm:$0xf] %vm2826, %v2739
  %2982 = vst.msk [vmem:[%s3 + $0x26c] sm:$0xf] %vm2826, %v2740
  %2983 = vst.msk [vmem:[%s3 + $0x270] sm:$0xf] %vm2826, %v2741
  %2984 = vst.msk [vmem:[%s3 + $0x274] sm:$0xf] %vm2826, %v2742
  %2985 = vst.msk [vmem:[%s3 + $0x278] sm:$0xf] %vm2826, %v2743
  %2986 = vst.msk [vmem:[%s3 + $0x27c] sm:$0xf] %vm2826, %v2744
  %2987 = vst.msk [vmem:[%s3 + $0x280] sm:$0xf] %vm2826, %v2745
  %2988 = vst.msk [vmem:[%s3 + $0x284] sm:$0xf] %vm2826, %v2746
  %2989 = vst.msk [vmem:[%s3 + $0x288] sm:$0xf] %vm2826, %v2747
  %2990 = vst.msk [vmem:[%s3 + $0x28c] sm:$0xf] %vm2826, %v2748
  %2991 = vst.msk [vmem:[%s3 + $0x290] sm:$0xf] %vm2826, %v2749
  %2992 = vst.msk [vmem:[%s3 + $0x294] sm:$0xf] %vm2826, %v2750
  %2993 = vst.msk [vmem:[%s3 + $0x298] sm:$0xf] %vm2826, %v2751
  %2994 = vst.msk [vmem:[%s3 + $0x29c] sm:$0xf] %vm2826, %v2752
  %2995 = vst.msk [vmem:[%s3 + $0x2a0] sm:$0xf] %vm2826, %v2753
  %2996 = vst.msk [vmem:[%s3 + $0x2a4] sm:$0xf] %vm2826, %v2754
  %2997 = vst.msk [vmem:[%s3 + $0x2a8] sm:$0xf] %vm2826, %v2755
  %2998 = vst.msk [vmem:[%s3 + $0x2ac] sm:$0xf] %vm2826, %v2756
  %2999 = vst.msk [vmem:[%s3 + $0x2b0] sm:$0xf] %vm2826, %v2757
  %3000 = vst.msk [vmem:[%s3 + $0x2b4] sm:$0xf] %vm2826, %v2758
  %3001 = vst.msk [vmem:[%s3 + $0x2b8] sm:$0xf] %vm2826, %v2759
  %3002 = vst.msk [vmem:[%s3 + $0x2bc] sm:$0xf] %vm2826, %v2760
  %3003 = vst.msk [vmem:[%s3 + $0x2c0] sm:$0xf] %vm2826, %v2761
  %3004 = vst.msk [vmem:[%s3 + $0x2c4] sm:$0xf] %vm2826, %v2762
  %3005 = vst.msk [vmem:[%s3 + $0x2c8] sm:$0xf] %vm2826, %v2763
  %3006 = vst.msk [vmem:[%s3 + $0x2cc] sm:$0xf] %vm2826, %v2764
  %3007 = vst.msk [vmem:[%s3 + $0x2d0] sm:$0xf] %vm2826, %v2765
  %3008 = vst.msk [vmem:[%s3 + $0x2d4] sm:$0xf] %vm2826, %v2766
  %3009 = vst.msk [vmem:[%s3 + $0x2d8] sm:$0xf] %vm2826, %v2767
  %3010 = vst.msk [vmem:[%s3 + $0x2dc] sm:$0xf] %vm2826, %v2768
  %3011 = vst.msk [vmem:[%s3 + $0x2e0] sm:$0xf] %vm2826, %v2769
  %3012 = vst.msk [vmem:[%s3 + $0x2e4] sm:$0xf] %vm2826, %v2770
  %3013 = vst.msk [vmem:[%s3 + $0x2e8] sm:$0xf] %vm2826, %v2771
  %3014 = vst.msk [vmem:[%s3 + $0x2ec] sm:$0xf] %vm2826, %v2772
  %3015 = vst.msk [vmem:[%s3 + $0x2f0] sm:$0xf] %vm2826, %v2773
  %3016 = vst.msk [vmem:[%s3 + $0x2f4] sm:$0xf] %vm2826, %v2774
  %3017 = vst.msk [vmem:[%s3 + $0x2f8] sm:$0xf] %vm2826, %v2775
  %3018 = vst.msk [vmem:[%s3 + $0x2fc] sm:$0xf] %vm2826, %v2776
  %3019 = vst.msk [vmem:[%s3 + $0x300] sm:$0xf] %vm2826, %v2777
  %3020 = vst.msk [vmem:[%s3 + $0x304] sm:$0xf] %vm2826, %v2778
  %3021 = vst.msk [vmem:[%s3 + $0x308] sm:$0xf] %vm2826, %v2779
  %3022 = vst.msk [vmem:[%s3 + $0x30c] sm:$0xf] %vm2826, %v2780
  %3023 = vst.msk [vmem:[%s3 + $0x310] sm:$0xf] %vm2826, %v2781
  %3024 = vst.msk [vmem:[%s3 + $0x314] sm:$0xf] %vm2826, %v2782
  %3025 = vst.msk [vmem:[%s3 + $0x318] sm:$0xf] %vm2826, %v2783
  %3026 = vst.msk [vmem:[%s3 + $0x31c] sm:$0xf] %vm2826, %v2784
  %3027 = vst.msk [vmem:[%s3 + $0x320] sm:$0xf] %vm2826, %v2785
  %3028 = vst.msk [vmem:[%s3 + $0x324] sm:$0xf] %vm2826, %v2786
  %3029 = vst.msk [vmem:[%s3 + $0x328] sm:$0xf] %vm2826, %v2787
  %3030 = vst.msk [vmem:[%s3 + $0x32c] sm:$0xf] %vm2826, %v2788
  %3031 = vst.msk [vmem:[%s3 + $0x330] sm:$0xf] %vm2826, %v2789
  %3032 = vst.msk [vmem:[%s3 + $0x334] sm:$0xf] %vm2826, %v2790
  %3033 = vst.msk [vmem:[%s3 + $0x338] sm:$0xf] %vm2826, %v2791
  %3034 = vst.msk [vmem:[%s3 + $0x33c] sm:$0xf] %vm2826, %v2792
  %3035 = vst.msk [vmem:[%s3 + $0x340] sm:$0xf] %vm2826, %v2793
  %3036 = vst.msk [vmem:[%s3 + $0x344] sm:$0xf] %vm2826, %v2794
  %3037 = vst.msk [vmem:[%s3 + $0x348] sm:$0xf] %vm2826, %v2795
  %3038 = vst.msk [vmem:[%s3 + $0x34c] sm:$0xf] %vm2826, %v2796
  %3039 = vst.msk [vmem:[%s3 + $0x350] sm:$0xf] %vm2826, %v2797
  %3040 = vst.msk [vmem:[%s3 + $0x354] sm:$0xf] %vm2826, %v2798
  %3041 = vst.msk [vmem:[%s3 + $0x358] sm:$0xf] %vm2826, %v2799
  %3042 = vst.msk [vmem:[%s3 + $0x35c] sm:$0xf] %vm2826, %v2800
  %3043 = vst.msk [vmem:[%s3 + $0x360] sm:$0xf] %vm2826, %v2801
  %3044 = vst.msk [vmem:[%s3 + $0x364] sm:$0xf] %vm2826, %v2802
  %3045 = vst.msk [vmem:[%s3 + $0x368] sm:$0xf] %vm2826, %v2803
  %3046 = vst.msk [vmem:[%s3 + $0x36c] sm:$0xf] %vm2826, %v2804
  %3047 = vst.msk [vmem:[%s3 + $0x370] sm:$0xf] %vm2826, %v2805
  %3048 = vst.msk [vmem:[%s3 + $0x374] sm:$0xf] %vm2826, %v2806
  %3049 = vst.msk [vmem:[%s3 + $0x378] sm:$0xf] %vm2826, %v2807
  %3050 = vst.msk [vmem:[%s3 + $0x37c] sm:$0xf] %vm2826, %v2808
  %3051 = vst.msk [vmem:[%s3 + $0x380] sm:$0xf] %vm2826, %v2809
  %3052 = vst.msk [vmem:[%s3 + $0x384] sm:$0xf] %vm2826, %v2810
  %3053 = vst.msk [vmem:[%s3 + $0x388] sm:$0xf] %vm2826, %v2811
  %3054 = vst.msk [vmem:[%s3 + $0x38c] sm:$0xf] %vm2826, %v2812
  %3055 = vst.msk [vmem:[%s3 + $0x390] sm:$0xf] %vm2826, %v2813
  %3056 = vst.msk [vmem:[%s3 + $0x394] sm:$0xf] %vm2826, %v2814
  %3057 = vst.msk [vmem:[%s3 + $0x398] sm:$0xf] %vm2826, %v2815
  %3058 = vst.msk [vmem:[%s3 + $0x39c] sm:$0xf] %vm2826, %v2816
  %3059 = vst.msk [vmem:[%s3 + $0x3a0] sm:$0xf] %vm2826, %v2817
  %3060 = vst.msk [vmem:[%s3 + $0x3a4] sm:$0xf] %vm2826, %v2818
  %3061 = vst.msk [vmem:[%s3 + $0x3a8] sm:$0xf] %vm2826, %v2819
  %3062 = vst.msk [vmem:[%s3 + $0x3ac] sm:$0xf] %vm2826, %v2820
  %3063 = vst.msk [vmem:[%s3 + $0x3b0] sm:$0xf] %vm2826, %v2821
  %3064 = vst.msk [vmem:[%s3 + $0x3b4] sm:$0xf] %vm2826, %v2822
  %3065 = vst.msk [vmem:[%s3 + $0x3b8] sm:$0xf] %vm2826, %v2823
  %3066 = vst.msk [vmem:[%s3 + $0x3bc] sm:$0xf] %vm2826, %v2824
  %vm3067 = vcmask 122880
  %3068 = vst.msk [vmem:[%s3 + $0x3c0] sm:$0x1] %vm3067, %v2825
  // Predicated region
  $region14: #{dqn_forward.5} parent=0 // pred_check
    _
  $region15: #{dqn_forward.5} parent=0 // pred_check_branch
    %3070 = sbr.rel (0) target = $region17
  $region16: #{dqn_forward.5} parent=0 // pred_region
    _
  $region17: #{dqn_forward.5} parent=0 // pred_fallthru
    _
  // Predicated region
  $region18: #{dqn_forward.5} parent=0 // pred_check
    _
  $region19: #{dqn_forward.5} parent=0 // pred_check_branch
    %3072 = sbr.rel (0) target = $region21
  $region20: #{dqn_forward.5} parent=0 // pred_region
    _
  $region21: #{dqn_forward.5} parent=0 // pred_fallthru
    _

// kernel: dqn_forward.6
$region0: #{dqn_forward.6}
  #allocation0 [shape = 'u32[]', space=smem, size = 0x4, offset = 0x4, fixed_abs, tag = 'smem constant byte address 0x4 - core index']
  #allocation1 [shape = 'u32[72,128]{1,0:T(1,128)}', space=vmem, size = 0x9000, scoped, tag = 'internal scratch']
  %s0 = inlined_call_operand.vmem [shape: bf16[450,144], index: 0, kind: input, shape index: {}]
  %s1 = inlined_call_operand.vmem [shape: bf16[144,32], index: 1, kind: input, shape index: {}]
  %s2 = inlined_call_operand.vmem [shape: f32[1,32], index: 2, kind: input, shape index: {}]
  %s3 = inlined_call_operand.vmem [shape: bf16[450,32], index: 3, kind: output, shape index: {}]
  %s4 = sld [smem:[#allocation0]]
  $region22: #{dqn_forward.6} parent=0
    _
  %s6 = ssub.s32 1, %s4
  %s7 = scalar_select 0, %s6, %s4
  // Predicated region
  $region2: #{dqn_forward.6} parent=0 // pred_check
    _
  $region3: #{dqn_forward.6} parent=0 // pred_check_branch
    %9 = sbr.rel (0) target = $region5
  $region4: #{dqn_forward.6} parent=0 // pred_region
    _
  $region5: #{dqn_forward.6} parent=0 // pred_fallthru
    _
  // Predicated region
  $region6: #{dqn_forward.6} parent=0 // pred_check
    _
  $region7: #{dqn_forward.6} parent=0 // pred_check_branch
    %11 = sbr.rel (0) target = $region9
  $region8: #{dqn_forward.6} parent=0 // pred_region
    _
  $region9: #{dqn_forward.6} parent=0 // pred_fallthru
    _
  // Predicated region
  $region10: #{dqn_forward.6} parent=0 // pred_check
    _
  $region11: #{dqn_forward.6} parent=0 // pred_check_branch
    %13 = sbr.rel (0) target = $region13
  $region12: #{dqn_forward.6} parent=0 // pred_region
    _
  $region13: #{dqn_forward.6} parent=0 // pred_fallthru
    _
  %v15 = vld [vmem:[%s0] sm:$0xff]
  %v16 = vld [vmem:[%s0 + $0x8] sm:$0xff]
  %v17 = vld [vmem:[%s0 + $0x10] sm:$0xff]
  %v18 = vld [vmem:[%s0 + $0x18] sm:$0xff]
  %v19 = vld [vmem:[%s0 + $0x20] sm:$0xff]
  %v20 = vld [vmem:[%s0 + $0x28] sm:$0xff]
  %v21 = vld [vmem:[%s0 + $0x30] sm:$0xff]
  %v22 = vld [vmem:[%s0 + $0x38] sm:$0xff]
  %v23 = vld [vmem:[%s0 + $0x40] sm:$0xff]
  %v24 = vld [vmem:[%s0 + $0x48] sm:$0xff]
  %v25 = vld [vmem:[%s0 + $0x50] sm:$0xff]
  %v26 = vld [vmem:[%s0 + $0x58] sm:$0xff]
  %v27 = vld [vmem:[%s0 + $0x60] sm:$0xff]
  %v28 = vld [vmem:[%s0 + $0x68] sm:$0xff]
  %v29 = vld [vmem:[%s0 + $0x70] sm:$0xff]
  %v30 = vld [vmem:[%s0 + $0x78] sm:$0xff]
  %v31 = vld [vmem:[%s0 + $0x80] sm:$0xff]
  %v32 = vld [vmem:[%s0 + $0x88] sm:$0xff]
  %v33 = vld [vmem:[%s0 + $0x90] sm:$0xff]
  %v34 = vld [vmem:[%s0 + $0x98] sm:$0xff]
  %v35 = vld [vmem:[%s0 + $0xa0] sm:$0xff]
  %v36 = vld [vmem:[%s0 + $0xa8] sm:$0xff]
  %v37 = vld [vmem:[%s0 + $0xb0] sm:$0xff]
  %v38 = vld [vmem:[%s0 + $0xb8] sm:$0xff]
  %v39 = vld [vmem:[%s0 + $0xc0] sm:$0xff]
  %v40 = vld [vmem:[%s0 + $0xc8] sm:$0xff]
  %v41 = vld [vmem:[%s0 + $0xd0] sm:$0xff]
  %v42 = vld [vmem:[%s0 + $0xd8] sm:$0xff]
  %v43 = vld [vmem:[%s0 + $0xe0] sm:$0xff]
  %v44 = vld [vmem:[%s0 + $0xe8] sm:$0xff]
  %v45 = vld [vmem:[%s0 + $0xf0] sm:$0xff]
  %v46 = vld [vmem:[%s0 + $0xf8] sm:$0xff]
  %v47 = vld [vmem:[%s0 + $0x100] sm:$0xff]
  %v48 = vld [vmem:[%s0 + $0x108] sm:$0xff]
  %v49 = vld [vmem:[%s0 + $0x110] sm:$0xff]
  %v50 = vld [vmem:[%s0 + $0x118] sm:$0xff]
  %v51 = vld [vmem:[%s0 + $0x120] sm:$0xff]
  %v52 = vld [vmem:[%s0 + $0x128] sm:$0xff]
  %v53 = vld [vmem:[%s0 + $0x130] sm:$0xff]
  %v54 = vld [vmem:[%s0 + $0x138] sm:$0xff]
  %v55 = vld [vmem:[%s0 + $0x140] sm:$0xff]
  %v56 = vld [vmem:[%s0 + $0x148] sm:$0xff]
  %v57 = vld [vmem:[%s0 + $0x150] sm:$0xff]
  %v58 = vld [vmem:[%s0 + $0x158] sm:$0xff]
  %v59 = vld [vmem:[%s0 + $0x160] sm:$0xff]
  %v60 = vld [vmem:[%s0 + $0x168] sm:$0xff]
  %v61 = vld [vmem:[%s0 + $0x170] sm:$0xff]
  %v62 = vld [vmem:[%s0 + $0x178] sm:$0xff]
  %v63 = vld [vmem:[%s0 + $0x180] sm:$0xff]
  %v64 = vld [vmem:[%s0 + $0x188] sm:$0xff]
  %v65 = vld [vmem:[%s0 + $0x190] sm:$0xff]
  %v66 = vld [vmem:[%s0 + $0x198] sm:$0xff]
  %v67 = vld [vmem:[%s0 + $0x1a0] sm:$0xff]
  %v68 = vld [vmem:[%s0 + $0x1a8] sm:$0xff]
  %v69 = vld [vmem:[%s0 + $0x1b0] sm:$0xff]
  %v70 = vld [vmem:[%s0 + $0x1b8] sm:$0xff]
  %v71 = vld [vmem:[%s0 + $0x1c0] sm:$0x11]
  %v72 = vld [vmem:[%s1] sm:$0xf]
  %v73 = vld [vmem:[%s1 + $0x4] sm:$0xf]
  %v74 = vld [vmem:[%s1 + $0x8] sm:$0xf]
  %v75 = vld [vmem:[%s1 + $0xc] sm:$0xf]
  %v76 = vld [vmem:[%s1 + $0x10] sm:$0xf]
  %v77 = vld [vmem:[%s1 + $0x14] sm:$0xf]
  %v78 = vld [vmem:[%s1 + $0x18] sm:$0xf]
  %v79 = vld [vmem:[%s1 + $0x1c] sm:$0xf]
  %v80 = vld [vmem:[%s1 + $0x20] sm:$0xf]
  %v81 = vld [vmem:[%s1 + $0x24] sm:$0xf]
  %v82 = vld [vmem:[%s1 + $0x28] sm:$0xf]
  %v83 = vld [vmem:[%s1 + $0x2c] sm:$0xf]
  %v84 = vld [vmem:[%s1 + $0x30] sm:$0xf]
  %v85 = vld [vmem:[%s1 + $0x34] sm:$0xf]
  %v86 = vld [vmem:[%s1 + $0x38] sm:$0xf]
  %v87 = vld [vmem:[%s1 + $0x3c] sm:$0xf]
  %v88 = vld [vmem:[%s1 + $0x40] sm:$0xf]
  %v89 = vld [vmem:[%s1 + $0x44] sm:$0xf]
  %v90 = vld [vmem:[%s2] sm:$0x1]
  %v92 = vperm.slane %v90, 0
  %v151 = vunpack.c.l.b16 %v15
  %v152 = vunpack.c.h.b16 %v15
  %v153 = vunpack.c.l.b16 %v16
  %v154 = vunpack.c.h.b16 %v16
  %v155 = vunpack.c.l.b16 %v17
  %v156 = vunpack.c.h.b16 %v17
  %v157 = vunpack.c.l.b16 %v18
  %v158 = vunpack.c.h.b16 %v18
  %v159 = vunpack.c.l.b16 %v19
  %v160 = vunpack.c.h.b16 %v19
  %v161 = vunpack.c.l.b16 %v20
  %v162 = vunpack.c.h.b16 %v20
  %v163 = vunpack.c.l.b16 %v21
  %v164 = vunpack.c.h.b16 %v21
  %v165 = vunpack.c.l.b16 %v22
  %v166 = vunpack.c.h.b16 %v22
  %v167 = vunpack.c.l.b16 %v23
  %v168 = vunpack.c.h.b16 %v23
  %v169 = vunpack.c.l.b16 %v24
  %v170 = vunpack.c.h.b16 %v24
  %v171 = vunpack.c.l.b16 %v25
  %v172 = vunpack.c.h.b16 %v25
  %v173 = vunpack.c.l.b16 %v26
  %v174 = vunpack.c.h.b16 %v26
  %v175 = vunpack.c.l.b16 %v27
  %v176 = vunpack.c.h.b16 %v27
  %v177 = vunpack.c.l.b16 %v28
  %v178 = vunpack.c.h.b16 %v28
  %v179 = vunpack.c.l.b16 %v29
  %v180 = vunpack.c.h.b16 %v29
  %v181 = vunpack.c.l.b16 %v30
  %v182 = vunpack.c.h.b16 %v30
  %v183 = vunpack.c.l.b16 %v31
  %v184 = vunpack.c.h.b16 %v31
  %v185 = vunpack.c.l.b16 %v32
  %v186 = vunpack.c.h.b16 %v32
  %v187 = vunpack.c.l.b16 %v33
  %v188 = vunpack.c.h.b16 %v33
  %v189 = vunpack.c.l.b16 %v34
  %v190 = vunpack.c.h.b16 %v34
  %v191 = vunpack.c.l.b16 %v35
  %v192 = vunpack.c.h.b16 %v35
  %v193 = vunpack.c.l.b16 %v36
  %v194 = vunpack.c.h.b16 %v36
  %v195 = vunpack.c.l.b16 %v37
  %v196 = vunpack.c.h.b16 %v37
  %v197 = vunpack.c.l.b16 %v38
  %v198 = vunpack.c.h.b16 %v38
  %v199 = vunpack.c.l.b16 %v39
  %v200 = vunpack.c.h.b16 %v39
  %v201 = vunpack.c.l.b16 %v40
  %v202 = vunpack.c.h.b16 %v40
  %v203 = vunpack.c.l.b16 %v41
  %v204 = vunpack.c.h.b16 %v41
  %v205 = vunpack.c.l.b16 %v42
  %v206 = vunpack.c.h.b16 %v42
  %v207 = vunpack.c.l.b16 %v43
  %v208 = vunpack.c.h.b16 %v43
  %v209 = vunpack.c.l.b16 %v44
  %v210 = vunpack.c.h.b16 %v44
  %v211 = vunpack.c.l.b16 %v45
  %v212 = vunpack.c.h.b16 %v45
  %v213 = vunpack.c.l.b16 %v46
  %v214 = vunpack.c.h.b16 %v46
  %v215 = vunpack.c.l.b16 %v47
  %v216 = vunpack.c.h.b16 %v47
  %v217 = vunpack.c.l.b16 %v48
  %v218 = vunpack.c.h.b16 %v48
  %v219 = vunpack.c.l.b16 %v49
  %v220 = vunpack.c.h.b16 %v49
  %v221 = vunpack.c.l.b16 %v50
  %v222 = vunpack.c.h.b16 %v50
  %v223 = vunpack.c.l.b16 %v51
  %v224 = vunpack.c.h.b16 %v51
  %v225 = vunpack.c.l.b16 %v52
  %v226 = vunpack.c.h.b16 %v52
  %v227 = vunpack.c.l.b16 %v53
  %v228 = vunpack.c.h.b16 %v53
  %v229 = vunpack.c.l.b16 %v54
  %v230 = vunpack.c.h.b16 %v54
  %v231 = vunpack.c.l.b16 %v55
  %v232 = vunpack.c.h.b16 %v55
  %v233 = vunpack.c.l.b16 %v56
  %v234 = vunpack.c.h.b16 %v56
  %v235 = vunpack.c.l.b16 %v57
  %v236 = vunpack.c.h.b16 %v57
  %v237 = vunpack.c.l.b16 %v58
  %v238 = vunpack.c.h.b16 %v58
  %v239 = vunpack.c.l.b16 %v59
  %v240 = vunpack.c.h.b16 %v59
  %v241 = vunpack.c.l.b16 %v60
  %v242 = vunpack.c.h.b16 %v60
  %v243 = vunpack.c.l.b16 %v61
  %v244 = vunpack.c.h.b16 %v61
  %v245 = vunpack.c.l.b16 %v62
  %v246 = vunpack.c.h.b16 %v62
  %v247 = vunpack.c.l.b16 %v63
  %v248 = vunpack.c.h.b16 %v63
  %v249 = vunpack.c.l.b16 %v64
  %v250 = vunpack.c.h.b16 %v64
  %v251 = vunpack.c.l.b16 %v65
  %v252 = vunpack.c.h.b16 %v65
  %v253 = vunpack.c.l.b16 %v66
  %v254 = vunpack.c.h.b16 %v66
  %v255 = vunpack.c.l.b16 %v67
  %v256 = vunpack.c.h.b16 %v67
  %v257 = vunpack.c.l.b16 %v68
  %v258 = vunpack.c.h.b16 %v68
  %v259 = vunpack.c.l.b16 %v69
  %v260 = vunpack.c.h.b16 %v69
  %v261 = vunpack.c.l.b16 %v70
  %v262 = vunpack.c.h.b16 %v70
  %v263 = vunpack.c.l.b16 %v71
  %v264 = vunpack.c.h.b16 %v71
  %v265 = vpack.c.b16 %v153, %v151
  %v266 = vpack.c.b16 %v154, %v152
  %v267 = vpack.c.b16 %v157, %v155
  %v268 = vpack.c.b16 %v158, %v156
  %v269 = vpack.c.b16 %v161, %v159
  %v270 = vpack.c.b16 %v162, %v160
  %v271 = vpack.c.b16 %v165, %v163
  %v272 = vpack.c.b16 %v166, %v164
  %v273 = vpack.c.b16 %v169, %v167
  %v274 = vpack.c.b16 %v170, %v168
  %v275 = vpack.c.b16 %v173, %v171
  %v276 = vpack.c.b16 %v174, %v172
  %v277 = vpack.c.b16 %v177, %v175
  %v278 = vpack.c.b16 %v178, %v176
  %v279 = vpack.c.b16 %v181, %v179
  %v280 = vpack.c.b16 %v182, %v180
  %v281 = vpack.c.b16 %v185, %v183
  %v282 = vpack.c.b16 %v186, %v184
  %v283 = vpack.c.b16 %v189, %v187
  %v284 = vpack.c.b16 %v190, %v188
  %v285 = vpack.c.b16 %v193, %v191
  %v286 = vpack.c.b16 %v194, %v192
  %v287 = vpack.c.b16 %v197, %v195
  %v288 = vpack.c.b16 %v198, %v196
  %v289 = vpack.c.b16 %v201, %v199
  %v290 = vpack.c.b16 %v202, %v200
  %v291 = vpack.c.b16 %v205, %v203
  %v292 = vpack.c.b16 %v206, %v204
  %v293 = vpack.c.b16 %v209, %v207
  %v294 = vpack.c.b16 %v210, %v208
  %v295 = vpack.c.b16 %v213, %v211
  %v296 = vpack.c.b16 %v214, %v212
  %v297 = vpack.c.b16 %v217, %v215
  %v298 = vpack.c.b16 %v218, %v216
  %v299 = vpack.c.b16 %v221, %v219
  %v300 = vpack.c.b16 %v222, %v220
  %v301 = vpack.c.b16 %v225, %v223
  %v302 = vpack.c.b16 %v226, %v224
  %v303 = vpack.c.b16 %v229, %v227
  %v304 = vpack.c.b16 %v230, %v228
  %v305 = vpack.c.b16 %v233, %v231
  %v306 = vpack.c.b16 %v234, %v232
  %v307 = vpack.c.b16 %v237, %v235
  %v308 = vpack.c.b16 %v238, %v236
  %v309 = vpack.c.b16 %v241, %v239
  %v310 = vpack.c.b16 %v242, %v240
  %v311 = vpack.c.b16 %v245, %v243
  %v312 = vpack.c.b16 %v246, %v244
  %v313 = vpack.c.b16 %v249, %v247
  %v314 = vpack.c.b16 %v250, %v248
  %v315 = vpack.c.b16 %v253, %v251
  %v316 = vpack.c.b16 %v254, %v252
  %v317 = vpack.c.b16 %v257, %v255
  %v318 = vpack.c.b16 %v258, %v256
  %v319 = vpack.c.b16 %v261, %v259
  %v320 = vpack.c.b16 %v262, %v260
  %v321 = vpack.c.b16 %v263, %v263
  %v322 = vpack.c.b16 %v264, %v264
  %v370 = vunpack.c.l.b16 %v72
  %v371 = vunpack.c.l.b16 %v73
  %v372 = vunpack.c.l.b16 %v74
  %v373 = vunpack.c.l.b16 %v75
  %v374 = vunpack.c.l.b16 %v76
  %v375 = vunpack.c.l.b16 %v77
  %v376 = vunpack.c.l.b16 %v78
  %v377 = vunpack.c.l.b16 %v79
  %v378 = vunpack.c.l.b16 %v80
  %v379 = vunpack.c.l.b16 %v81
  %v380 = vunpack.c.l.b16 %v82
  %v381 = vunpack.c.l.b16 %v83
  %v382 = vunpack.c.l.b16 %v84
  %v383 = vunpack.c.l.b16 %v85
  %v384 = vunpack.c.l.b16 %v86
  %v385 = vunpack.c.l.b16 %v87
  %v386 = vunpack.c.l.b16 %v88
  %v387 = vunpack.c.l.b16 %v89
  %v388 = vpack.c.b16 %v371, %v370
  %v389 = vpack.c.b16 %v373, %v372
  %v390 = vpack.c.b16 %v375, %v374
  %v391 = vpack.c.b16 %v377, %v376
  %v392 = vpack.c.b16 %v379, %v378
  %v393 = vpack.c.b16 %v381, %v380
  %v394 = vpack.c.b16 %v383, %v382
  %v395 = vpack.c.b16 %v385, %v384
  %v396 = vpack.c.b16 %v387, %v386
  %vm406 = vcmask 130048
  %v408 = vsel %vm406, %v266, 0
  %v411 = vsel %vm406, %v268, 0
  %v414 = vsel %vm406, %v270, 0
  %v417 = vsel %vm406, %v272, 0
  %v420 = vsel %vm406, %v274, 0
  %v423 = vsel %vm406, %v276, 0
  %v426 = vsel %vm406, %v278, 0
  %v429 = vsel %vm406, %v280, 0
  %v432 = vsel %vm406, %v282, 0
  %v435 = vsel %vm406, %v284, 0
  %v438 = vsel %vm406, %v286, 0
  %v441 = vsel %vm406, %v288, 0
  %v444 = vsel %vm406, %v290, 0
  %v447 = vsel %vm406, %v292, 0
  %v450 = vsel %vm406, %v294, 0
  %v453 = vsel %vm406, %v296, 0
  %v456 = vsel %vm406, %v298, 0
  %v459 = vsel %vm406, %v300, 0
  %v462 = vsel %vm406, %v302, 0
  %v465 = vsel %vm406, %v304, 0
  %v468 = vsel %vm406, %v306, 0
  %v471 = vsel %vm406, %v308, 0
  %v474 = vsel %vm406, %v310, 0
  %v477 = vsel %vm406, %v312, 0
  %v480 = vsel %vm406, %v314, 0
  %v483 = vsel %vm406, %v316, 0
  %v486 = vsel %vm406, %v318, 0
  %v489 = vsel %vm406, %v320, 0
  %v492 = vsel %vm406, %v322, 0
  %494 = vmatpush.bf16.msra.mxu0 %v395
  %495 = vmatpush.bf16.msra.mxu0 %v394
  %496 = vmatpush.bf16.msra.mxu0 %v393
  %497 = vmatpush.bf16.msra.mxu0 %v392
  %498 = vmatpush.bf16.msra.mxu0 %v391
  %499 = vmatpush.bf16.msra.mxu0 %v390
  %500 = vmatpush.bf16.msra.mxu0 %v389
  %501 = vmatpush.bf16.msra.mxu0 %v388
  %502 = vmatmul.bf16.gmra.mxu0 %v265
  %v503 = vpop.f32.mrf.mxu0
  %v504 = vadd.f32 %v92, %v503
  %v505 = vpop.f32.mrf.mxu0
  %v506 = vadd.f32 %v92, %v505
  %507 = vmatmul.bf16.gmra.mxu0 %v267
  %v508 = vpop.f32.mrf.mxu0
  %v509 = vadd.f32 %v92, %v508
  %v510 = vpop.f32.mrf.mxu0
  %v511 = vadd.f32 %v92, %v510
  %512 = vmatmul.bf16.gmra.mxu0 %v269
  %v513 = vpop.f32.mrf.mxu0
  %v514 = vadd.f32 %v92, %v513
  %v515 = vpop.f32.mrf.mxu0
  %v516 = vadd.f32 %v92, %v515
  %517 = vmatmul.bf16.gmra.mxu0 %v271
  %v518 = vpop.f32.mrf.mxu0
  %v519 = vadd.f32 %v92, %v518
  %v520 = vpop.f32.mrf.mxu0
  %v521 = vadd.f32 %v92, %v520
  %522 = vmatmul.bf16.gmra.mxu0 %v273
  %v523 = vpop.f32.mrf.mxu0
  %v524 = vadd.f32 %v92, %v523
  %v525 = vpop.f32.mrf.mxu0
  %v526 = vadd.f32 %v92, %v525
  %527 = vmatmul.bf16.gmra.mxu0 %v275
  %v528 = vpop.f32.mrf.mxu0
  %v529 = vadd.f32 %v92, %v528
  %v530 = vpop.f32.mrf.mxu0
  %v531 = vadd.f32 %v92, %v530
  %532 = vmatmul.bf16.gmra.mxu0 %v277
  %v533 = vpop.f32.mrf.mxu0
  %v534 = vadd.f32 %v92, %v533
  %v535 = vpop.f32.mrf.mxu0
  %v536 = vadd.f32 %v92, %v535
  %537 = vmatmul.bf16.gmra.mxu0 %v279
  %v538 = vpop.f32.mrf.mxu0
  %v539 = vadd.f32 %v92, %v538
  %v540 = vpop.f32.mrf.mxu0
  %v541 = vadd.f32 %v92, %v540
  %542 = vmatmul.bf16.gmra.mxu0 %v281
  %v543 = vpop.f32.mrf.mxu0
  %v544 = vadd.f32 %v92, %v543
  %v545 = vpop.f32.mrf.mxu0
  %v546 = vadd.f32 %v92, %v545
  %547 = vmatmul.bf16.gmra.mxu0 %v283
  %v548 = vpop.f32.mrf.mxu0
  %v549 = vadd.f32 %v92, %v548
  %v550 = vpop.f32.mrf.mxu0
  %v551 = vadd.f32 %v92, %v550
  %552 = vmatmul.bf16.gmra.mxu0 %v285
  %v553 = vpop.f32.mrf.mxu0
  %v554 = vadd.f32 %v92, %v553
  %v555 = vpop.f32.mrf.mxu0
  %v556 = vadd.f32 %v92, %v555
  %557 = vmatmul.bf16.gmra.mxu0 %v287
  %v558 = vpop.f32.mrf.mxu0
  %v559 = vadd.f32 %v92, %v558
  %v560 = vpop.f32.mrf.mxu0
  %v561 = vadd.f32 %v92, %v560
  %562 = vmatmul.bf16.gmra.mxu0 %v289
  %v563 = vpop.f32.mrf.mxu0
  %v564 = vadd.f32 %v92, %v563
  %v565 = vpop.f32.mrf.mxu0
  %v566 = vadd.f32 %v92, %v565
  %567 = vmatmul.bf16.gmra.mxu0 %v291
  %v568 = vpop.f32.mrf.mxu0
  %v569 = vadd.f32 %v92, %v568
  %v570 = vpop.f32.mrf.mxu0
  %v571 = vadd.f32 %v92, %v570
  %572 = vmatmul.bf16.gmra.mxu0 %v293
  %v573 = vpop.f32.mrf.mxu0
  %v574 = vadd.f32 %v92, %v573
  %v575 = vpop.f32.mrf.mxu0
  %v576 = vadd.f32 %v92, %v575
  %577 = vmatmul.bf16.gmra.mxu0 %v295
  %v578 = vpop.f32.mrf.mxu0
  %v579 = vadd.f32 %v92, %v578
  %v580 = vpop.f32.mrf.mxu0
  %v581 = vadd.f32 %v92, %v580
  %582 = vmatmul.bf16.gmra.mxu0 %v297
  %v583 = vpop.f32.mrf.mxu0
  %v584 = vadd.f32 %v92, %v583
  %v585 = vpop.f32.mrf.mxu0
  %v586 = vadd.f32 %v92, %v585
  %587 = vmatmul.bf16.gmra.mxu0 %v299
  %v588 = vpop.f32.mrf.mxu0
  %v589 = vadd.f32 %v92, %v588
  %v590 = vpop.f32.mrf.mxu0
  %v591 = vadd.f32 %v92, %v590
  %592 = vmatmul.bf16.gmra.mxu0 %v301
  %v593 = vpop.f32.mrf.mxu0
  %v594 = vadd.f32 %v92, %v593
  %v595 = vpop.f32.mrf.mxu0
  %v596 = vadd.f32 %v92, %v595
  %597 = vmatmul.bf16.gmra.mxu0 %v303
  %v598 = vpop.f32.mrf.mxu0
  %v599 = vadd.f32 %v92, %v598
  %v600 = vpop.f32.mrf.mxu0
  %v601 = vadd.f32 %v92, %v600
  %602 = vmatmul.bf16.gmra.mxu0 %v305
  %v603 = vpop.f32.mrf.mxu0
  %v604 = vadd.f32 %v92, %v603
  %v605 = vpop.f32.mrf.mxu0
  %v606 = vadd.f32 %v92, %v605
  %607 = vmatmul.bf16.gmra.mxu0 %v307
  %v608 = vpop.f32.mrf.mxu0
  %v609 = vadd.f32 %v92, %v608
  %v610 = vpop.f32.mrf.mxu0
  %v611 = vadd.f32 %v92, %v610
  %612 = vmatmul.bf16.gmra.mxu0 %v309
  %v613 = vpop.f32.mrf.mxu0
  %v614 = vadd.f32 %v92, %v613
  %v615 = vpop.f32.mrf.mxu0
  %v616 = vadd.f32 %v92, %v615
  %617 = vmatmul.bf16.gmra.mxu0 %v311
  %v618 = vpop.f32.mrf.mxu0
  %v619 = vadd.f32 %v92, %v618
  %v620 = vpop.f32.mrf.mxu0
  %v621 = vadd.f32 %v92, %v620
  %622 = vmatmul.bf16.gmra.mxu0 %v313
  %v623 = vpop.f32.mrf.mxu0
  %v624 = vadd.f32 %v92, %v623
  %v625 = vpop.f32.mrf.mxu0
  %v626 = vadd.f32 %v92, %v625
  %627 = vmatmul.bf16.gmra.mxu0 %v315
  %v628 = vpop.f32.mrf.mxu0
  %v629 = vadd.f32 %v92, %v628
  %v630 = vpop.f32.mrf.mxu0
  %v631 = vadd.f32 %v92, %v630
  %632 = vmatmul.bf16.gmra.mxu0 %v317
  %v633 = vpop.f32.mrf.mxu0
  %v634 = vadd.f32 %v92, %v633
  %v635 = vpop.f32.mrf.mxu0
  %v636 = vadd.f32 %v92, %v635
  %637 = vmatmul.bf16.gmra.mxu0 %v319
  %v638 = vpop.f32.mrf.mxu0
  %v639 = vadd.f32 %v92, %v638
  %v640 = vpop.f32.mrf.mxu0
  %v641 = vadd.f32 %v92, %v640
  %642 = vmatmul.bf16.gmra.mxu0 %v321
  %v643 = vpop.f32.mrf.mxu0
  %v644 = vadd.f32 %v92, %v643
  %v645 = vpop.f32.mrf.mxu0
  %646 = vdwg.mxu0
  %647 = vmatpush.bf16.msra.mxu0 0
  %648 = vmatpush.bf16.msra.mxu0 0
  %649 = vmatpush.bf16.msra.mxu0 0
  %650 = vmatpush.bf16.msra.mxu0 0
  %651 = vmatpush.bf16.msra.mxu0 0
  %652 = vmatpush.bf16.msra.mxu0 0
  %653 = vmatpush.bf16.msra.mxu0 0
  %654 = vmatpush.bf16.msra.mxu0 %v396
  %655 = vmatmul.bf16.gmra.mxu0 %v408
  %v656 = vpop.f32.mrf.mxu0
  %v657 = vadd.f32 %v504, %v656
  %v658 = vpop.f32.mrf.mxu0
  %v659 = vadd.f32 %v506, %v658
  %660 = vmatmul.bf16.gmra.mxu0 %v411
  %v661 = vpop.f32.mrf.mxu0
  %v662 = vadd.f32 %v509, %v661
  %v663 = vpop.f32.mrf.mxu0
  %v664 = vadd.f32 %v511, %v663
  %665 = vmatmul.bf16.gmra.mxu0 %v414
  %v666 = vpop.f32.mrf.mxu0
  %v667 = vadd.f32 %v514, %v666
  %v668 = vpop.f32.mrf.mxu0
  %v669 = vadd.f32 %v516, %v668
  %670 = vmatmul.bf16.gmra.mxu0 %v417
  %v671 = vpop.f32.mrf.mxu0
  %v672 = vadd.f32 %v519, %v671
  %v673 = vpop.f32.mrf.mxu0
  %v674 = vadd.f32 %v521, %v673
  %675 = vmatmul.bf16.gmra.mxu0 %v420
  %v676 = vpop.f32.mrf.mxu0
  %v677 = vadd.f32 %v524, %v676
  %v678 = vpop.f32.mrf.mxu0
  %v679 = vadd.f32 %v526, %v678
  %680 = vmatmul.bf16.gmra.mxu0 %v423
  %v681 = vpop.f32.mrf.mxu0
  %v682 = vadd.f32 %v529, %v681
  %v683 = vpop.f32.mrf.mxu0
  %v684 = vadd.f32 %v531, %v683
  %685 = vmatmul.bf16.gmra.mxu0 %v426
  %v686 = vpop.f32.mrf.mxu0
  %v687 = vadd.f32 %v534, %v686
  %v688 = vpop.f32.mrf.mxu0
  %v689 = vadd.f32 %v536, %v688
  %690 = vmatmul.bf16.gmra.mxu0 %v429
  %v691 = vpop.f32.mrf.mxu0
  %v692 = vadd.f32 %v539, %v691
  %v693 = vpop.f32.mrf.mxu0
  %v694 = vadd.f32 %v541, %v693
  %695 = vmatmul.bf16.gmra.mxu0 %v432
  %v696 = vpop.f32.mrf.mxu0
  %v697 = vadd.f32 %v544, %v696
  %v698 = vpop.f32.mrf.mxu0
  %v699 = vadd.f32 %v546, %v698
  %700 = vmatmul.bf16.gmra.mxu0 %v435
  %v701 = vpop.f32.mrf.mxu0
  %v702 = vadd.f32 %v549, %v701
  %v703 = vpop.f32.mrf.mxu0
  %v704 = vadd.f32 %v551, %v703
  %705 = vmatmul.bf16.gmra.mxu0 %v438
  %v706 = vpop.f32.mrf.mxu0
  %v707 = vadd.f32 %v554, %v706
  %v708 = vpop.f32.mrf.mxu0
  %v709 = vadd.f32 %v556, %v708
  %710 = vmatmul.bf16.gmra.mxu0 %v441
  %v711 = vpop.f32.mrf.mxu0
  %v712 = vadd.f32 %v559, %v711
  %v713 = vpop.f32.mrf.mxu0
  %v714 = vadd.f32 %v561, %v713
  %715 = vmatmul.bf16.gmra.mxu0 %v444
  %v716 = vpop.f32.mrf.mxu0
  %v717 = vadd.f32 %v564, %v716
  %v718 = vpop.f32.mrf.mxu0
  %v719 = vadd.f32 %v566, %v718
  %720 = vmatmul.bf16.gmra.mxu0 %v447
  %v721 = vpop.f32.mrf.mxu0
  %v722 = vadd.f32 %v569, %v721
  %v723 = vpop.f32.mrf.mxu0
  %v724 = vadd.f32 %v571, %v723
  %725 = vmatmul.bf16.gmra.mxu0 %v450
  %v726 = vpop.f32.mrf.mxu0
  %v727 = vadd.f32 %v574, %v726
  %v728 = vpop.f32.mrf.mxu0
  %v729 = vadd.f32 %v576, %v728
  %730 = vmatmul.bf16.gmra.mxu0 %v453
  %v731 = vpop.f32.mrf.mxu0
  %v732 = vadd.f32 %v579, %v731
  %v733 = vpop.f32.mrf.mxu0
  %v734 = vadd.f32 %v581, %v733
  %735 = vmatmul.bf16.gmra.mxu0 %v456
  %v736 = vpop.f32.mrf.mxu0
  %v737 = vadd.f32 %v584, %v736
  %v738 = vpop.f32.mrf.mxu0
  %v739 = vadd.f32 %v586, %v738
  %740 = vmatmul.bf16.gmra.mxu0 %v459
  %v741 = vpop.f32.mrf.mxu0
  %v742 = vadd.f32 %v589, %v741
  %v743 = vpop.f32.mrf.mxu0
  %v744 = vadd.f32 %v591, %v743
  %745 = vmatmul.bf16.gmra.mxu0 %v462
  %v746 = vpop.f32.mrf.mxu0
  %v747 = vadd.f32 %v594, %v746
  %v748 = vpop.f32.mrf.mxu0
  %v749 = vadd.f32 %v596, %v748
  %750 = vmatmul.bf16.gmra.mxu0 %v465
  %v751 = vpop.f32.mrf.mxu0
  %v752 = vadd.f32 %v599, %v751
  %v753 = vpop.f32.mrf.mxu0
  %v754 = vadd.f32 %v601, %v753
  %755 = vmatmul.bf16.gmra.mxu0 %v468
  %v756 = vpop.f32.mrf.mxu0
  %v757 = vadd.f32 %v604, %v756
  %v758 = vpop.f32.mrf.mxu0
  %v759 = vadd.f32 %v606, %v758
  %760 = vmatmul.bf16.gmra.mxu0 %v471
  %v761 = vpop.f32.mrf.mxu0
  %v762 = vadd.f32 %v609, %v761
  %v763 = vpop.f32.mrf.mxu0
  %v764 = vadd.f32 %v611, %v763
  %765 = vmatmul.bf16.gmra.mxu0 %v474
  %v766 = vpop.f32.mrf.mxu0
  %v767 = vadd.f32 %v614, %v766
  %v768 = vpop.f32.mrf.mxu0
  %v769 = vadd.f32 %v616, %v768
  %770 = vmatmul.bf16.gmra.mxu0 %v477
  %v771 = vpop.f32.mrf.mxu0
  %v772 = vadd.f32 %v619, %v771
  %v773 = vpop.f32.mrf.mxu0
  %v774 = vadd.f32 %v621, %v773
  %775 = vmatmul.bf16.gmra.mxu0 %v480
  %v776 = vpop.f32.mrf.mxu0
  %v777 = vadd.f32 %v624, %v776
  %v778 = vpop.f32.mrf.mxu0
  %v779 = vadd.f32 %v626, %v778
  %780 = vmatmul.bf16.gmra.mxu0 %v483
  %v781 = vpop.f32.mrf.mxu0
  %v782 = vadd.f32 %v629, %v781
  %v783 = vpop.f32.mrf.mxu0
  %v784 = vadd.f32 %v631, %v783
  %785 = vmatmul.bf16.gmra.mxu0 %v486
  %v786 = vpop.f32.mrf.mxu0
  %v787 = vadd.f32 %v634, %v786
  %v788 = vpop.f32.mrf.mxu0
  %v789 = vadd.f32 %v636, %v788
  %790 = vmatmul.bf16.gmra.mxu0 %v489
  %v791 = vpop.f32.mrf.mxu0
  %v792 = vadd.f32 %v639, %v791
  %v793 = vpop.f32.mrf.mxu0
  %v794 = vadd.f32 %v641, %v793
  %795 = vmatmul.bf16.gmra.mxu0 %v492
  %v796 = vpop.f32.mrf.mxu0
  %v797 = vadd.f32 %v644, %v796
  %v798 = vpop.f32.mrf.mxu0
  %799 = vdwg.mxu0
  %vm800 = vcmp.gt.f32.partialorder %v657, 0.0
  %vm801 = vcmp.gt.f32.partialorder %v659, 0.0
  %vm802 = vcmp.gt.f32.partialorder %v662, 0.0
  %vm803 = vcmp.gt.f32.partialorder %v664, 0.0
  %vm804 = vcmp.gt.f32.partialorder %v667, 0.0
  %vm805 = vcmp.gt.f32.partialorder %v669, 0.0
  %vm806 = vcmp.gt.f32.partialorder %v672, 0.0
  %vm807 = vcmp.gt.f32.partialorder %v674, 0.0
  %vm808 = vcmp.gt.f32.partialorder %v677, 0.0
  %vm809 = vcmp.gt.f32.partialorder %v679, 0.0
  %vm810 = vcmp.gt.f32.partialorder %v682, 0.0
  %vm811 = vcmp.gt.f32.partialorder %v684, 0.0
  %vm812 = vcmp.gt.f32.partialorder %v687, 0.0
  %vm813 = vcmp.gt.f32.partialorder %v689, 0.0
  %vm814 = vcmp.gt.f32.partialorder %v692, 0.0
  %vm815 = vcmp.gt.f32.partialorder %v694, 0.0
  %vm816 = vcmp.gt.f32.partialorder %v697, 0.0
  %vm817 = vcmp.gt.f32.partialorder %v699, 0.0
  %vm818 = vcmp.gt.f32.partialorder %v702, 0.0
  %vm819 = vcmp.gt.f32.partialorder %v704, 0.0
  %vm820 = vcmp.gt.f32.partialorder %v707, 0.0
  %vm821 = vcmp.gt.f32.partialorder %v709, 0.0
  %vm822 = vcmp.gt.f32.partialorder %v712, 0.0
  %vm823 = vcmp.gt.f32.partialorder %v714, 0.0
  %vm824 = vcmp.gt.f32.partialorder %v717, 0.0
  %vm825 = vcmp.gt.f32.partialorder %v719, 0.0
  %vm826 = vcmp.gt.f32.partialorder %v722, 0.0
  %vm827 = vcmp.gt.f32.partialorder %v724, 0.0
  %vm828 = vcmp.gt.f32.partialorder %v727, 0.0
  %vm829 = vcmp.gt.f32.partialorder %v729, 0.0
  %vm830 = vcmp.gt.f32.partialorder %v732, 0.0
  %vm831 = vcmp.gt.f32.partialorder %v734, 0.0
  %vm832 = vcmp.gt.f32.partialorder %v737, 0.0
  %vm833 = vcmp.gt.f32.partialorder %v739, 0.0
  %vm834 = vcmp.gt.f32.partialorder %v742, 0.0
  %vm835 = vcmp.gt.f32.partialorder %v744, 0.0
  %vm836 = vcmp.gt.f32.partialorder %v747, 0.0
  %vm837 = vcmp.gt.f32.partialorder %v749, 0.0
  %vm838 = vcmp.gt.f32.partialorder %v752, 0.0
  %vm839 = vcmp.gt.f32.partialorder %v754, 0.0
  %vm840 = vcmp.gt.f32.partialorder %v757, 0.0
  %vm841 = vcmp.gt.f32.partialorder %v759, 0.0
  %vm842 = vcmp.gt.f32.partialorder %v762, 0.0
  %vm843 = vcmp.gt.f32.partialorder %v764, 0.0
  %vm844 = vcmp.gt.f32.partialorder %v767, 0.0
  %vm845 = vcmp.gt.f32.partialorder %v769, 0.0
  %vm846 = vcmp.gt.f32.partialorder %v772, 0.0
  %vm847 = vcmp.gt.f32.partialorder %v774, 0.0
  %vm848 = vcmp.gt.f32.partialorder %v777, 0.0
  %vm849 = vcmp.gt.f32.partialorder %v779, 0.0
  %vm850 = vcmp.gt.f32.partialorder %v782, 0.0
  %vm851 = vcmp.gt.f32.partialorder %v784, 0.0
  %vm852 = vcmp.gt.f32.partialorder %v787, 0.0
  %vm853 = vcmp.gt.f32.partialorder %v789, 0.0
  %vm854 = vcmp.gt.f32.partialorder %v792, 0.0
  %vm855 = vcmp.gt.f32.partialorder %v794, 0.0
  %vm856 = vcmp.gt.f32.partialorder %v797, 0.0
  %v857 = vmul.f32 %v657, 0.01
  %v858 = vmul.f32 %v659, 0.01
  %v859 = vmul.f32 %v662, 0.01
  %v860 = vmul.f32 %v664, 0.01
  %v861 = vmul.f32 %v667, 0.01
  %v862 = vmul.f32 %v669, 0.01
  %v863 = vmul.f32 %v672, 0.01
  %v864 = vmul.f32 %v674, 0.01
  %v865 = vmul.f32 %v677, 0.01
  %v866 = vmul.f32 %v679, 0.01
  %v867 = vmul.f32 %v682, 0.01
  %v868 = vmul.f32 %v684, 0.01
  %v869 = vmul.f32 %v687, 0.01
  %v870 = vmul.f32 %v689, 0.01
  %v871 = vmul.f32 %v692, 0.01
  %v872 = vmul.f32 %v694, 0.01
  %v873 = vmul.f32 %v697, 0.01
  %v874 = vmul.f32 %v699, 0.01
  %v875 = vmul.f32 %v702, 0.01
  %v876 = vmul.f32 %v704, 0.01
  %v877 = vmul.f32 %v707, 0.01
  %v878 = vmul.f32 %v709, 0.01
  %v879 = vmul.f32 %v712, 0.01
  %v880 = vmul.f32 %v714, 0.01
  %v881 = vmul.f32 %v717, 0.01
  %v882 = vmul.f32 %v719, 0.01
  %v883 = vmul.f32 %v722, 0.01
  %v884 = vmul.f32 %v724, 0.01
  %v885 = vmul.f32 %v727, 0.01
  %v886 = vmul.f32 %v729, 0.01
  %v887 = vmul.f32 %v732, 0.01
  %v888 = vmul.f32 %v734, 0.01
  %v889 = vmul.f32 %v737, 0.01
  %v890 = vmul.f32 %v739, 0.01
  %v891 = vmul.f32 %v742, 0.01
  %v892 = vmul.f32 %v744, 0.01
  %v893 = vmul.f32 %v747, 0.01
  %v894 = vmul.f32 %v749, 0.01
  %v895 = vmul.f32 %v752, 0.01
  %v896 = vmul.f32 %v754, 0.01
  %v897 = vmul.f32 %v757, 0.01
  %v898 = vmul.f32 %v759, 0.01
  %v899 = vmul.f32 %v762, 0.01
  %v900 = vmul.f32 %v764, 0.01
  %v901 = vmul.f32 %v767, 0.01
  %v902 = vmul.f32 %v769, 0.01
  %v903 = vmul.f32 %v772, 0.01
  %v904 = vmul.f32 %v774, 0.01
  %v905 = vmul.f32 %v777, 0.01
  %v906 = vmul.f32 %v779, 0.01
  %v907 = vmul.f32 %v782, 0.01
  %v908 = vmul.f32 %v784, 0.01
  %v909 = vmul.f32 %v787, 0.01
  %v910 = vmul.f32 %v789, 0.01
  %v911 = vmul.f32 %v792, 0.01
  %v912 = vmul.f32 %v794, 0.01
  %v913 = vmul.f32 %v797, 0.01
  %v914 = vsel %vm800, %v657, %v857
  %v915 = vsel %vm801, %v659, %v858
  %v916 = vsel %vm802, %v662, %v859
  %v917 = vsel %vm803, %v664, %v860
  %v918 = vsel %vm804, %v667, %v861
  %v919 = vsel %vm805, %v669, %v862
  %v920 = vsel %vm806, %v672, %v863
  %v921 = vsel %vm807, %v674, %v864
  %v922 = vsel %vm808, %v677, %v865
  %v923 = vsel %vm809, %v679, %v866
  %v924 = vsel %vm810, %v682, %v867
  %v925 = vsel %vm811, %v684, %v868
  %v926 = vsel %vm812, %v687, %v869
  %v927 = vsel %vm813, %v689, %v870
  %v928 = vsel %vm814, %v692, %v871
  %v929 = vsel %vm815, %v694, %v872
  %v930 = vsel %vm816, %v697, %v873
  %v931 = vsel %vm817, %v699, %v874
  %v932 = vsel %vm818, %v702, %v875
  %v933 = vsel %vm819, %v704, %v876
  %v934 = vsel %vm820, %v707, %v877
  %v935 = vsel %vm821, %v709, %v878
  %v936 = vsel %vm822, %v712, %v879
  %v937 = vsel %vm823, %v714, %v880
  %v938 = vsel %vm824, %v717, %v881
  %v939 = vsel %vm825, %v719, %v882
  %v940 = vsel %vm826, %v722, %v883
  %v941 = vsel %vm827, %v724, %v884
  %v942 = vsel %vm828, %v727, %v885
  %v943 = vsel %vm829, %v729, %v886
  %v944 = vsel %vm830, %v732, %v887
  %v945 = vsel %vm831, %v734, %v888
  %v946 = vsel %vm832, %v737, %v889
  %v947 = vsel %vm833, %v739, %v890
  %v948 = vsel %vm834, %v742, %v891
  %v949 = vsel %vm835, %v744, %v892
  %v950 = vsel %vm836, %v747, %v893
  %v951 = vsel %vm837, %v749, %v894
  %v952 = vsel %vm838, %v752, %v895
  %v953 = vsel %vm839, %v754, %v896
  %v954 = vsel %vm840, %v757, %v897
  %v955 = vsel %vm841, %v759, %v898
  %v956 = vsel %vm842, %v762, %v899
  %v957 = vsel %vm843, %v764, %v900
  %v958 = vsel %vm844, %v767, %v901
  %v959 = vsel %vm845, %v769, %v902
  %v960 = vsel %vm846, %v772, %v903
  %v961 = vsel %vm847, %v774, %v904
  %v962 = vsel %vm848, %v777, %v905
  %v963 = vsel %vm849, %v779, %v906
  %v964 = vsel %vm850, %v782, %v907
  %v965 = vsel %vm851, %v784, %v908
  %v966 = vsel %vm852, %v787, %v909
  %v967 = vsel %vm853, %v789, %v910
  %v968 = vsel %vm854, %v792, %v911
  %v969 = vsel %vm855, %v794, %v912
  %v970 = vsel %vm856, %v797, %v913
  %v971 = vpack.c.bf16 %v914, %v914
  %v972 = vpack.c.bf16 %v915, %v915
  %v973 = vpack.c.bf16 %v916, %v916
  %v974 = vpack.c.bf16 %v917, %v917
  %v975 = vpack.c.bf16 %v918, %v918
  %v976 = vpack.c.bf16 %v919, %v919
  %v977 = vpack.c.bf16 %v920, %v920
  %v978 = vpack.c.bf16 %v921, %v921
  %v979 = vpack.c.bf16 %v922, %v922
  %v980 = vpack.c.bf16 %v923, %v923
  %v981 = vpack.c.bf16 %v924, %v924
  %v982 = vpack.c.bf16 %v925, %v925
  %v983 = vpack.c.bf16 %v926, %v926
  %v984 = vpack.c.bf16 %v927, %v927
  %v985 = vpack.c.bf16 %v928, %v928
  %v986 = vpack.c.bf16 %v929, %v929
  %v987 = vpack.c.bf16 %v930, %v930
  %v988 = vpack.c.bf16 %v931, %v931
  %v989 = vpack.c.bf16 %v932, %v932
  %v990 = vpack.c.bf16 %v933, %v933
  %v991 = vpack.c.bf16 %v934, %v934
  %v992 = vpack.c.bf16 %v935, %v935
  %v993 = vpack.c.bf16 %v936, %v936
  %v994 = vpack.c.bf16 %v937, %v937
  %v995 = vpack.c.bf16 %v938, %v938
  %v996 = vpack.c.bf16 %v939, %v939
  %v997 = vpack.c.bf16 %v940, %v940
  %v998 = vpack.c.bf16 %v941, %v941
  %v999 = vpack.c.bf16 %v942, %v942
  %v1000 = vpack.c.bf16 %v943, %v943
  %v1001 = vpack.c.bf16 %v944, %v944
  %v1002 = vpack.c.bf16 %v945, %v945
  %v1003 = vpack.c.bf16 %v946, %v946
  %v1004 = vpack.c.bf16 %v947, %v947
  %v1005 = vpack.c.bf16 %v948, %v948
  %v1006 = vpack.c.bf16 %v949, %v949
  %v1007 = vpack.c.bf16 %v950, %v950
  %v1008 = vpack.c.bf16 %v951, %v951
  %v1009 = vpack.c.bf16 %v952, %v952
  %v1010 = vpack.c.bf16 %v953, %v953
  %v1011 = vpack.c.bf16 %v954, %v954
  %v1012 = vpack.c.bf16 %v955, %v955
  %v1013 = vpack.c.bf16 %v956, %v956
  %v1014 = vpack.c.bf16 %v957, %v957
  %v1015 = vpack.c.bf16 %v958, %v958
  %v1016 = vpack.c.bf16 %v959, %v959
  %v1017 = vpack.c.bf16 %v960, %v960
  %v1018 = vpack.c.bf16 %v961, %v961
  %v1019 = vpack.c.bf16 %v962, %v962
  %v1020 = vpack.c.bf16 %v963, %v963
  %v1021 = vpack.c.bf16 %v964, %v964
  %v1022 = vpack.c.bf16 %v965, %v965
  %v1023 = vpack.c.bf16 %v966, %v966
  %v1024 = vpack.c.bf16 %v967, %v967
  %v1025 = vpack.c.bf16 %v968, %v968
  %v1026 = vpack.c.bf16 %v969, %v969
  %v1027 = vpack.c.bf16 %v970, %v970
  %vm1028 = vcmask 257024
  %1029 = vst.msk [vmem:[%s3] sm:$0xf] %vm1028, %v971
  %1030 = vst.msk [vmem:[%s3 + $0x4] sm:$0xf] %vm1028, %v972
  %1031 = vst.msk [vmem:[%s3 + $0x8] sm:$0xf] %vm1028, %v973
  %1032 = vst.msk [vmem:[%s3 + $0xc] sm:$0xf] %vm1028, %v974
  %1033 = vst.msk [vmem:[%s3 + $0x10] sm:$0xf] %vm1028, %v975
  %1034 = vst.msk [vmem:[%s3 + $0x14] sm:$0xf] %vm1028, %v976
  %1035 = vst.msk [vmem:[%s3 + $0x18] sm:$0xf] %vm1028, %v977
  %1036 = vst.msk [vmem:[%s3 + $0x1c] sm:$0xf] %vm1028, %v978
  %1037 = vst.msk [vmem:[%s3 + $0x20] sm:$0xf] %vm1028, %v979
  %1038 = vst.msk [vmem:[%s3 + $0x24] sm:$0xf] %vm1028, %v980
  %1039 = vst.msk [vmem:[%s3 + $0x28] sm:$0xf] %vm1028, %v981
  %1040 = vst.msk [vmem:[%s3 + $0x2c] sm:$0xf] %vm1028, %v982
  %1041 = vst.msk [vmem:[%s3 + $0x30] sm:$0xf] %vm1028, %v983
  %1042 = vst.msk [vmem:[%s3 + $0x34] sm:$0xf] %vm1028, %v984
  %1043 = vst.msk [vmem:[%s3 + $0x38] sm:$0xf] %vm1028, %v985
  %1044 = vst.msk [vmem:[%s3 + $0x3c] sm:$0xf] %vm1028, %v986
  %1045 = vst.msk [vmem:[%s3 + $0x40] sm:$0xf] %vm1028, %v987
  %1046 = vst.msk [vmem:[%s3 + $0x44] sm:$0xf] %vm1028, %v988
  %1047 = vst.msk [vmem:[%s3 + $0x48] sm:$0xf] %vm1028, %v989
  %1048 = vst.msk [vmem:[%s3 + $0x4c] sm:$0xf] %vm1028, %v990
  %1049 = vst.msk [vmem:[%s3 + $0x50] sm:$0xf] %vm1028, %v991
  %1050 = vst.msk [vmem:[%s3 + $0x54] sm:$0xf] %vm1028, %v992
  %1051 = vst.msk [vmem:[%s3 + $0x58] sm:$0xf] %vm1028, %v993
  %1052 = vst.msk [vmem:[%s3 + $0x5c] sm:$0xf] %vm1028, %v994
  %1053 = vst.msk [vmem:[%s3 + $0x60] sm:$0xf] %vm1028, %v995
  %1054 = vst.msk [vmem:[%s3 + $0x64] sm:$0xf] %vm1028, %v996
  %1055 = vst.msk [vmem:[%s3 + $0x68] sm:$0xf] %vm1028, %v997
  %1056 = vst.msk [vmem:[%s3 + $0x6c] sm:$0xf] %vm1028, %v998
  %1057 = vst.msk [vmem:[%s3 + $0x70] sm:$0xf] %vm1028, %v999
  %1058 = vst.msk [vmem:[%s3 + $0x74] sm:$0xf] %vm1028, %v1000
  %1059 = vst.msk [vmem:[%s3 + $0x78] sm:$0xf] %vm1028, %v1001
  %1060 = vst.msk [vmem:[%s3 + $0x7c] sm:$0xf] %vm1028, %v1002
  %1061 = vst.msk [vmem:[%s3 + $0x80] sm:$0xf] %vm1028, %v1003
  %1062 = vst.msk [vmem:[%s3 + $0x84] sm:$0xf] %vm1028, %v1004
  %1063 = vst.msk [vmem:[%s3 + $0x88] sm:$0xf] %vm1028, %v1005
  %1064 = vst.msk [vmem:[%s3 + $0x8c] sm:$0xf] %vm1028, %v1006
  %1065 = vst.msk [vmem:[%s3 + $0x90] sm:$0xf] %vm1028, %v1007
  %1066 = vst.msk [vmem:[%s3 + $0x94] sm:$0xf] %vm1028, %v1008
  %1067 = vst.msk [vmem:[%s3 + $0x98] sm:$0xf] %vm1028, %v1009
  %1068 = vst.msk [vmem:[%s3 + $0x9c] sm:$0xf] %vm1028, %v1010
  %1069 = vst.msk [vmem:[%s3 + $0xa0] sm:$0xf] %vm1028, %v1011
  %1070 = vst.msk [vmem:[%s3 + $0xa4] sm:$0xf] %vm1028, %v1012
  %1071 = vst.msk [vmem:[%s3 + $0xa8] sm:$0xf] %vm1028, %v1013
  %1072 = vst.msk [vmem:[%s3 + $0xac] sm:$0xf] %vm1028, %v1014
  %1073 = vst.msk [vmem:[%s3 + $0xb0] sm:$0xf] %vm1028, %v1015
  %1074 = vst.msk [vmem:[%s3 + $0xb4] sm:$0xf] %vm1028, %v1016
  %1075 = vst.msk [vmem:[%s3 + $0xb8] sm:$0xf] %vm1028, %v1017
  %1076 = vst.msk [vmem:[%s3 + $0xbc] sm:$0xf] %vm1028, %v1018
  %1077 = vst.msk [vmem:[%s3 + $0xc0] sm:$0xf] %vm1028, %v1019
  %1078 = vst.msk [vmem:[%s3 + $0xc4] sm:$0xf] %vm1028, %v1020
  %1079 = vst.msk [vmem:[%s3 + $0xc8] sm:$0xf] %vm1028, %v1021
  %1080 = vst.msk [vmem:[%s3 + $0xcc] sm:$0xf] %vm1028, %v1022
  %1081 = vst.msk [vmem:[%s3 + $0xd0] sm:$0xf] %vm1028, %v1023
  %1082 = vst.msk [vmem:[%s3 + $0xd4] sm:$0xf] %vm1028, %v1024
  %1083 = vst.msk [vmem:[%s3 + $0xd8] sm:$0xf] %vm1028, %v1025
  %1084 = vst.msk [vmem:[%s3 + $0xdc] sm:$0xf] %vm1028, %v1026
  %vm1085 = vcmask 253952
  %1086 = vst.msk [vmem:[%s3 + $0xe0] sm:$0x1] %vm1085, %v1027
  // Predicated region
  $region14: #{dqn_forward.6} parent=0 // pred_check
    _
  $region15: #{dqn_forward.6} parent=0 // pred_check_branch
    %1088 = sbr.rel (0) target = $region17
  $region16: #{dqn_forward.6} parent=0 // pred_region
    _
  $region17: #{dqn_forward.6} parent=0 // pred_fallthru
    _
  // Predicated region
  $region18: #{dqn_forward.6} parent=0 // pred_check
    _
  $region19: #{dqn_forward.6} parent=0 // pred_check_branch
    %1090 = sbr.rel (0) target = $region21
  $region20: #{dqn_forward.6} parent=0 // pred_region
    _
  $region21: #{dqn_forward.6} parent=0 // pred_fallthru
    _

// kernel: dqn_forward.7
$region0: #{dqn_forward.7}
  #allocation0 [shape = 'u32[]', space=smem, size = 0x4, offset = 0x4, fixed_abs, tag = 'smem constant byte address 0x4 - core index']
  #allocation1 [shape = 'u32[72,128]{1,0:T(1,128)}', space=vmem, size = 0x9000, scoped, tag = 'internal scratch']
  %s0 = inlined_call_operand.vmem [shape: bf16[98,288], index: 0, kind: input, shape index: {}]
  %s1 = inlined_call_operand.vmem [shape: bf16[288,32], index: 1, kind: input, shape index: {}]
  %s2 = inlined_call_operand.vmem [shape: f32[1,32], index: 2, kind: input, shape index: {}]
  %s3 = inlined_call_operand.vmem [shape: bf16[98,32], index: 3, kind: output, shape index: {}]
  %s4 = sld [smem:[#allocation0]]
  $region22: #{dqn_forward.7} parent=0
    _
  %s6 = ssub.s32 1, %s4
  %s7 = scalar_select 0, %s6, %s4
  // Predicated region
  $region2: #{dqn_forward.7} parent=0 // pred_check
    _
  $region3: #{dqn_forward.7} parent=0 // pred_check_branch
    %9 = sbr.rel (0) target = $region5
  $region4: #{dqn_forward.7} parent=0 // pred_region
    _
  $region5: #{dqn_forward.7} parent=0 // pred_fallthru
    _
  // Predicated region
  $region6: #{dqn_forward.7} parent=0 // pred_check
    _
  $region7: #{dqn_forward.7} parent=0 // pred_check_branch
    %11 = sbr.rel (0) target = $region9
  $region8: #{dqn_forward.7} parent=0 // pred_region
    _
  $region9: #{dqn_forward.7} parent=0 // pred_fallthru
    _
  // Predicated region
  $region10: #{dqn_forward.7} parent=0 // pred_check
    _
  $region11: #{dqn_forward.7} parent=0 // pred_check_branch
    %13 = sbr.rel (0) target = $region13
  $region12: #{dqn_forward.7} parent=0 // pred_region
    _
  $region13: #{dqn_forward.7} parent=0 // pred_fallthru
    _
  %v15 = vld [vmem:[%s0] sm:$0xff]
  %v16 = vld [vmem:[%s0 + $0x8] sm:$0xf]
  %v17 = vld [vmem:[%s0 + $0xc] sm:$0xff]
  %v18 = vld [vmem:[%s0 + $0x14] sm:$0xf]
  %v19 = vld [vmem:[%s0 + $0x18] sm:$0xff]
  %v20 = vld [vmem:[%s0 + $0x20] sm:$0xf]
  %v21 = vld [vmem:[%s0 + $0x24] sm:$0xff]
  %v22 = vld [vmem:[%s0 + $0x2c] sm:$0xf]
  %v23 = vld [vmem:[%s0 + $0x30] sm:$0xff]
  %v24 = vld [vmem:[%s0 + $0x38] sm:$0xf]
  %v25 = vld [vmem:[%s0 + $0x3c] sm:$0xff]
  %v26 = vld [vmem:[%s0 + $0x44] sm:$0xf]
  %v27 = vld [vmem:[%s0 + $0x48] sm:$0xff]
  %v28 = vld [vmem:[%s0 + $0x50] sm:$0xf]
  %v29 = vld [vmem:[%s0 + $0x54] sm:$0xff]
  %v30 = vld [vmem:[%s0 + $0x5c] sm:$0xf]
  %v31 = vld [vmem:[%s0 + $0x60] sm:$0xff]
  %v32 = vld [vmem:[%s0 + $0x68] sm:$0xf]
  %v33 = vld [vmem:[%s0 + $0x6c] sm:$0xff]
  %v34 = vld [vmem:[%s0 + $0x74] sm:$0xf]
  %v35 = vld [vmem:[%s0 + $0x78] sm:$0xff]
  %v36 = vld [vmem:[%s0 + $0x80] sm:$0xf]
  %v37 = vld [vmem:[%s0 + $0x84] sm:$0xff]
  %v38 = vld [vmem:[%s0 + $0x8c] sm:$0xf]
  %v39 = vld [vmem:[%s0 + $0x90] sm:$0x11]
  %v40 = vld [vmem:[%s0 + $0x98] sm:$0x1]
  %v41 = vld [vmem:[%s1] sm:$0xf]
  %v42 = vld [vmem:[%s1 + $0x4] sm:$0xf]
  %v43 = vld [vmem:[%s1 + $0x8] sm:$0xf]
  %v44 = vld [vmem:[%s1 + $0xc] sm:$0xf]
  %v45 = vld [vmem:[%s1 + $0x10] sm:$0xf]
  %v46 = vld [vmem:[%s1 + $0x14] sm:$0xf]
  %v47 = vld [vmem:[%s1 + $0x18] sm:$0xf]
  %v48 = vld [vmem:[%s1 + $0x1c] sm:$0xf]
  %v49 = vld [vmem:[%s1 + $0x20] sm:$0xf]
  %v50 = vld [vmem:[%s1 + $0x24] sm:$0xf]
  %v51 = vld [vmem:[%s1 + $0x28] sm:$0xf]
  %v52 = vld [vmem:[%s1 + $0x2c] sm:$0xf]
  %v53 = vld [vmem:[%s1 + $0x30] sm:$0xf]
  %v54 = vld [vmem:[%s1 + $0x34] sm:$0xf]
  %v55 = vld [vmem:[%s1 + $0x38] sm:$0xf]
  %v56 = vld [vmem:[%s1 + $0x3c] sm:$0xf]
  %v57 = vld [vmem:[%s1 + $0x40] sm:$0xf]
  %v58 = vld [vmem:[%s1 + $0x44] sm:$0xf]
  %v59 = vld [vmem:[%s1 + $0x48] sm:$0xf]
  %v60 = vld [vmem:[%s1 + $0x4c] sm:$0xf]
  %v61 = vld [vmem:[%s1 + $0x50] sm:$0xf]
  %v62 = vld [vmem:[%s1 + $0x54] sm:$0xf]
  %v63 = vld [vmem:[%s1 + $0x58] sm:$0xf]
  %v64 = vld [vmem:[%s1 + $0x5c] sm:$0xf]
  %v65 = vld [vmem:[%s1 + $0x60] sm:$0xf]
  %v66 = vld [vmem:[%s1 + $0x64] sm:$0xf]
  %v67 = vld [vmem:[%s1 + $0x68] sm:$0xf]
  %v68 = vld [vmem:[%s1 + $0x6c] sm:$0xf]
  %v69 = vld [vmem:[%s1 + $0x70] sm:$0xf]
  %v70 = vld [vmem:[%s1 + $0x74] sm:$0xf]
  %v71 = vld [vmem:[%s1 + $0x78] sm:$0xf]
  %v72 = vld [vmem:[%s1 + $0x7c] sm:$0xf]
  %v73 = vld [vmem:[%s1 + $0x80] sm:$0xf]
  %v74 = vld [vmem:[%s1 + $0x84] sm:$0xf]
  %v75 = vld [vmem:[%s1 + $0x88] sm:$0xf]
  %v76 = vld [vmem:[%s1 + $0x8c] sm:$0xf]
  %v77 = vld [vmem:[%s2] sm:$0x1]
  %v79 = vperm.slane %v77, 0
  %v107 = vunpack.c.l.b16 %v15
  %v108 = vunpack.c.h.b16 %v15
  %v109 = vunpack.c.l.b16 %v16
  %v110 = vunpack.c.l.b16 %v17
  %v111 = vunpack.c.h.b16 %v17
  %v112 = vunpack.c.l.b16 %v18
  %v113 = vunpack.c.l.b16 %v19
  %v114 = vunpack.c.h.b16 %v19
  %v115 = vunpack.c.l.b16 %v20
  %v116 = vunpack.c.l.b16 %v21
  %v117 = vunpack.c.h.b16 %v21
  %v118 = vunpack.c.l.b16 %v22
  %v119 = vunpack.c.l.b16 %v23
  %v120 = vunpack.c.h.b16 %v23
  %v121 = vunpack.c.l.b16 %v24
  %v122 = vunpack.c.l.b16 %v25
  %v123 = vunpack.c.h.b16 %v25
  %v124 = vunpack.c.l.b16 %v26
  %v125 = vunpack.c.l.b16 %v27
  %v126 = vunpack.c.h.b16 %v27
  %v127 = vunpack.c.l.b16 %v28
  %v128 = vunpack.c.l.b16 %v29
  %v129 = vunpack.c.h.b16 %v29
  %v130 = vunpack.c.l.b16 %v30
  %v131 = vunpack.c.l.b16 %v31
  %v132 = vunpack.c.h.b16 %v31
  %v133 = vunpack.c.l.b16 %v32
  %v134 = vunpack.c.l.b16 %v33
  %v135 = vunpack.c.h.b16 %v33
  %v136 = vunpack.c.l.b16 %v34
  %v137 = vunpack.c.l.b16 %v35
  %v138 = vunpack.c.h.b16 %v35
  %v139 = vunpack.c.l.b16 %v36
  %v140 = vunpack.c.l.b16 %v37
  %v141 = vunpack.c.h.b16 %v37
  %v142 = vunpack.c.l.b16 %v38
  %v143 = vunpack.c.l.b16 %v39
  %v144 = vunpack.c.h.b16 %v39
  %v145 = vunpack.c.l.b16 %v40
  %v146 = vpack.c.b16 %v110, %v107
  %v147 = vpack.c.b16 %v111, %v108
  %v148 = vpack.c.b16 %v112, %v109
  %v149 = vpack.c.b16 %v116, %v113
  %v150 = vpack.c.b16 %v117, %v114
  %v151 = vpack.c.b16 %v118, %v115
  %v152 = vpack.c.b16 %v122, %v119
  %v153 = vpack.c.b16 %v123, %v120
  %v154 = vpack.c.b16 %v124, %v121
  %v155 = vpack.c.b16 %v128, %v125
  %v156 = vpack.c.b16 %v129, %v126
  %v157 = vpack.c.b16 %v130, %v127
  %v158 = vpack.c.b16 %v134, %v131
  %v159 = vpack.c.b16 %v135, %v132
  %v160 = vpack.c.b16 %v136, %v133
  %v161 = vpack.c.b16 %v140, %v137
  %v162 = vpack.c.b16 %v141, %v138
  %v163 = vpack.c.b16 %v142, %v139
  %v164 = vpack.c.b16 %v143, %v143
  %v165 = vpack.c.b16 %v144, %v144
  %v166 = vpack.c.b16 %v145, %v145
  %v217 = vunpack.c.l.b16 %v41
  %v218 = vunpack.c.l.b16 %v42
  %v219 = vunpack.c.l.b16 %v43
  %v220 = vunpack.c.l.b16 %v44
  %v221 = vunpack.c.l.b16 %v45
  %v222 = vunpack.c.l.b16 %v46
  %v223 = vunpack.c.l.b16 %v47
  %v224 = vunpack.c.l.b16 %v48
  %v225 = vunpack.c.l.b16 %v49
  %v226 = vunpack.c.l.b16 %v50
  %v227 = vunpack.c.l.b16 %v51
  %v228 = vunpack.c.l.b16 %v52
  %v229 = vunpack.c.l.b16 %v53
  %v230 = vunpack.c.l.b16 %v54
  %v231 = vunpack.c.l.b16 %v55
  %v232 = vunpack.c.l.b16 %v56
  %v233 = vunpack.c.l.b16 %v57
  %v234 = vunpack.c.l.b16 %v58
  %v235 = vunpack.c.l.b16 %v59
  %v236 = vunpack.c.l.b16 %v60
  %v237 = vunpack.c.l.b16 %v61
  %v238 = vunpack.c.l.b16 %v62
  %v239 = vunpack.c.l.b16 %v63
  %v240 = vunpack.c.l.b16 %v64
  %v241 = vunpack.c.l.b16 %v65
  %v242 = vunpack.c.l.b16 %v66
  %v243 = vunpack.c.l.b16 %v67
  %v244 = vunpack.c.l.b16 %v68
  %v245 = vunpack.c.l.b16 %v69
  %v246 = vunpack.c.l.b16 %v70
  %v247 = vunpack.c.l.b16 %v71
  %v248 = vunpack.c.l.b16 %v72
  %v249 = vunpack.c.l.b16 %v73
  %v250 = vunpack.c.l.b16 %v74
  %v251 = vunpack.c.l.b16 %v75
  %v252 = vunpack.c.l.b16 %v76
  %v253 = vpack.c.b16 %v218, %v217
  %v254 = vpack.c.b16 %v220, %v219
  %v255 = vpack.c.b16 %v222, %v221
  %v256 = vpack.c.b16 %v224, %v223
  %v257 = vpack.c.b16 %v226, %v225
  %v258 = vpack.c.b16 %v228, %v227
  %v259 = vpack.c.b16 %v230, %v229
  %v260 = vpack.c.b16 %v232, %v231
  %v261 = vpack.c.b16 %v234, %v233
  %v262 = vpack.c.b16 %v236, %v235
  %v263 = vpack.c.b16 %v238, %v237
  %v264 = vpack.c.b16 %v240, %v239
  %v265 = vpack.c.b16 %v242, %v241
  %v266 = vpack.c.b16 %v244, %v243
  %v267 = vpack.c.b16 %v246, %v245
  %v268 = vpack.c.b16 %v248, %v247
  %v269 = vpack.c.b16 %v250, %v249
  %v270 = vpack.c.b16 %v252, %v251
  %vm289 = vcmask 261120
  %v291 = vsel %vm289, %v148, 0
  %v294 = vsel %vm289, %v151, 0
  %v297 = vsel %vm289, %v154, 0
  %v300 = vsel %vm289, %v157, 0
  %v303 = vsel %vm289, %v160, 0
  %v306 = vsel %vm289, %v163, 0
  %v309 = vsel %vm289, %v166, 0
  %311 = vmatpush.bf16.msra.mxu0 %v260
  %312 = vmatpush.bf16.msra.mxu0 %v259
  %313 = vmatpush.bf16.msra.mxu0 %v258
  %314 = vmatpush.bf16.msra.mxu0 %v257
  %315 = vmatpush.bf16.msra.mxu0 %v256
  %316 = vmatpush.bf16.msra.mxu0 %v255
  %317 = vmatpush.bf16.msra.mxu0 %v254
  %318 = vmatpush.bf16.msra.mxu0 %v253
  %319 = vmatmul.bf16.gmra.mxu0 %v146
  %v320 = vpop.f32.mrf.mxu0
  %v321 = vadd.f32 %v79, %v320
  %v322 = vpop.f32.mrf.mxu0
  %v323 = vadd.f32 %v79, %v322
  %324 = vmatmul.bf16.gmra.mxu0 %v149
  %v325 = vpop.f32.mrf.mxu0
  %v326 = vadd.f32 %v79, %v325
  %v327 = vpop.f32.mrf.mxu0
  %v328 = vadd.f32 %v79, %v327
  %329 = vmatmul.bf16.gmra.mxu0 %v152
  %v330 = vpop.f32.mrf.mxu0
  %v331 = vadd.f32 %v79, %v330
  %v332 = vpop.f32.mrf.mxu0
  %v333 = vadd.f32 %v79, %v332
  %334 = vmatmul.bf16.gmra.mxu0 %v155
  %v335 = vpop.f32.mrf.mxu0
  %v336 = vadd.f32 %v79, %v335
  %v337 = vpop.f32.mrf.mxu0
  %v338 = vadd.f32 %v79, %v337
  %339 = vmatmul.bf16.gmra.mxu0 %v158
  %v340 = vpop.f32.mrf.mxu0
  %v341 = vadd.f32 %v79, %v340
  %v342 = vpop.f32.mrf.mxu0
  %v343 = vadd.f32 %v79, %v342
  %344 = vmatmul.bf16.gmra.mxu0 %v161
  %v345 = vpop.f32.mrf.mxu0
  %v346 = vadd.f32 %v79, %v345
  %v347 = vpop.f32.mrf.mxu0
  %v348 = vadd.f32 %v79, %v347
  %349 = vmatmul.bf16.gmra.mxu0 %v164
  %v350 = vpop.f32.mrf.mxu0
  %v351 = vadd.f32 %v79, %v350
  %v352 = vpop.f32.mrf.mxu0
  %353 = vdwg.mxu0
  %354 = vmatpush.bf16.msra.mxu0 %v268
  %355 = vmatpush.bf16.msra.mxu0 %v267
  %356 = vmatpush.bf16.msra.mxu0 %v266
  %357 = vmatpush.bf16.msra.mxu0 %v265
  %358 = vmatpush.bf16.msra.mxu0 %v264
  %359 = vmatpush.bf16.msra.mxu0 %v263
  %360 = vmatpush.bf16.msra.mxu0 %v262
  %361 = vmatpush.bf16.msra.mxu0 %v261
  %362 = vmatmul.bf16.gmra.mxu0 %v147
  %v363 = vpop.f32.mrf.mxu0
  %v364 = vadd.f32 %v321, %v363
  %v365 = vpop.f32.mrf.mxu0
  %v366 = vadd.f32 %v323, %v365
  %367 = vmatmul.bf16.gmra.mxu0 %v150
  %v368 = vpop.f32.mrf.mxu0
  %v369 = vadd.f32 %v326, %v368
  %v370 = vpop.f32.mrf.mxu0
  %v371 = vadd.f32 %v328, %v370
  %372 = vmatmul.bf16.gmra.mxu0 %v153
  %v373 = vpop.f32.mrf.mxu0
  %v374 = vadd.f32 %v331, %v373
  %v375 = vpop.f32.mrf.mxu0
  %v376 = vadd.f32 %v333, %v375
  %377 = vmatmul.bf16.gmra.mxu0 %v156
  %v378 = vpop.f32.mrf.mxu0
  %v379 = vadd.f32 %v336, %v378
  %v380 = vpop.f32.mrf.mxu0
  %v381 = vadd.f32 %v338, %v380
  %382 = vmatmul.bf16.gmra.mxu0 %v159
  %v383 = vpop.f32.mrf.mxu0
  %v384 = vadd.f32 %v341, %v383
  %v385 = vpop.f32.mrf.mxu0
  %v386 = vadd.f32 %v343, %v385
  %387 = vmatmul.bf16.gmra.mxu0 %v162
  %v388 = vpop.f32.mrf.mxu0
  %v389 = vadd.f32 %v346, %v388
  %v390 = vpop.f32.mrf.mxu0
  %v391 = vadd.f32 %v348, %v390
  %392 = vmatmul.bf16.gmra.mxu0 %v165
  %v393 = vpop.f32.mrf.mxu0
  %v394 = vadd.f32 %v351, %v393
  %v395 = vpop.f32.mrf.mxu0
  %396 = vdwg.mxu0
  %397 = vmatpush.bf16.msra.mxu0 0
  %398 = vmatpush.bf16.msra.mxu0 0
  %399 = vmatpush.bf16.msra.mxu0 0
  %400 = vmatpush.bf16.msra.mxu0 0
  %401 = vmatpush.bf16.msra.mxu0 0
  %402 = vmatpush.bf16.msra.mxu0 0
  %403 = vmatpush.bf16.msra.mxu0 %v270
  %404 = vmatpush.bf16.msra.mxu0 %v269
  %405 = vmatmul.bf16.gmra.mxu0 %v291
  %v406 = vpop.f32.mrf.mxu0
  %v407 = vadd.f32 %v364, %v406
  %v408 = vpop.f32.mrf.mxu0
  %v409 = vadd.f32 %v366, %v408
  %410 = vmatmul.bf16.gmra.mxu0 %v294
  %v411 = vpop.f32.mrf.mxu0
  %v412 = vadd.f32 %v369, %v411
  %v413 = vpop.f32.mrf.mxu0
  %v414 = vadd.f32 %v371, %v413
  %415 = vmatmul.bf16.gmra.mxu0 %v297
  %v416 = vpop.f32.mrf.mxu0
  %v417 = vadd.f32 %v374, %v416
  %v418 = vpop.f32.mrf.mxu0
  %v419 = vadd.f32 %v376, %v418
  %420 = vmatmul.bf16.gmra.mxu0 %v300
  %v421 = vpop.f32.mrf.mxu0
  %v422 = vadd.f32 %v379, %v421
  %v423 = vpop.f32.mrf.mxu0
  %v424 = vadd.f32 %v381, %v423
  %425 = vmatmul.bf16.gmra.mxu0 %v303
  %v426 = vpop.f32.mrf.mxu0
  %v427 = vadd.f32 %v384, %v426
  %v428 = vpop.f32.mrf.mxu0
  %v429 = vadd.f32 %v386, %v428
  %430 = vmatmul.bf16.gmra.mxu0 %v306
  %v431 = vpop.f32.mrf.mxu0
  %v432 = vadd.f32 %v389, %v431
  %v433 = vpop.f32.mrf.mxu0
  %v434 = vadd.f32 %v391, %v433
  %435 = vmatmul.bf16.gmra.mxu0 %v309
  %v436 = vpop.f32.mrf.mxu0
  %v437 = vadd.f32 %v394, %v436
  %v438 = vpop.f32.mrf.mxu0
  %439 = vdwg.mxu0
  %vm440 = vcmp.gt.f32.partialorder %v407, 0.0
  %vm441 = vcmp.gt.f32.partialorder %v409, 0.0
  %vm442 = vcmp.gt.f32.partialorder %v412, 0.0
  %vm443 = vcmp.gt.f32.partialorder %v414, 0.0
  %vm444 = vcmp.gt.f32.partialorder %v417, 0.0
  %vm445 = vcmp.gt.f32.partialorder %v419, 0.0
  %vm446 = vcmp.gt.f32.partialorder %v422, 0.0
  %vm447 = vcmp.gt.f32.partialorder %v424, 0.0
  %vm448 = vcmp.gt.f32.partialorder %v427, 0.0
  %vm449 = vcmp.gt.f32.partialorder %v429, 0.0
  %vm450 = vcmp.gt.f32.partialorder %v432, 0.0
  %vm451 = vcmp.gt.f32.partialorder %v434, 0.0
  %vm452 = vcmp.gt.f32.partialorder %v437, 0.0
  %v453 = vmul.f32 %v407, 0.01
  %v454 = vmul.f32 %v409, 0.01
  %v455 = vmul.f32 %v412, 0.01
  %v456 = vmul.f32 %v414, 0.01
  %v457 = vmul.f32 %v417, 0.01
  %v458 = vmul.f32 %v419, 0.01
  %v459 = vmul.f32 %v422, 0.01
  %v460 = vmul.f32 %v424, 0.01
  %v461 = vmul.f32 %v427, 0.01
  %v462 = vmul.f32 %v429, 0.01
  %v463 = vmul.f32 %v432, 0.01
  %v464 = vmul.f32 %v434, 0.01
  %v465 = vmul.f32 %v437, 0.01
  %v466 = vsel %vm440, %v407, %v453
  %v467 = vsel %vm441, %v409, %v454
  %v468 = vsel %vm442, %v412, %v455
  %v469 = vsel %vm443, %v414, %v456
  %v470 = vsel %vm444, %v417, %v457
  %v471 = vsel %vm445, %v419, %v458
  %v472 = vsel %vm446, %v422, %v459
  %v473 = vsel %vm447, %v424, %v460
  %v474 = vsel %vm448, %v427, %v461
  %v475 = vsel %vm449, %v429, %v462
  %v476 = vsel %vm450, %v432, %v463
  %v477 = vsel %vm451, %v434, %v464
  %v478 = vsel %vm452, %v437, %v465
  %v479 = vpack.c.bf16 %v466, %v466
  %v480 = vpack.c.bf16 %v467, %v467
  %v481 = vpack.c.bf16 %v468, %v468
  %v482 = vpack.c.bf16 %v469, %v469
  %v483 = vpack.c.bf16 %v470, %v470
  %v484 = vpack.c.bf16 %v471, %v471
  %v485 = vpack.c.bf16 %v472, %v472
  %v486 = vpack.c.bf16 %v473, %v473
  %v487 = vpack.c.bf16 %v474, %v474
  %v488 = vpack.c.bf16 %v475, %v475
  %v489 = vpack.c.bf16 %v476, %v476
  %v490 = vpack.c.bf16 %v477, %v477
  %v491 = vpack.c.bf16 %v478, %v478
  %vm492 = vcmask 257024
  %493 = vst.msk [vmem:[%s3] sm:$0xf] %vm492, %v479
  %494 = vst.msk [vmem:[%s3 + $0x4] sm:$0xf] %vm492, %v480
  %495 = vst.msk [vmem:[%s3 + $0x8] sm:$0xf] %vm492, %v481
  %496 = vst.msk [vmem:[%s3 + $0xc] sm:$0xf] %vm492, %v482
  %497 = vst.msk [vmem:[%s3 + $0x10] sm:$0xf] %vm492, %v483
  %498 = vst.msk [vmem:[%s3 + $0x14] sm:$0xf] %vm492, %v484
  %499 = vst.msk [vmem:[%s3 + $0x18] sm:$0xf] %vm492, %v485
  %500 = vst.msk [vmem:[%s3 + $0x1c] sm:$0xf] %vm492, %v486
  %501 = vst.msk [vmem:[%s3 + $0x20] sm:$0xf] %vm492, %v487
  %502 = vst.msk [vmem:[%s3 + $0x24] sm:$0xf] %vm492, %v488
  %503 = vst.msk [vmem:[%s3 + $0x28] sm:$0xf] %vm492, %v489
  %504 = vst.msk [vmem:[%s3 + $0x2c] sm:$0xf] %vm492, %v490
  %vm505 = vcmask 253952
  %506 = vst.msk [vmem:[%s3 + $0x30] sm:$0x1] %vm505, %v491
  // Predicated region
  $region14: #{dqn_forward.7} parent=0 // pred_check
    _
  $region15: #{dqn_forward.7} parent=0 // pred_check_branch
    %508 = sbr.rel (0) target = $region17
  $region16: #{dqn_forward.7} parent=0 // pred_region
    _
  $region17: #{dqn_forward.7} parent=0 // pred_fallthru
    _
  // Predicated region
  $region18: #{dqn_forward.7} parent=0 // pred_check
    _
  $region19: #{dqn_forward.7} parent=0 // pred_check_branch
    %510 = sbr.rel (0) target = $region21
  $region20: #{dqn_forward.7} parent=0 // pred_region
    _
  $region21: #{dqn_forward.7} parent=0 // pred_fallthru
    _

// kernel: dqn_forward.8
$region0: #{dqn_forward.8}
  #allocation0 [shape = 'u32[]', space=smem, size = 0x4, offset = 0x4, fixed_abs, tag = 'smem constant byte address 0x4 - core index']
  #allocation1 [shape = 'u32[72,128]{1,0:T(1,128)}', space=vmem, size = 0x9000, scoped, tag = 'internal scratch']
  %s0 = inlined_call_operand.vmem [shape: bf16[18,288], index: 0, kind: input, shape index: {}]
  %s1 = inlined_call_operand.vmem [shape: bf16[288,64], index: 1, kind: input, shape index: {}]
  %s2 = inlined_call_operand.vmem [shape: f32[1,64], index: 2, kind: input, shape index: {}]
  %s3 = inlined_call_operand.vmem [shape: bf16[18,64], index: 3, kind: output, shape index: {}]
  %s4 = sld [smem:[#allocation0]]
  $region22: #{dqn_forward.8} parent=0
    _
  %s6 = ssub.s32 1, %s4
  %s7 = scalar_select 0, %s6, %s4
  // Predicated region
  $region2: #{dqn_forward.8} parent=0 // pred_check
    _
  $region3: #{dqn_forward.8} parent=0 // pred_check_branch
    %9 = sbr.rel (0) target = $region5
  $region4: #{dqn_forward.8} parent=0 // pred_region
    _
  $region5: #{dqn_forward.8} parent=0 // pred_fallthru
    _
  // Predicated region
  $region6: #{dqn_forward.8} parent=0 // pred_check
    _
  $region7: #{dqn_forward.8} parent=0 // pred_check_branch
    %11 = sbr.rel (0) target = $region9
  $region8: #{dqn_forward.8} parent=0 // pred_region
    _
  $region9: #{dqn_forward.8} parent=0 // pred_fallthru
    _
  // Predicated region
  $region10: #{dqn_forward.8} parent=0 // pred_check
    _
  $region11: #{dqn_forward.8} parent=0 // pred_check_branch
    %13 = sbr.rel (0) target = $region13
  $region12: #{dqn_forward.8} parent=0 // pred_region
    _
  $region13: #{dqn_forward.8} parent=0 // pred_fallthru
    _
  %v15 = vld [vmem:[%s0] sm:$0xff]
  %v16 = vld [vmem:[%s0 + $0x8] sm:$0xf]
  %v17 = vld [vmem:[%s0 + $0xc] sm:$0xff]
  %v18 = vld [vmem:[%s0 + $0x14] sm:$0xf]
  %v19 = vld [vmem:[%s0 + $0x18] sm:$0x11]
  %v20 = vld [vmem:[%s0 + $0x20] sm:$0x1]
  %v21 = vld [vmem:[%s1] sm:$0xf]
  %v22 = vld [vmem:[%s1 + $0x4] sm:$0xf]
  %v23 = vld [vmem:[%s1 + $0x8] sm:$0xf]
  %v24 = vld [vmem:[%s1 + $0xc] sm:$0xf]
  %v25 = vld [vmem:[%s1 + $0x10] sm:$0xf]
  %v26 = vld [vmem:[%s1 + $0x14] sm:$0xf]
  %v27 = vld [vmem:[%s1 + $0x18] sm:$0xf]
  %v28 = vld [vmem:[%s1 + $0x1c] sm:$0xf]
  %v29 = vld [vmem:[%s1 + $0x20] sm:$0xf]
  %v30 = vld [vmem:[%s1 + $0x24] sm:$0xf]
  %v31 = vld [vmem:[%s1 + $0x28] sm:$0xf]
  %v32 = vld [vmem:[%s1 + $0x2c] sm:$0xf]
  %v33 = vld [vmem:[%s1 + $0x30] sm:$0xf]
  %v34 = vld [vmem:[%s1 + $0x34] sm:$0xf]
  %v35 = vld [vmem:[%s1 + $0x38] sm:$0xf]
  %v36 = vld [vmem:[%s1 + $0x3c] sm:$0xf]
  %v37 = vld [vmem:[%s1 + $0x40] sm:$0xf]
  %v38 = vld [vmem:[%s1 + $0x44] sm:$0xf]
  %v39 = vld [vmem:[%s1 + $0x48] sm:$0xf]
  %v40 = vld [vmem:[%s1 + $0x4c] sm:$0xf]
  %v41 = vld [vmem:[%s1 + $0x50] sm:$0xf]
  %v42 = vld [vmem:[%s1 + $0x54] sm:$0xf]
  %v43 = vld [vmem:[%s1 + $0x58] sm:$0xf]
  %v44 = vld [vmem:[%s1 + $0x5c] sm:$0xf]
  %v45 = vld [vmem:[%s1 + $0x60] sm:$0xf]
  %v46 = vld [vmem:[%s1 + $0x64] sm:$0xf]
  %v47 = vld [vmem:[%s1 + $0x68] sm:$0xf]
  %v48 = vld [vmem:[%s1 + $0x6c] sm:$0xf]
  %v49 = vld [vmem:[%s1 + $0x70] sm:$0xf]
  %v50 = vld [vmem:[%s1 + $0x74] sm:$0xf]
  %v51 = vld [vmem:[%s1 + $0x78] sm:$0xf]
  %v52 = vld [vmem:[%s1 + $0x7c] sm:$0xf]
  %v53 = vld [vmem:[%s1 + $0x80] sm:$0xf]
  %v54 = vld [vmem:[%s1 + $0x84] sm:$0xf]
  %v55 = vld [vmem:[%s1 + $0x88] sm:$0xf]
  %v56 = vld [vmem:[%s1 + $0x8c] sm:$0xf]
  %v57 = vld [vmem:[%s2] sm:$0x1]
  %v59 = vperm.slane %v57, 0
  %v67 = vunpack.c.l.b16 %v15
  %v68 = vunpack.c.h.b16 %v15
  %v69 = vunpack.c.l.b16 %v16
  %v70 = vunpack.c.l.b16 %v17
  %v71 = vunpack.c.h.b16 %v17
  %v72 = vunpack.c.l.b16 %v18
  %v73 = vunpack.c.l.b16 %v19
  %v74 = vunpack.c.h.b16 %v19
  %v75 = vunpack.c.l.b16 %v20
  %v76 = vpack.c.b16 %v70, %v67
  %v77 = vpack.c.b16 %v71, %v68
  %v78 = vpack.c.b16 %v72, %v69
  %v79 = vpack.c.b16 %v73, %v73
  %v80 = vpack.c.b16 %v74, %v74
  %v81 = vpack.c.b16 %v75, %v75
  %v122 = vunpack.c.l.b16 %v21
  %v123 = vunpack.c.l.b16 %v22
  %v124 = vunpack.c.l.b16 %v23
  %v125 = vunpack.c.l.b16 %v24
  %v126 = vunpack.c.l.b16 %v25
  %v127 = vunpack.c.l.b16 %v26
  %v128 = vunpack.c.l.b16 %v27
  %v129 = vunpack.c.l.b16 %v28
  %v130 = vunpack.c.l.b16 %v29
  %v131 = vunpack.c.l.b16 %v30
  %v132 = vunpack.c.l.b16 %v31
  %v133 = vunpack.c.l.b16 %v32
  %v134 = vunpack.c.l.b16 %v33
  %v135 = vunpack.c.l.b16 %v34
  %v136 = vunpack.c.l.b16 %v35
  %v137 = vunpack.c.l.b16 %v36
  %v138 = vunpack.c.l.b16 %v37
  %v139 = vunpack.c.l.b16 %v38
  %v140 = vunpack.c.l.b16 %v39
  %v141 = vunpack.c.l.b16 %v40
  %v142 = vunpack.c.l.b16 %v41
  %v143 = vunpack.c.l.b16 %v42
  %v144 = vunpack.c.l.b16 %v43
  %v145 = vunpack.c.l.b16 %v44
  %v146 = vunpack.c.l.b16 %v45
  %v147 = vunpack.c.l.b16 %v46
  %v148 = vunpack.c.l.b16 %v47
  %v149 = vunpack.c.l.b16 %v48
  %v150 = vunpack.c.l.b16 %v49
  %v151 = vunpack.c.l.b16 %v50
  %v152 = vunpack.c.l.b16 %v51
  %v153 = vunpack.c.l.b16 %v52
  %v154 = vunpack.c.l.b16 %v53
  %v155 = vunpack.c.l.b16 %v54
  %v156 = vunpack.c.l.b16 %v55
  %v157 = vunpack.c.l.b16 %v56
  %v158 = vpack.c.b16 %v123, %v122
  %v159 = vpack.c.b16 %v125, %v124
  %v160 = vpack.c.b16 %v127, %v126
  %v161 = vpack.c.b16 %v129, %v128
  %v162 = vpack.c.b16 %v131, %v130
  %v163 = vpack.c.b16 %v133, %v132
  %v164 = vpack.c.b16 %v135, %v134
  %v165 = vpack.c.b16 %v137, %v136
  %v166 = vpack.c.b16 %v139, %v138
  %v167 = vpack.c.b16 %v141, %v140
  %v168 = vpack.c.b16 %v143, %v142
  %v169 = vpack.c.b16 %v145, %v144
  %v170 = vpack.c.b16 %v147, %v146
  %v171 = vpack.c.b16 %v149, %v148
  %v172 = vpack.c.b16 %v151, %v150
  %v173 = vpack.c.b16 %v153, %v152
  %v174 = vpack.c.b16 %v155, %v154
  %v175 = vpack.c.b16 %v157, %v156
  %vm194 = vcmask 261120
  %v196 = vsel %vm194, %v78, 0
  %v199 = vsel %vm194, %v81, 0
  %201 = vmatpush.bf16.msra.mxu0 %v165
  %202 = vmatpush.bf16.msra.mxu0 %v164
  %203 = vmatpush.bf16.msra.mxu0 %v163
  %204 = vmatpush.bf16.msra.mxu0 %v162
  %205 = vmatpush.bf16.msra.mxu0 %v161
  %206 = vmatpush.bf16.msra.mxu0 %v160
  %207 = vmatpush.bf16.msra.mxu0 %v159
  %208 = vmatpush.bf16.msra.mxu0 %v158
  %209 = vmatmul.bf16.gmra.mxu0 %v76
  %v210 = vpop.f32.mrf.mxu0
  %v211 = vadd.f32 %v59, %v210
  %v212 = vpop.f32.mrf.mxu0
  %v213 = vadd.f32 %v59, %v212
  %214 = vmatmul.bf16.gmra.mxu0 %v79
  %v215 = vpop.f32.mrf.mxu0
  %v216 = vadd.f32 %v59, %v215
  %v217 = vpop.f32.mrf.mxu0
  %218 = vdwg.mxu0
  %219 = vmatpush.bf16.msra.mxu0 %v173
  %220 = vmatpush.bf16.msra.mxu0 %v172
  %221 = vmatpush.bf16.msra.mxu0 %v171
  %222 = vmatpush.bf16.msra.mxu0 %v170
  %223 = vmatpush.bf16.msra.mxu0 %v169
  %224 = vmatpush.bf16.msra.mxu0 %v168
  %225 = vmatpush.bf16.msra.mxu0 %v167
  %226 = vmatpush.bf16.msra.mxu0 %v166
  %227 = vmatmul.bf16.gmra.mxu0 %v77
  %v228 = vpop.f32.mrf.mxu0
  %v229 = vadd.f32 %v211, %v228
  %v230 = vpop.f32.mrf.mxu0
  %v231 = vadd.f32 %v213, %v230
  %232 = vmatmul.bf16.gmra.mxu0 %v80
  %v233 = vpop.f32.mrf.mxu0
  %v234 = vadd.f32 %v216, %v233
  %v235 = vpop.f32.mrf.mxu0
  %236 = vdwg.mxu0
  %237 = vmatpush.bf16.msra.mxu0 0
  %238 = vmatpush.bf16.msra.mxu0 0
  %239 = vmatpush.bf16.msra.mxu0 0
  %240 = vmatpush.bf16.msra.mxu0 0
  %241 = vmatpush.bf16.msra.mxu0 0
  %242 = vmatpush.bf16.msra.mxu0 0
  %243 = vmatpush.bf16.msra.mxu0 %v175
  %244 = vmatpush.bf16.msra.mxu0 %v174
  %245 = vmatmul.bf16.gmra.mxu0 %v196
  %v246 = vpop.f32.mrf.mxu0
  %v247 = vadd.f32 %v229, %v246
  %v248 = vpop.f32.mrf.mxu0
  %v249 = vadd.f32 %v231, %v248
  %250 = vmatmul.bf16.gmra.mxu0 %v199
  %v251 = vpop.f32.mrf.mxu0
  %v252 = vadd.f32 %v234, %v251
  %v253 = vpop.f32.mrf.mxu0
  %254 = vdwg.mxu0
  %vm255 = vcmp.gt.f32.partialorder %v247, 0.0
  %vm256 = vcmp.gt.f32.partialorder %v249, 0.0
  %vm257 = vcmp.gt.f32.partialorder %v252, 0.0
  %v258 = vmul.f32 %v247, 0.01
  %v259 = vmul.f32 %v249, 0.01
  %v260 = vmul.f32 %v252, 0.01
  %v261 = vsel %vm255, %v247, %v258
  %v262 = vsel %vm256, %v249, %v259
  %v263 = vsel %vm257, %v252, %v260
  %v264 = vpack.c.bf16 %v261, %v261
  %v265 = vpack.c.bf16 %v262, %v262
  %v266 = vpack.c.bf16 %v263, %v263
  %vm267 = vcmask 519168
  %268 = vst.msk [vmem:[%s3] sm:$0xf] %vm267, %v264
  %269 = vst.msk [vmem:[%s3 + $0x4] sm:$0xf] %vm267, %v265
  %vm270 = vcmask 516096
  %271 = vst.msk [vmem:[%s3 + $0x8] sm:$0x1] %vm270, %v266
  // Predicated region
  $region14: #{dqn_forward.8} parent=0 // pred_check
    _
  $region15: #{dqn_forward.8} parent=0 // pred_check_branch
    %273 = sbr.rel (0) target = $region17
  $region16: #{dqn_forward.8} parent=0 // pred_region
    _
  $region17: #{dqn_forward.8} parent=0 // pred_fallthru
    _
  // Predicated region
  $region18: #{dqn_forward.8} parent=0 // pred_check
    _
  $region19: #{dqn_forward.8} parent=0 // pred_check_branch
    %275 = sbr.rel (0) target = $region21
  $region20: #{dqn_forward.8} parent=0 // pred_region
    _
  $region21: #{dqn_forward.8} parent=0 // pred_fallthru
    _

// kernel: dqn_forward.9
$region0: #{dqn_forward.9}
  #allocation0 [shape = 'u32[]', space=smem, size = 0x4, offset = 0x4, fixed_abs, tag = 'smem constant byte address 0x4 - core index']
  #allocation1 [shape = 'u32[72,128]{1,0:T(1,128)}', space=vmem, size = 0x9000, scoped, tag = 'internal scratch']
  %s0 = inlined_call_operand.vmem [shape: bf16[2,576], index: 0, kind: input, shape index: {}]
  %s1 = inlined_call_operand.vmem [shape: bf16[576,64], index: 1, kind: input, shape index: {}]
  %s2 = inlined_call_operand.vmem [shape: f32[1,64], index: 2, kind: input, shape index: {}]
  %s3 = inlined_call_operand.vmem [shape: bf16[64,1024], index: 3, kind: input, shape index: {}]
  %s4 = inlined_call_operand.vmem [shape: f32[1,1024], index: 4, kind: input, shape index: {}]
  %s5 = inlined_call_operand.vmem [shape: bf16[1024,128], index: 5, kind: input, shape index: {}]
  %s6 = inlined_call_operand.vmem [shape: f32[1,128], index: 6, kind: input, shape index: {}]
  %s7 = inlined_call_operand.hbm [shape: f32[2,128], index: 7, kind: output, shape index: {}]
  %s8 = sld [smem:[#allocation0]]
  $region38: #{dqn_forward.9} parent=0
    _
  %s10 = ssub.s32 1, %s8
  %s11 = scalar_select 0, %s10, %s8
  $region1: #{dqn_forward.9} parent=0
    #allocation2 [shape = 'u8[1024]{0}', space=vmem, size = 0x400, scoped, tag = 'output window, operand 0, single buffered']
    #allocation3 [shape = 's32[1]{0}', space=sflag, size = 0x4, scoped, tag = 'scoped memory for dqn_forward.9']
    %12 = vsyncpa [#allocation3], 0
    // Predicated region
    $region2: #{dqn_forward.9} parent=1 // pred_check
      _
    $region3: #{dqn_forward.9} parent=1 // pred_check_branch
      %14 = sbr.rel (0) target = $region5
    $region4: #{dqn_forward.9} parent=1 // pred_region
      _
    $region5: #{dqn_forward.9} parent=1 // pred_fallthru
      _
    // Predicated region
    $region6: #{dqn_forward.9} parent=1 // pred_check
      _
    $region7: #{dqn_forward.9} parent=1 // pred_check_branch
      %16 = sbr.rel (0) target = $region9
    $region8: #{dqn_forward.9} parent=1 // pred_region
      _
    $region9: #{dqn_forward.9} parent=1 // pred_fallthru
      _
    // Predicated region
    $region10: #{dqn_forward.9} parent=1 // pred_check
      _
    $region11: #{dqn_forward.9} parent=1 // pred_check_branch
      %18 = sbr.rel (0) target = $region13
    $region12: #{dqn_forward.9} parent=1 // pred_region
      _
    $region13: #{dqn_forward.9} parent=1 // pred_fallthru
      _
    // Predicated region
    $region14: #{dqn_forward.9} parent=1 // pred_check
      _
    $region15: #{dqn_forward.9} parent=1 // pred_check_branch
      %20 = sbr.rel (0) target = $region17
    $region16: #{dqn_forward.9} parent=1 // pred_region
      _
    $region17: #{dqn_forward.9} parent=1 // pred_fallthru
      _
    // Predicated region
    $region18: #{dqn_forward.9} parent=1 // pred_check
      _
    $region19: #{dqn_forward.9} parent=1 // pred_check_branch
      %22 = sbr.rel (0) target = $region21
    $region20: #{dqn_forward.9} parent=1 // pred_region
      _
    $region21: #{dqn_forward.9} parent=1 // pred_fallthru
      _
    // Predicated region
    $region22: #{dqn_forward.9} parent=1 // pred_check
      _
    $region23: #{dqn_forward.9} parent=1 // pred_check_branch
      %24 = sbr.rel (0) target = $region25
    $region24: #{dqn_forward.9} parent=1 // pred_region
      _
    $region25: #{dqn_forward.9} parent=1 // pred_fallthru
      _
    // Predicated region
    $region26: #{dqn_forward.9} parent=1 // pred_check
      _
    $region27: #{dqn_forward.9} parent=1 // pred_check_branch
      %26 = sbr.rel (0) target = $region29
    $region28: #{dqn_forward.9} parent=1 // pred_region
      _
    $region29: #{dqn_forward.9} parent=1 // pred_fallthru
      _
    %v28 = vld [vmem:[%s0] sm:$0x1f]
    %v29 = vld [vmem:[%s1] sm:$0xf]
    %v30 = vld [vmem:[%s1 + $0x4] sm:$0xf]
    %v31 = vld [vmem:[%s1 + $0x8] sm:$0xf]
    %v32 = vld [vmem:[%s1 + $0xc] sm:$0xf]
    %v33 = vld [vmem:[%s1 + $0x10] sm:$0xf]
    %v34 = vld [vmem:[%s1 + $0x14] sm:$0xf]
    %v35 = vld [vmem:[%s1 + $0x18] sm:$0xf]
    %v36 = vld [vmem:[%s1 + $0x1c] sm:$0xf]
    %v37 = vld [vmem:[%s1 + $0x20] sm:$0xf]
    %v38 = vld [vmem:[%s1 + $0x24] sm:$0xf]
    %v39 = vld [vmem:[%s1 + $0x28] sm:$0xf]
    %v40 = vld [vmem:[%s1 + $0x2c] sm:$0xf]
    %v41 = vld [vmem:[%s1 + $0x30] sm:$0xf]
    %v42 = vld [vmem:[%s1 + $0x34] sm:$0xf]
    %v43 = vld [vmem:[%s1 + $0x38] sm:$0xf]
    %v44 = vld [vmem:[%s1 + $0x3c] sm:$0xf]
    %v45 = vld [vmem:[%s1 + $0x40] sm:$0xf]
    %v46 = vld [vmem:[%s1 + $0x44] sm:$0xf]
    %v47 = vld [vmem:[%s1 + $0x48] sm:$0xf]
    %v48 = vld [vmem:[%s1 + $0x4c] sm:$0xf]
    %v49 = vld [vmem:[%s1 + $0x50] sm:$0xf]
    %v50 = vld [vmem:[%s1 + $0x54] sm:$0xf]
    %v51 = vld [vmem:[%s1 + $0x58] sm:$0xf]
    %v52 = vld [vmem:[%s1 + $0x5c] sm:$0xf]
    %v53 = vld [vmem:[%s1 + $0x60] sm:$0xf]
    %v54 = vld [vmem:[%s1 + $0x64] sm:$0xf]
    %v55 = vld [vmem:[%s1 + $0x68] sm:$0xf]
    %v56 = vld [vmem:[%s1 + $0x6c] sm:$0xf]
    %v57 = vld [vmem:[%s1 + $0x70] sm:$0xf]
    %v58 = vld [vmem:[%s1 + $0x74] sm:$0xf]
    %v59 = vld [vmem:[%s1 + $0x78] sm:$0xf]
    %v60 = vld [vmem:[%s1 + $0x7c] sm:$0xf]
    %v61 = vld [vmem:[%s1 + $0x80] sm:$0xf]
    %v62 = vld [vmem:[%s1 + $0x84] sm:$0xf]
    %v63 = vld [vmem:[%s1 + $0x88] sm:$0xf]
    %v64 = vld [vmem:[%s1 + $0x8c] sm:$0xf]
    %v65 = vld [vmem:[%s1 + $0x90] sm:$0xf]
    %v66 = vld [vmem:[%s1 + $0x94] sm:$0xf]
    %v67 = vld [vmem:[%s1 + $0x98] sm:$0xf]
    %v68 = vld [vmem:[%s1 + $0x9c] sm:$0xf]
    %v69 = vld [vmem:[%s1 + $0xa0] sm:$0xf]
    %v70 = vld [vmem:[%s1 + $0xa4] sm:$0xf]
    %v71 = vld [vmem:[%s1 + $0xa8] sm:$0xf]
    %v72 = vld [vmem:[%s1 + $0xac] sm:$0xf]
    %v73 = vld [vmem:[%s1 + $0xb0] sm:$0xf]
    %v74 = vld [vmem:[%s1 + $0xb4] sm:$0xf]
    %v75 = vld [vmem:[%s1 + $0xb8] sm:$0xf]
    %v76 = vld [vmem:[%s1 + $0xbc] sm:$0xf]
    %v77 = vld [vmem:[%s1 + $0xc0] sm:$0xf]
    %v78 = vld [vmem:[%s1 + $0xc4] sm:$0xf]
    %v79 = vld [vmem:[%s1 + $0xc8] sm:$0xf]
    %v80 = vld [vmem:[%s1 + $0xcc] sm:$0xf]
    %v81 = vld [vmem:[%s1 + $0xd0] sm:$0xf]
    %v82 = vld [vmem:[%s1 + $0xd4] sm:$0xf]
    %v83 = vld [vmem:[%s1 + $0xd8] sm:$0xf]
    %v84 = vld [vmem:[%s1 + $0xdc] sm:$0xf]
    %v85 = vld [vmem:[%s1 + $0xe0] sm:$0xf]
    %v86 = vld [vmem:[%s1 + $0xe4] sm:$0xf]
    %v87 = vld [vmem:[%s1 + $0xe8] sm:$0xf]
    %v88 = vld [vmem:[%s1 + $0xec] sm:$0xf]
    %v89 = vld [vmem:[%s1 + $0xf0] sm:$0xf]
    %v90 = vld [vmem:[%s1 + $0xf4] sm:$0xf]
    %v91 = vld [vmem:[%s1 + $0xf8] sm:$0xf]
    %v92 = vld [vmem:[%s1 + $0xfc] sm:$0xf]
    %v93 = vld [vmem:[%s1 + $0x100] sm:$0xf]
    %v94 = vld [vmem:[%s1 + $0x104] sm:$0xf]
    %v95 = vld [vmem:[%s1 + $0x108] sm:$0xf]
    %v96 = vld [vmem:[%s1 + $0x10c] sm:$0xf]
    %v97 = vld [vmem:[%s1 + $0x110] sm:$0xf]
    %v98 = vld [vmem:[%s1 + $0x114] sm:$0xf]
    %v99 = vld [vmem:[%s1 + $0x118] sm:$0xf]
    %v100 = vld [vmem:[%s1 + $0x11c] sm:$0xf]
    %v101 = vld [vmem:[%s2] sm:$0x1]
    %v103 = vperm.slane %v101, 0
    %106 = vst [vmem:[#allocation1] ss:$9 sm:$0xff] %v28
    %v107 = vld [vmem:[#allocation1] sm:$0xff]
    %v108 = vld [vmem:[#allocation1 + $0x9] sm:$0xff]
    %v109 = vld [vmem:[#allocation1 + $0x12] sm:$0xff]
    %v110 = vld [vmem:[#allocation1 + $0x1b] sm:$0xff]
    %v111 = vld [vmem:[#allocation1 + $0x24] sm:$0xff]
    %v188 = vunpack.c.l.b16 %v29
    %v189 = vunpack.c.l.b16 %v30
    %v190 = vunpack.c.l.b16 %v31
    %v191 = vunpack.c.l.b16 %v32
    %v192 = vunpack.c.l.b16 %v33
    %v193 = vunpack.c.l.b16 %v34
    %v194 = vunpack.c.l.b16 %v35
    %v195 = vunpack.c.l.b16 %v36
    %v196 = vunpack.c.l.b16 %v37
    %v197 = vunpack.c.l.b16 %v38
    %v198 = vunpack.c.l.b16 %v39
    %v199 = vunpack.c.l.b16 %v40
    %v200 = vunpack.c.l.b16 %v41
    %v201 = vunpack.c.l.b16 %v42
    %v202 = vunpack.c.l.b16 %v43
    %v203 = vunpack.c.l.b16 %v44
    %v204 = vunpack.c.l.b16 %v45
    %v205 = vunpack.c.l.b16 %v46
    %v206 = vunpack.c.l.b16 %v47
    %v207 = vunpack.c.l.b16 %v48
    %v208 = vunpack.c.l.b16 %v49
    %v209 = vunpack.c.l.b16 %v50
    %v210 = vunpack.c.l.b16 %v51
    %v211 = vunpack.c.l.b16 %v52
    %v212 = vunpack.c.l.b16 %v53
    %v213 = vunpack.c.l.b16 %v54
    %v214 = vunpack.c.l.b16 %v55
    %v215 = vunpack.c.l.b16 %v56
    %v216 = vunpack.c.l.b16 %v57
    %v217 = vunpack.c.l.b16 %v58
    %v218 = vunpack.c.l.b16 %v59
    %v219 = vunpack.c.l.b16 %v60
    %v220 = vunpack.c.l.b16 %v61
    %v221 = vunpack.c.l.b16 %v62
    %v222 = vunpack.c.l.b16 %v63
    %v223 = vunpack.c.l.b16 %v64
    %v224 = vunpack.c.l.b16 %v65
    %v225 = vunpack.c.l.b16 %v66
    %v226 = vunpack.c.l.b16 %v67
    %v227 = vunpack.c.l.b16 %v68
    %v228 = vunpack.c.l.b16 %v69
    %v229 = vunpack.c.l.b16 %v70
    %v230 = vunpack.c.l.b16 %v71
    %v231 = vunpack.c.l.b16 %v72
    %v232 = vunpack.c.l.b16 %v73
    %v233 = vunpack.c.l.b16 %v74
    %v234 = vunpack.c.l.b16 %v75
    %v235 = vunpack.c.l.b16 %v76
    %v236 = vunpack.c.l.b16 %v77
    %v237 = vunpack.c.l.b16 %v78
    %v238 = vunpack.c.l.b16 %v79
    %v239 = vunpack.c.l.b16 %v80
    %v240 = vunpack.c.l.b16 %v81
    %v241 = vunpack.c.l.b16 %v82
    %v242 = vunpack.c.l.b16 %v83
    %v243 = vunpack.c.l.b16 %v84
    %v244 = vunpack.c.l.b16 %v85
    %v245 = vunpack.c.l.b16 %v86
    %v246 = vunpack.c.l.b16 %v87
    %v247 = vunpack.c.l.b16 %v88
    %v248 = vunpack.c.l.b16 %v89
    %v249 = vunpack.c.l.b16 %v90
    %v250 = vunpack.c.l.b16 %v91
    %v251 = vunpack.c.l.b16 %v92
    %v252 = vunpack.c.l.b16 %v93
    %v253 = vunpack.c.l.b16 %v94
    %v254 = vunpack.c.l.b16 %v95
    %v255 = vunpack.c.l.b16 %v96
    %v256 = vunpack.c.l.b16 %v97
    %v257 = vunpack.c.l.b16 %v98
    %v258 = vunpack.c.l.b16 %v99
    %v259 = vunpack.c.l.b16 %v100
    %v260 = vpack.c.b16 %v189, %v188
    %v261 = vpack.c.b16 %v191, %v190
    %v262 = vpack.c.b16 %v193, %v192
    %v263 = vpack.c.b16 %v195, %v194
    %v264 = vpack.c.b16 %v197, %v196
    %v265 = vpack.c.b16 %v199, %v198
    %v266 = vpack.c.b16 %v201, %v200
    %v267 = vpack.c.b16 %v203, %v202
    %v268 = vpack.c.b16 %v205, %v204
    %v269 = vpack.c.b16 %v207, %v206
    %v270 = vpack.c.b16 %v209, %v208
    %v271 = vpack.c.b16 %v211, %v210
    %v272 = vpack.c.b16 %v213, %v212
    %v273 = vpack.c.b16 %v215, %v214
    %v274 = vpack.c.b16 %v217, %v216
    %v275 = vpack.c.b16 %v219, %v218
    %v276 = vpack.c.b16 %v221, %v220
    %v277 = vpack.c.b16 %v223, %v222
    %v278 = vpack.c.b16 %v225, %v224
    %v279 = vpack.c.b16 %v227, %v226
    %v280 = vpack.c.b16 %v229, %v228
    %v281 = vpack.c.b16 %v231, %v230
    %v282 = vpack.c.b16 %v233, %v232
    %v283 = vpack.c.b16 %v235, %v234
    %v284 = vpack.c.b16 %v237, %v236
    %v285 = vpack.c.b16 %v239, %v238
    %v286 = vpack.c.b16 %v241, %v240
    %v287 = vpack.c.b16 %v243, %v242
    %v288 = vpack.c.b16 %v245, %v244
    %v289 = vpack.c.b16 %v247, %v246
    %v290 = vpack.c.b16 %v249, %v248
    %v291 = vpack.c.b16 %v251, %v250
    %v292 = vpack.c.b16 %v253, %v252
    %v293 = vpack.c.b16 %v255, %v254
    %v294 = vpack.c.b16 %v257, %v256
    %v295 = vpack.c.b16 %v259, %v258
    %vm332 = vcmask 523264
    %v333 = vsel %vm332, %v111, 0
    %335 = vmatpush.bf16.msra.mxu0 %v267
    %336 = vmatpush.bf16.msra.mxu0 %v266
    %337 = vmatpush.bf16.msra.mxu0 %v265
    %338 = vmatpush.bf16.msra.mxu0 %v264
    %339 = vmatpush.bf16.msra.mxu0 %v263
    %340 = vmatpush.bf16.msra.mxu0 %v262
    %341 = vmatpush.bf16.msra.mxu0 %v261
    %342 = vmatpush.bf16.msra.mxu0 %v260
    %343 = vmatmul.bf16.gmra.mxu0 %v107
    %v344 = vpop.f32.mrf.mxu0
    %v345 = vadd.f32 %v103, %v344
    %v346 = vpop.f32.mrf.mxu0
    %347 = vdwg.mxu0
    %348 = vmatpush.bf16.msra.mxu0 %v275
    %349 = vmatpush.bf16.msra.mxu0 %v274
    %350 = vmatpush.bf16.msra.mxu0 %v273
    %351 = vmatpush.bf16.msra.mxu0 %v272
    %352 = vmatpush.bf16.msra.mxu0 %v271
    %353 = vmatpush.bf16.msra.mxu0 %v270
    %354 = vmatpush.bf16.msra.mxu0 %v269
    %355 = vmatpush.bf16.msra.mxu0 %v268
    %356 = vmatmul.bf16.gmra.mxu0 %v108
    %v357 = vpop.f32.mrf.mxu0
    %v358 = vadd.f32 %v345, %v357
    %v359 = vpop.f32.mrf.mxu0
    %360 = vdwg.mxu0
    %361 = vmatpush.bf16.msra.mxu0 %v283
    %362 = vmatpush.bf16.msra.mxu0 %v282
    %363 = vmatpush.bf16.msra.mxu0 %v281
    %364 = vmatpush.bf16.msra.mxu0 %v280
    %365 = vmatpush.bf16.msra.mxu0 %v279
    %366 = vmatpush.bf16.msra.mxu0 %v278
    %367 = vmatpush.bf16.msra.mxu0 %v277
    %368 = vmatpush.bf16.msra.mxu0 %v276
    %369 = vmatmul.bf16.gmra.mxu0 %v109
    %v370 = vpop.f32.mrf.mxu0
    %v371 = vadd.f32 %v358, %v370
    %v372 = vpop.f32.mrf.mxu0
    %373 = vdwg.mxu0
    %374 = vmatpush.bf16.msra.mxu0 %v291
    %375 = vmatpush.bf16.msra.mxu0 %v290
    %376 = vmatpush.bf16.msra.mxu0 %v289
    %377 = vmatpush.bf16.msra.mxu0 %v288
    %378 = vmatpush.bf16.msra.mxu0 %v287
    %379 = vmatpush.bf16.msra.mxu0 %v286
    %380 = vmatpush.bf16.msra.mxu0 %v285
    %381 = vmatpush.bf16.msra.mxu0 %v284
    %382 = vmatmul.bf16.gmra.mxu0 %v110
    %v383 = vpop.f32.mrf.mxu0
    %v384 = vadd.f32 %v371, %v383
    %v385 = vpop.f32.mrf.mxu0
    %386 = vdwg.mxu0
    %387 = vmatpush.bf16.msra.mxu0 0
    %388 = vmatpush.bf16.msra.mxu0 0
    %389 = vmatpush.bf16.msra.mxu0 0
    %390 = vmatpush.bf16.msra.mxu0 0
    %391 = vmatpush.bf16.msra.mxu0 %v295
    %392 = vmatpush.bf16.msra.mxu0 %v294
    %393 = vmatpush.bf16.msra.mxu0 %v293
    %394 = vmatpush.bf16.msra.mxu0 %v292
    %395 = vmatmul.bf16.gmra.mxu0 %v333
    %v396 = vpop.f32.mrf.mxu0
    %v397 = vadd.f32 %v384, %v396
    %v398 = vpop.f32.mrf.mxu0
    %399 = vdwg.mxu0
    %vm400 = vcmp.gt.f32.partialorder %v397, 0.0
    %v401 = vmul.f32 %v397, 0.01
    %v402 = vsel %vm400, %v397, %v401
    %v403 = vpack.c.bf16 %v402, %v402
    %v404 = vld [vmem:[%s3] sm:$0xff]
    %v405 = vld [vmem:[%s3 + $0x8] sm:$0xff]
    %v406 = vld [vmem:[%s3 + $0x10] sm:$0xff]
    %v407 = vld [vmem:[%s3 + $0x18] sm:$0xff]
    %v408 = vld [vmem:[%s3 + $0x20] sm:$0xff]
    %v409 = vld [vmem:[%s3 + $0x28] sm:$0xff]
    %v410 = vld [vmem:[%s3 + $0x30] sm:$0xff]
    %v411 = vld [vmem:[%s3 + $0x38] sm:$0xff]
    %v412 = vld [vmem:[%s3 + $0x40] sm:$0xff]
    %v413 = vld [vmem:[%s3 + $0x48] sm:$0xff]
    %v414 = vld [vmem:[%s3 + $0x50] sm:$0xff]
    %v415 = vld [vmem:[%s3 + $0x58] sm:$0xff]
    %v416 = vld [vmem:[%s3 + $0x60] sm:$0xff]
    %v417 = vld [vmem:[%s3 + $0x68] sm:$0xff]
    %v418 = vld [vmem:[%s3 + $0x70] sm:$0xff]
    %v419 = vld [vmem:[%s3 + $0x78] sm:$0xff]
    %v420 = vld [vmem:[%s3 + $0x80] sm:$0xff]
    %v421 = vld [vmem:[%s3 + $0x88] sm:$0xff]
    %v422 = vld [vmem:[%s3 + $0x90] sm:$0xff]
    %v423 = vld [vmem:[%s3 + $0x98] sm:$0xff]
    %v424 = vld [vmem:[%s3 + $0xa0] sm:$0xff]
    %v425 = vld [vmem:[%s3 + $0xa8] sm:$0xff]
    %v426 = vld [vmem:[%s3 + $0xb0] sm:$0xff]
    %v427 = vld [vmem:[%s3 + $0xb8] sm:$0xff]
    %v428 = vld [vmem:[%s3 + $0xc0] sm:$0xff]
    %v429 = vld [vmem:[%s3 + $0xc8] sm:$0xff]
    %v430 = vld [vmem:[%s3 + $0xd0] sm:$0xff]
    %v431 = vld [vmem:[%s3 + $0xd8] sm:$0xff]
    %v432 = vld [vmem:[%s3 + $0xe0] sm:$0xff]
    %v433 = vld [vmem:[%s3 + $0xe8] sm:$0xff]
    %v434 = vld [vmem:[%s3 + $0xf0] sm:$0xff]
    %v435 = vld [vmem:[%s3 + $0xf8] sm:$0xff]
    %v436 = vld [vmem:[%s4] sm:$0xff]
    %v437 = vld [vmem:[%s5] sm:$0xf]
    %v438 = vld [vmem:[%s5 + $0x4] sm:$0xf]
    %v439 = vld [vmem:[%s5 + $0x8] sm:$0xf]
    %v440 = vld [vmem:[%s5 + $0xc] sm:$0xf]
    %v441 = vld [vmem:[%s5 + $0x10] sm:$0xf]
    %v442 = vld [vmem:[%s5 + $0x14] sm:$0xf]
    %v443 = vld [vmem:[%s5 + $0x18] sm:$0xf]
    %v444 = vld [vmem:[%s5 + $0x1c] sm:$0xf]
    %v445 = vld [vmem:[%s5 + $0x20] sm:$0xf]
    %v446 = vld [vmem:[%s5 + $0x24] sm:$0xf]
    %v447 = vld [vmem:[%s5 + $0x28] sm:$0xf]
    %v448 = vld [vmem:[%s5 + $0x2c] sm:$0xf]
    %v449 = vld [vmem:[%s5 + $0x30] sm:$0xf]
    %v450 = vld [vmem:[%s5 + $0x34] sm:$0xf]
    %v451 = vld [vmem:[%s5 + $0x38] sm:$0xf]
    %v452 = vld [vmem:[%s5 + $0x3c] sm:$0xf]
    %v453 = vld [vmem:[%s5 + $0x40] sm:$0xf]
    %v454 = vld [vmem:[%s5 + $0x44] sm:$0xf]
    %v455 = vld [vmem:[%s5 + $0x48] sm:$0xf]
    %v456 = vld [vmem:[%s5 + $0x4c] sm:$0xf]
    %v457 = vld [vmem:[%s5 + $0x50] sm:$0xf]
    %v458 = vld [vmem:[%s5 + $0x54] sm:$0xf]
    %v459 = vld [vmem:[%s5 + $0x58] sm:$0xf]
    %v460 = vld [vmem:[%s5 + $0x5c] sm:$0xf]
    %v461 = vld [vmem:[%s5 + $0x60] sm:$0xf]
    %v462 = vld [vmem:[%s5 + $0x64] sm:$0xf]
    %v463 = vld [vmem:[%s5 + $0x68] sm:$0xf]
    %v464 = vld [vmem:[%s5 + $0x6c] sm:$0xf]
    %v465 = vld [vmem:[%s5 + $0x70] sm:$0xf]
    %v466 = vld [vmem:[%s5 + $0x74] sm:$0xf]
    %v467 = vld [vmem:[%s5 + $0x78] sm:$0xf]
    %v468 = vld [vmem:[%s5 + $0x7c] sm:$0xf]
    %v469 = vld [vmem:[%s5 + $0x80] sm:$0xf]
    %v470 = vld [vmem:[%s5 + $0x84] sm:$0xf]
    %v471 = vld [vmem:[%s5 + $0x88] sm:$0xf]
    %v472 = vld [vmem:[%s5 + $0x8c] sm:$0xf]
    %v473 = vld [vmem:[%s5 + $0x90] sm:$0xf]
    %v474 = vld [vmem:[%s5 + $0x94] sm:$0xf]
    %v475 = vld [vmem:[%s5 + $0x98] sm:$0xf]
    %v476 = vld [vmem:[%s5 + $0x9c] sm:$0xf]
    %v477 = vld [vmem:[%s5 + $0xa0] sm:$0xf]
    %v478 = vld [vmem:[%s5 + $0xa4] sm:$0xf]
    %v479 = vld [vmem:[%s5 + $0xa8] sm:$0xf]
    %v480 = vld [vmem:[%s5 + $0xac] sm:$0xf]
    %v481 = vld [vmem:[%s5 + $0xb0] sm:$0xf]
    %v482 = vld [vmem:[%s5 + $0xb4] sm:$0xf]
    %v483 = vld [vmem:[%s5 + $0xb8] sm:$0xf]
    %v484 = vld [vmem:[%s5 + $0xbc] sm:$0xf]
    %v485 = vld [vmem:[%s5 + $0xc0] sm:$0xf]
    %v486 = vld [vmem:[%s5 + $0xc4] sm:$0xf]
    %v487 = vld [vmem:[%s5 + $0xc8] sm:$0xf]
    %v488 = vld [vmem:[%s5 + $0xcc] sm:$0xf]
    %v489 = vld [vmem:[%s5 + $0xd0] sm:$0xf]
    %v490 = vld [vmem:[%s5 + $0xd4] sm:$0xf]
    %v491 = vld [vmem:[%s5 + $0xd8] sm:$0xf]
    %v492 = vld [vmem:[%s5 + $0xdc] sm:$0xf]
    %v493 = vld [vmem:[%s5 + $0xe0] sm:$0xf]
    %v494 = vld [vmem:[%s5 + $0xe4] sm:$0xf]
    %v495 = vld [vmem:[%s5 + $0xe8] sm:$0xf]
    %v496 = vld [vmem:[%s5 + $0xec] sm:$0xf]
    %v497 = vld [vmem:[%s5 + $0xf0] sm:$0xf]
    %v498 = vld [vmem:[%s5 + $0xf4] sm:$0xf]
    %v499 = vld [vmem:[%s5 + $0xf8] sm:$0xf]
    %v500 = vld [vmem:[%s5 + $0xfc] sm:$0xf]
    %v501 = vld [vmem:[%s5 + $0x100] sm:$0xf]
    %v502 = vld [vmem:[%s5 + $0x104] sm:$0xf]
    %v503 = vld [vmem:[%s5 + $0x108] sm:$0xf]
    %v504 = vld [vmem:[%s5 + $0x10c] sm:$0xf]
    %v505 = vld [vmem:[%s5 + $0x110] sm:$0xf]
    %v506 = vld [vmem:[%s5 + $0x114] sm:$0xf]
    %v507 = vld [vmem:[%s5 + $0x118] sm:$0xf]
    %v508 = vld [vmem:[%s5 + $0x11c] sm:$0xf]
    %v509 = vld [vmem:[%s5 + $0x120] sm:$0xf]
    %v510 = vld [vmem:[%s5 + $0x124] sm:$0xf]
    %v511 = vld [vmem:[%s5 + $0x128] sm:$0xf]
    %v512 = vld [vmem:[%s5 + $0x12c] sm:$0xf]
    %v513 = vld [vmem:[%s5 + $0x130] sm:$0xf]
    %v514 = vld [vmem:[%s5 + $0x134] sm:$0xf]
    %v515 = vld [vmem:[%s5 + $0x138] sm:$0xf]
    %v516 = vld [vmem:[%s5 + $0x13c] sm:$0xf]
    %v517 = vld [vmem:[%s5 + $0x140] sm:$0xf]
    %v518 = vld [vmem:[%s5 + $0x144] sm:$0xf]
    %v519 = vld [vmem:[%s5 + $0x148] sm:$0xf]
    %v520 = vld [vmem:[%s5 + $0x14c] sm:$0xf]
    %v521 = vld [vmem:[%s5 + $0x150] sm:$0xf]
    %v522 = vld [vmem:[%s5 + $0x154] sm:$0xf]
    %v523 = vld [vmem:[%s5 + $0x158] sm:$0xf]
    %v524 = vld [vmem:[%s5 + $0x15c] sm:$0xf]
    %v525 = vld [vmem:[%s5 + $0x160] sm:$0xf]
    %v526 = vld [vmem:[%s5 + $0x164] sm:$0xf]
    %v527 = vld [vmem:[%s5 + $0x168] sm:$0xf]
    %v528 = vld [vmem:[%s5 + $0x16c] sm:$0xf]
    %v529 = vld [vmem:[%s5 + $0x170] sm:$0xf]
    %v530 = vld [vmem:[%s5 + $0x174] sm:$0xf]
    %v531 = vld [vmem:[%s5 + $0x178] sm:$0xf]
    %v532 = vld [vmem:[%s5 + $0x17c] sm:$0xf]
    %v533 = vld [vmem:[%s5 + $0x180] sm:$0xf]
    %v534 = vld [vmem:[%s5 + $0x184] sm:$0xf]
    %v535 = vld [vmem:[%s5 + $0x188] sm:$0xf]
    %v536 = vld [vmem:[%s5 + $0x18c] sm:$0xf]
    %v537 = vld [vmem:[%s5 + $0x190] sm:$0xf]
    %v538 = vld [vmem:[%s5 + $0x194] sm:$0xf]
    %v539 = vld [vmem:[%s5 + $0x198] sm:$0xf]
    %v540 = vld [vmem:[%s5 + $0x19c] sm:$0xf]
    %v541 = vld [vmem:[%s5 + $0x1a0] sm:$0xf]
    %v542 = vld [vmem:[%s5 + $0x1a4] sm:$0xf]
    %v543 = vld [vmem:[%s5 + $0x1a8] sm:$0xf]
    %v544 = vld [vmem:[%s5 + $0x1ac] sm:$0xf]
    %v545 = vld [vmem:[%s5 + $0x1b0] sm:$0xf]
    %v546 = vld [vmem:[%s5 + $0x1b4] sm:$0xf]
    %v547 = vld [vmem:[%s5 + $0x1b8] sm:$0xf]
    %v548 = vld [vmem:[%s5 + $0x1bc] sm:$0xf]
    %v549 = vld [vmem:[%s5 + $0x1c0] sm:$0xf]
    %v550 = vld [vmem:[%s5 + $0x1c4] sm:$0xf]
    %v551 = vld [vmem:[%s5 + $0x1c8] sm:$0xf]
    %v552 = vld [vmem:[%s5 + $0x1cc] sm:$0xf]
    %v553 = vld [vmem:[%s5 + $0x1d0] sm:$0xf]
    %v554 = vld [vmem:[%s5 + $0x1d4] sm:$0xf]
    %v555 = vld [vmem:[%s5 + $0x1d8] sm:$0xf]
    %v556 = vld [vmem:[%s5 + $0x1dc] sm:$0xf]
    %v557 = vld [vmem:[%s5 + $0x1e0] sm:$0xf]
    %v558 = vld [vmem:[%s5 + $0x1e4] sm:$0xf]
    %v559 = vld [vmem:[%s5 + $0x1e8] sm:$0xf]
    %v560 = vld [vmem:[%s5 + $0x1ec] sm:$0xf]
    %v561 = vld [vmem:[%s5 + $0x1f0] sm:$0xf]
    %v562 = vld [vmem:[%s5 + $0x1f4] sm:$0xf]
    %v563 = vld [vmem:[%s5 + $0x1f8] sm:$0xf]
    %v564 = vld [vmem:[%s5 + $0x1fc] sm:$0xf]
    %v565 = vld [vmem:[%s6] sm:$0x1]
    %v567 = vperm.slane %v436, 0
    %v568 = vperm.slane %v436, 1
    %v569 = vperm.slane %v436, 2
    %v570 = vperm.slane %v436, 3
    %v571 = vperm.slane %v436, 4
    %v572 = vperm.slane %v436, 5
    %v573 = vperm.slane %v436, 6
    %v574 = vperm.slane %v436, 7
    %v615 = vunpack.c.l.b16 %v404
    %v616 = vunpack.c.h.b16 %v404
    %v617 = vunpack.c.l.b16 %v405
    %v618 = vunpack.c.h.b16 %v405
    %v619 = vunpack.c.l.b16 %v406
    %v620 = vunpack.c.h.b16 %v406
    %v621 = vunpack.c.l.b16 %v407
    %v622 = vunpack.c.h.b16 %v407
    %v623 = vunpack.c.l.b16 %v408
    %v624 = vunpack.c.h.b16 %v408
    %v625 = vunpack.c.l.b16 %v409
    %v626 = vunpack.c.h.b16 %v409
    %v627 = vunpack.c.l.b16 %v410
    %v628 = vunpack.c.h.b16 %v410
    %v629 = vunpack.c.l.b16 %v411
    %v630 = vunpack.c.h.b16 %v411
    %v631 = vunpack.c.l.b16 %v412
    %v632 = vunpack.c.h.b16 %v412
    %v633 = vunpack.c.l.b16 %v413
    %v634 = vunpack.c.h.b16 %v413
    %v635 = vunpack.c.l.b16 %v414
    %v636 = vunpack.c.h.b16 %v414
    %v637 = vunpack.c.l.b16 %v415
    %v638 = vunpack.c.h.b16 %v415
    %v639 = vunpack.c.l.b16 %v416
    %v640 = vunpack.c.h.b16 %v416
    %v641 = vunpack.c.l.b16 %v417
    %v642 = vunpack.c.h.b16 %v417
    %v643 = vunpack.c.l.b16 %v418
    %v644 = vunpack.c.h.b16 %v418
    %v645 = vunpack.c.l.b16 %v419
    %v646 = vunpack.c.h.b16 %v419
    %v647 = vunpack.c.l.b16 %v420
    %v648 = vunpack.c.h.b16 %v420
    %v649 = vunpack.c.l.b16 %v421
    %v650 = vunpack.c.h.b16 %v421
    %v651 = vunpack.c.l.b16 %v422
    %v652 = vunpack.c.h.b16 %v422
    %v653 = vunpack.c.l.b16 %v423
    %v654 = vunpack.c.h.b16 %v423
    %v655 = vunpack.c.l.b16 %v424
    %v656 = vunpack.c.h.b16 %v424
    %v657 = vunpack.c.l.b16 %v425
    %v658 = vunpack.c.h.b16 %v425
    %v659 = vunpack.c.l.b16 %v426
    %v660 = vunpack.c.h.b16 %v426
    %v661 = vunpack.c.l.b16 %v427
    %v662 = vunpack.c.h.b16 %v427
    %v663 = vunpack.c.l.b16 %v428
    %v664 = vunpack.c.h.b16 %v428
    %v665 = vunpack.c.l.b16 %v429
    %v666 = vunpack.c.h.b16 %v429
    %v667 = vunpack.c.l.b16 %v430
    %v668 = vunpack.c.h.b16 %v430
    %v669 = vunpack.c.l.b16 %v431
    %v670 = vunpack.c.h.b16 %v431
    %v671 = vunpack.c.l.b16 %v432
    %v672 = vunpack.c.h.b16 %v432
    %v673 = vunpack.c.l.b16 %v433
    %v674 = vunpack.c.h.b16 %v433
    %v675 = vunpack.c.l.b16 %v434
    %v676 = vunpack.c.h.b16 %v434
    %v677 = vunpack.c.l.b16 %v435
    %v678 = vunpack.c.h.b16 %v435
    %v679 = vpack.c.b16 %v623, %v615
    %v680 = vpack.c.b16 %v624, %v616
    %v681 = vpack.c.b16 %v625, %v617
    %v682 = vpack.c.b16 %v626, %v618
    %v683 = vpack.c.b16 %v627, %v619
    %v684 = vpack.c.b16 %v628, %v620
    %v685 = vpack.c.b16 %v629, %v621
    %v686 = vpack.c.b16 %v630, %v622
    %v687 = vpack.c.b16 %v639, %v631
    %v688 = vpack.c.b16 %v640, %v632
    %v689 = vpack.c.b16 %v641, %v633
    %v690 = vpack.c.b16 %v642, %v634
    %v691 = vpack.c.b16 %v643, %v635
    %v692 = vpack.c.b16 %v644, %v636
    %v693 = vpack.c.b16 %v645, %v637
    %v694 = vpack.c.b16 %v646, %v638
    %v695 = vpack.c.b16 %v655, %v647
    %v696 = vpack.c.b16 %v656, %v648
    %v697 = vpack.c.b16 %v657, %v649
    %v698 = vpack.c.b16 %v658, %v650
    %v699 = vpack.c.b16 %v659, %v651
    %v700 = vpack.c.b16 %v660, %v652
    %v701 = vpack.c.b16 %v661, %v653
    %v702 = vpack.c.b16 %v662, %v654
    %v703 = vpack.c.b16 %v671, %v663
    %v704 = vpack.c.b16 %v672, %v664
    %v705 = vpack.c.b16 %v673, %v665
    %v706 = vpack.c.b16 %v674, %v666
    %v707 = vpack.c.b16 %v675, %v667
    %v708 = vpack.c.b16 %v676, %v668
    %v709 = vpack.c.b16 %v677, %v669
    %v710 = vpack.c.b16 %v678, %v670
    %v744 = vsel %vm332, %v403, 0
    %746 = vmatpush.bf16.msra.mxu0 0
    %747 = vmatpush.bf16.msra.mxu0 0
    %748 = vmatpush.bf16.msra.mxu0 0
    %749 = vmatpush.bf16.msra.mxu0 0
    %750 = vmatpush.bf16.msra.mxu0 %v703
    %751 = vmatpush.bf16.msra.mxu0 %v695
    %752 = vmatpush.bf16.msra.mxu0 %v687
    %753 = vmatpush.bf16.msra.mxu0 %v679
    %754 = vmatmul.bf16.gmra.mxu0 %v744
    %v755 = vpop.f32.mrf.mxu0
    %v756 = vadd.f32 %v567, %v755
    %v757 = vpop.f32.mrf.mxu0
    %758 = vdwg.mxu0
    %759 = vmatpush.bf16.msra.mxu0 0
    %760 = vmatpush.bf16.msra.mxu0 0
    %761 = vmatpush.bf16.msra.mxu0 0
    %762 = vmatpush.bf16.msra.mxu0 0
    %763 = vmatpush.bf16.msra.mxu0 %v704
    %764 = vmatpush.bf16.msra.mxu0 %v696
    %765 = vmatpush.bf16.msra.mxu0 %v688
    %766 = vmatpush.bf16.msra.mxu0 %v680
    %767 = vmatmul.bf16.gmra.mxu0 %v744
    %v768 = vpop.f32.mrf.mxu0
    %v769 = vadd.f32 %v568, %v768
    %v770 = vpop.f32.mrf.mxu0
    %771 = vdwg.mxu0
    %772 = vmatpush.bf16.msra.mxu0 0
    %773 = vmatpush.bf16.msra.mxu0 0
    %774 = vmatpush.bf16.msra.mxu0 0
    %775 = vmatpush.bf16.msra.mxu0 0
    %776 = vmatpush.bf16.msra.mxu0 %v705
    %777 = vmatpush.bf16.msra.mxu0 %v697
    %778 = vmatpush.bf16.msra.mxu0 %v689
    %779 = vmatpush.bf16.msra.mxu0 %v681
    %780 = vmatmul.bf16.gmra.mxu0 %v744
    %v781 = vpop.f32.mrf.mxu0
    %v782 = vadd.f32 %v569, %v781
    %v783 = vpop.f32.mrf.mxu0
    %784 = vdwg.mxu0
    %785 = vmatpush.bf16.msra.mxu0 0
    %786 = vmatpush.bf16.msra.mxu0 0
    %787 = vmatpush.bf16.msra.mxu0 0
    %788 = vmatpush.bf16.msra.mxu0 0
    %789 = vmatpush.bf16.msra.mxu0 %v706
    %790 = vmatpush.bf16.msra.mxu0 %v698
    %791 = vmatpush.bf16.msra.mxu0 %v690
    %792 = vmatpush.bf16.msra.mxu0 %v682
    %793 = vmatmul.bf16.gmra.mxu0 %v744
    %v794 = vpop.f32.mrf.mxu0
    %v795 = vadd.f32 %v570, %v794
    %v796 = vpop.f32.mrf.mxu0
    %797 = vdwg.mxu0
    %798 = vmatpush.bf16.msra.mxu0 0
    %799 = vmatpush.bf16.msra.mxu0 0
    %800 = vmatpush.bf16.msra.mxu0 0
    %801 = vmatpush.bf16.msra.mxu0 0
    %802 = vmatpush.bf16.msra.mxu0 %v707
    %803 = vmatpush.bf16.msra.mxu0 %v699
    %804 = vmatpush.bf16.msra.mxu0 %v691
    %805 = vmatpush.bf16.msra.mxu0 %v683
    %806 = vmatmul.bf16.gmra.mxu0 %v744
    %v807 = vpop.f32.mrf.mxu0
    %v808 = vadd.f32 %v571, %v807
    %v809 = vpop.f32.mrf.mxu0
    %810 = vdwg.mxu0
    %811 = vmatpush.bf16.msra.mxu0 0
    %812 = vmatpush.bf16.msra.mxu0 0
    %813 = vmatpush.bf16.msra.mxu0 0
    %814 = vmatpush.bf16.msra.mxu0 0
    %815 = vmatpush.bf16.msra.mxu0 %v708
    %816 = vmatpush.bf16.msra.mxu0 %v700
    %817 = vmatpush.bf16.msra.mxu0 %v692
    %818 = vmatpush.bf16.msra.mxu0 %v684
    %819 = vmatmul.bf16.gmra.mxu0 %v744
    %v820 = vpop.f32.mrf.mxu0
    %v821 = vadd.f32 %v572, %v820
    %v822 = vpop.f32.mrf.mxu0
    %823 = vdwg.mxu0
    %824 = vmatpush.bf16.msra.mxu0 0
    %825 = vmatpush.bf16.msra.mxu0 0
    %826 = vmatpush.bf16.msra.mxu0 0
    %827 = vmatpush.bf16.msra.mxu0 0
    %828 = vmatpush.bf16.msra.mxu0 %v709
    %829 = vmatpush.bf16.msra.mxu0 %v701
    %830 = vmatpush.bf16.msra.mxu0 %v693
    %831 = vmatpush.bf16.msra.mxu0 %v685
    %832 = vmatmul.bf16.gmra.mxu0 %v744
    %v833 = vpop.f32.mrf.mxu0
    %v834 = vadd.f32 %v573, %v833
    %v835 = vpop.f32.mrf.mxu0
    %836 = vdwg.mxu0
    %837 = vmatpush.bf16.msra.mxu0 0
    %838 = vmatpush.bf16.msra.mxu0 0
    %839 = vmatpush.bf16.msra.mxu0 0
    %840 = vmatpush.bf16.msra.mxu0 0
    %841 = vmatpush.bf16.msra.mxu0 %v710
    %842 = vmatpush.bf16.msra.mxu0 %v702
    %843 = vmatpush.bf16.msra.mxu0 %v694
    %844 = vmatpush.bf16.msra.mxu0 %v686
    %845 = vmatmul.bf16.gmra.mxu0 %v744
    %v846 = vpop.f32.mrf.mxu0
    %v847 = vadd.f32 %v574, %v846
    %v848 = vpop.f32.mrf.mxu0
    %849 = vdwg.mxu0
    %vm850 = vcmp.gt.f32.partialorder %v756, 0.0
    %vm851 = vcmp.gt.f32.partialorder %v769, 0.0
    %vm852 = vcmp.gt.f32.partialorder %v782, 0.0
    %vm853 = vcmp.gt.f32.partialorder %v795, 0.0
    %vm854 = vcmp.gt.f32.partialorder %v808, 0.0
    %vm855 = vcmp.gt.f32.partialorder %v821, 0.0
    %vm856 = vcmp.gt.f32.partialorder %v834, 0.0
    %vm857 = vcmp.gt.f32.partialorder %v847, 0.0
    %v858 = vmul.f32 %v756, 0.01
    %v859 = vmul.f32 %v769, 0.01
    %v860 = vmul.f32 %v782, 0.01
    %v861 = vmul.f32 %v795, 0.01
    %v862 = vmul.f32 %v808, 0.01
    %v863 = vmul.f32 %v821, 0.01
    %v864 = vmul.f32 %v834, 0.01
    %v865 = vmul.f32 %v847, 0.01
    %v866 = vsel %vm850, %v756, %v858
    %v867 = vsel %vm851, %v769, %v859
    %v868 = vsel %vm852, %v782, %v860
    %v869 = vsel %vm853, %v795, %v861
    %v870 = vsel %vm854, %v808, %v862
    %v871 = vsel %vm855, %v821, %v863
    %v872 = vsel %vm856, %v834, %v864
    %v873 = vsel %vm857, %v847, %v865
    %v874 = vpack.c.bf16 %v866, %v866
    %v875 = vpack.c.bf16 %v867, %v867
    %v876 = vpack.c.bf16 %v868, %v868
    %v877 = vpack.c.bf16 %v869, %v869
    %v878 = vpack.c.bf16 %v870, %v870
    %v879 = vpack.c.bf16 %v871, %v871
    %v880 = vpack.c.bf16 %v872, %v872
    %v881 = vpack.c.bf16 %v873, %v873
    %v883 = vperm.slane %v565, 0
    %v1013 = vunpack.c.l.b16 %v437
    %v1014 = vunpack.c.l.b16 %v438
    %v1015 = vunpack.c.l.b16 %v439
    %v1016 = vunpack.c.l.b16 %v440
    %v1017 = vunpack.c.l.b16 %v441
    %v1018 = vunpack.c.l.b16 %v442
    %v1019 = vunpack.c.l.b16 %v443
    %v1020 = vunpack.c.l.b16 %v444
    %v1021 = vunpack.c.l.b16 %v445
    %v1022 = vunpack.c.l.b16 %v446
    %v1023 = vunpack.c.l.b16 %v447
    %v1024 = vunpack.c.l.b16 %v448
    %v1025 = vunpack.c.l.b16 %v449
    %v1026 = vunpack.c.l.b16 %v450
    %v1027 = vunpack.c.l.b16 %v451
    %v1028 = vunpack.c.l.b16 %v452
    %v1029 = vunpack.c.l.b16 %v453
    %v1030 = vunpack.c.l.b16 %v454
    %v1031 = vunpack.c.l.b16 %v455
    %v1032 = vunpack.c.l.b16 %v456
    %v1033 = vunpack.c.l.b16 %v457
    %v1034 = vunpack.c.l.b16 %v458
    %v1035 = vunpack.c.l.b16 %v459
    %v1036 = vunpack.c.l.b16 %v460
    %v1037 = vunpack.c.l.b16 %v461
    %v1038 = vunpack.c.l.b16 %v462
    %v1039 = vunpack.c.l.b16 %v463
    %v1040 = vunpack.c.l.b16 %v464
    %v1041 = vunpack.c.l.b16 %v465
    %v1042 = vunpack.c.l.b16 %v466
    %v1043 = vunpack.c.l.b16 %v467
    %v1044 = vunpack.c.l.b16 %v468
    %v1045 = vunpack.c.l.b16 %v469
    %v1046 = vunpack.c.l.b16 %v470
    %v1047 = vunpack.c.l.b16 %v471
    %v1048 = vunpack.c.l.b16 %v472
    %v1049 = vunpack.c.l.b16 %v473
    %v1050 = vunpack.c.l.b16 %v474
    %v1051 = vunpack.c.l.b16 %v475
    %v1052 = vunpack.c.l.b16 %v476
    %v1053 = vunpack.c.l.b16 %v477
    %v1054 = vunpack.c.l.b16 %v478
    %v1055 = vunpack.c.l.b16 %v479
    %v1056 = vunpack.c.l.b16 %v480
    %v1057 = vunpack.c.l.b16 %v481
    %v1058 = vunpack.c.l.b16 %v482
    %v1059 = vunpack.c.l.b16 %v483
    %v1060 = vunpack.c.l.b16 %v484
    %v1061 = vunpack.c.l.b16 %v485
    %v1062 = vunpack.c.l.b16 %v486
    %v1063 = vunpack.c.l.b16 %v487
    %v1064 = vunpack.c.l.b16 %v488
    %v1065 = vunpack.c.l.b16 %v489
    %v1066 = vunpack.c.l.b16 %v490
    %v1067 = vunpack.c.l.b16 %v491
    %v1068 = vunpack.c.l.b16 %v492
    %v1069 = vunpack.c.l.b16 %v493
    %v1070 = vunpack.c.l.b16 %v494
    %v1071 = vunpack.c.l.b16 %v495
    %v1072 = vunpack.c.l.b16 %v496
    %v1073 = vunpack.c.l.b16 %v497
    %v1074 = vunpack.c.l.b16 %v498
    %v1075 = vunpack.c.l.b16 %v499
    %v1076 = vunpack.c.l.b16 %v500
    %v1077 = vunpack.c.l.b16 %v501
    %v1078 = vunpack.c.l.b16 %v502
    %v1079 = vunpack.c.l.b16 %v503
    %v1080 = vunpack.c.l.b16 %v504
    %v1081 = vunpack.c.l.b16 %v505
    %v1082 = vunpack.c.l.b16 %v506
    %v1083 = vunpack.c.l.b16 %v507
    %v1084 = vunpack.c.l.b16 %v508
    %v1085 = vunpack.c.l.b16 %v509
    %v1086 = vunpack.c.l.b16 %v510
    %v1087 = vunpack.c.l.b16 %v511
    %v1088 = vunpack.c.l.b16 %v512
    %v1089 = vunpack.c.l.b16 %v513
    %v1090 = vunpack.c.l.b16 %v514
    %v1091 = vunpack.c.l.b16 %v515
    %v1092 = vunpack.c.l.b16 %v516
    %v1093 = vunpack.c.l.b16 %v517
    %v1094 = vunpack.c.l.b16 %v518
    %v1095 = vunpack.c.l.b16 %v519
    %v1096 = vunpack.c.l.b16 %v520
    %v1097 = vunpack.c.l.b16 %v521
    %v1098 = vunpack.c.l.b16 %v522
    %v1099 = vunpack.c.l.b16 %v523
    %v1100 = vunpack.c.l.b16 %v524
    %v1101 = vunpack.c.l.b16 %v525
    %v1102 = vunpack.c.l.b16 %v526
    %v1103 = vunpack.c.l.b16 %v527
    %v1104 = vunpack.c.l.b16 %v528
    %v1105 = vunpack.c.l.b16 %v529
    %v1106 = vunpack.c.l.b16 %v530
    %v1107 = vunpack.c.l.b16 %v531
    %v1108 = vunpack.c.l.b16 %v532
    %v1109 = vunpack.c.l.b16 %v533
    %v1110 = vunpack.c.l.b16 %v534
    %v1111 = vunpack.c.l.b16 %v535
    %v1112 = vunpack.c.l.b16 %v536
    %v1113 = vunpack.c.l.b16 %v537
    %v1114 = vunpack.c.l.b16 %v538
    %v1115 = vunpack.c.l.b16 %v539
    %v1116 = vunpack.c.l.b16 %v540
    %v1117 = vunpack.c.l.b16 %v541
    %v1118 = vunpack.c.l.b16 %v542
    %v1119 = vunpack.c.l.b16 %v543
    %v1120 = vunpack.c.l.b16 %v544
    %v1121 = vunpack.c.l.b16 %v545
    %v1122 = vunpack.c.l.b16 %v546
    %v1123 = vunpack.c.l.b16 %v547
    %v1124 = vunpack.c.l.b16 %v548
    %v1125 = vunpack.c.l.b16 %v549
    %v1126 = vunpack.c.l.b16 %v550
    %v1127 = vunpack.c.l.b16 %v551
    %v1128 = vunpack.c.l.b16 %v552
    %v1129 = vunpack.c.l.b16 %v553
    %v1130 = vunpack.c.l.b16 %v554
    %v1131 = vunpack.c.l.b16 %v555
    %v1132 = vunpack.c.l.b16 %v556
    %v1133 = vunpack.c.l.b16 %v557
    %v1134 = vunpack.c.l.b16 %v558
    %v1135 = vunpack.c.l.b16 %v559
    %v1136 = vunpack.c.l.b16 %v560
    %v1137 = vunpack.c.l.b16 %v561
    %v1138 = vunpack.c.l.b16 %v562
    %v1139 = vunpack.c.l.b16 %v563
    %v1140 = vunpack.c.l.b16 %v564
    %v1141 = vpack.c.b16 %v1014, %v1013
    %v1142 = vpack.c.b16 %v1016, %v1015
    %v1143 = vpack.c.b16 %v1018, %v1017
    %v1144 = vpack.c.b16 %v1020, %v1019
    %v1145 = vpack.c.b16 %v1022, %v1021
    %v1146 = vpack.c.b16 %v1024, %v1023
    %v1147 = vpack.c.b16 %v1026, %v1025
    %v1148 = vpack.c.b16 %v1028, %v1027
    %v1149 = vpack.c.b16 %v1030, %v1029
    %v1150 = vpack.c.b16 %v1032, %v1031
    %v1151 = vpack.c.b16 %v1034, %v1033
    %v1152 = vpack.c.b16 %v1036, %v1035
    %v1153 = vpack.c.b16 %v1038, %v1037
    %v1154 = vpack.c.b16 %v1040, %v1039
    %v1155 = vpack.c.b16 %v1042, %v1041
    %v1156 = vpack.c.b16 %v1044, %v1043
    %v1157 = vpack.c.b16 %v1046, %v1045
    %v1158 = vpack.c.b16 %v1048, %v1047
    %v1159 = vpack.c.b16 %v1050, %v1049
    %v1160 = vpack.c.b16 %v1052, %v1051
    %v1161 = vpack.c.b16 %v1054, %v1053
    %v1162 = vpack.c.b16 %v1056, %v1055
    %v1163 = vpack.c.b16 %v1058, %v1057
    %v1164 = vpack.c.b16 %v1060, %v1059
    %v1165 = vpack.c.b16 %v1062, %v1061
    %v1166 = vpack.c.b16 %v1064, %v1063
    %v1167 = vpack.c.b16 %v1066, %v1065
    %v1168 = vpack.c.b16 %v1068, %v1067
    %v1169 = vpack.c.b16 %v1070, %v1069
    %v1170 = vpack.c.b16 %v1072, %v1071
    %v1171 = vpack.c.b16 %v1074, %v1073
    %v1172 = vpack.c.b16 %v1076, %v1075
    %v1173 = vpack.c.b16 %v1078, %v1077
    %v1174 = vpack.c.b16 %v1080, %v1079
    %v1175 = vpack.c.b16 %v1082, %v1081
    %v1176 = vpack.c.b16 %v1084, %v1083
    %v1177 = vpack.c.b16 %v1086, %v1085
    %v1178 = vpack.c.b16 %v1088, %v1087
    %v1179 = vpack.c.b16 %v1090, %v1089
    %v1180 = vpack.c.b16 %v1092, %v1091
    %v1181 = vpack.c.b16 %v1094, %v1093
    %v1182 = vpack.c.b16 %v1096, %v1095
    %v1183 = vpack.c.b16 %v1098, %v1097
    %v1184 = vpack.c.b16 %v1100, %v1099
    %v1185 = vpack.c.b16 %v1102, %v1101
    %v1186 = vpack.c.b16 %v1104, %v1103
    %v1187 = vpack.c.b16 %v1106, %v1105
    %v1188 = vpack.c.b16 %v1108, %v1107
    %v1189 = vpack.c.b16 %v1110, %v1109
    %v1190 = vpack.c.b16 %v1112, %v1111
    %v1191 = vpack.c.b16 %v1114, %v1113
    %v1192 = vpack.c.b16 %v1116, %v1115
    %v1193 = vpack.c.b16 %v1118, %v1117
    %v1194 = vpack.c.b16 %v1120, %v1119
    %v1195 = vpack.c.b16 %v1122, %v1121
    %v1196 = vpack.c.b16 %v1124, %v1123
    %v1197 = vpack.c.b16 %v1126, %v1125
    %v1198 = vpack.c.b16 %v1128, %v1127
    %v1199 = vpack.c.b16 %v1130, %v1129
    %v1200 = vpack.c.b16 %v1132, %v1131
    %v1201 = vpack.c.b16 %v1134, %v1133
    %v1202 = vpack.c.b16 %v1136, %v1135
    %v1203 = vpack.c.b16 %v1138, %v1137
    %v1204 = vpack.c.b16 %v1140, %v1139
    %1269 = vmatpush.bf16.msra.mxu0 %v1148
    %1270 = vmatpush.bf16.msra.mxu0 %v1147
    %1271 = vmatpush.bf16.msra.mxu0 %v1146
    %1272 = vmatpush.bf16.msra.mxu0 %v1145
    %1273 = vmatpush.bf16.msra.mxu0 %v1144
    %1274 = vmatpush.bf16.msra.mxu0 %v1143
    %1275 = vmatpush.bf16.msra.mxu0 %v1142
    %1276 = vmatpush.bf16.msra.mxu0 %v1141
    %1277 = vmatmul.bf16.gmra.mxu0 %v874
    %v1278 = vpop.f32.mrf.mxu0
    %v1279 = vadd.f32 %v883, %v1278
    %v1280 = vpop.f32.mrf.mxu0
    %1281 = vdwg.mxu0
    %1282 = vmatpush.bf16.msra.mxu0 %v1156
    %1283 = vmatpush.bf16.msra.mxu0 %v1155
    %1284 = vmatpush.bf16.msra.mxu0 %v1154
    %1285 = vmatpush.bf16.msra.mxu0 %v1153
    %1286 = vmatpush.bf16.msra.mxu0 %v1152
    %1287 = vmatpush.bf16.msra.mxu0 %v1151
    %1288 = vmatpush.bf16.msra.mxu0 %v1150
    %1289 = vmatpush.bf16.msra.mxu0 %v1149
    %1290 = vmatmul.bf16.gmra.mxu0 %v875
    %v1291 = vpop.f32.mrf.mxu0
    %v1292 = vadd.f32 %v1279, %v1291
    %v1293 = vpop.f32.mrf.mxu0
    %1294 = vdwg.mxu0
    %1295 = vmatpush.bf16.msra.mxu0 %v1164
    %1296 = vmatpush.bf16.msra.mxu0 %v1163
    %1297 = vmatpush.bf16.msra.mxu0 %v1162
    %1298 = vmatpush.bf16.msra.mxu0 %v1161
    %1299 = vmatpush.bf16.msra.mxu0 %v1160
    %1300 = vmatpush.bf16.msra.mxu0 %v1159
    %1301 = vmatpush.bf16.msra.mxu0 %v1158
    %1302 = vmatpush.bf16.msra.mxu0 %v1157
    %1303 = vmatmul.bf16.gmra.mxu0 %v876
    %v1304 = vpop.f32.mrf.mxu0
    %v1305 = vadd.f32 %v1292, %v1304
    %v1306 = vpop.f32.mrf.mxu0
    %1307 = vdwg.mxu0
    %1308 = vmatpush.bf16.msra.mxu0 %v1172
    %1309 = vmatpush.bf16.msra.mxu0 %v1171
    %1310 = vmatpush.bf16.msra.mxu0 %v1170
    %1311 = vmatpush.bf16.msra.mxu0 %v1169
    %1312 = vmatpush.bf16.msra.mxu0 %v1168
    %1313 = vmatpush.bf16.msra.mxu0 %v1167
    %1314 = vmatpush.bf16.msra.mxu0 %v1166
    %1315 = vmatpush.bf16.msra.mxu0 %v1165
    %1316 = vmatmul.bf16.gmra.mxu0 %v877
    %v1317 = vpop.f32.mrf.mxu0
    %v1318 = vadd.f32 %v1305, %v1317
    %v1319 = vpop.f32.mrf.mxu0
    %1320 = vdwg.mxu0
    %1321 = vmatpush.bf16.msra.mxu0 %v1180
    %1322 = vmatpush.bf16.msra.mxu0 %v1179
    %1323 = vmatpush.bf16.msra.mxu0 %v1178
    %1324 = vmatpush.bf16.msra.mxu0 %v1177
    %1325 = vmatpush.bf16.msra.mxu0 %v1176
    %1326 = vmatpush.bf16.msra.mxu0 %v1175
    %1327 = vmatpush.bf16.msra.mxu0 %v1174
    %1328 = vmatpush.bf16.msra.mxu0 %v1173
    %1329 = vmatmul.bf16.gmra.mxu0 %v878
    %v1330 = vpop.f32.mrf.mxu0
    %v1331 = vadd.f32 %v1318, %v1330
    %v1332 = vpop.f32.mrf.mxu0
    %1333 = vdwg.mxu0
    %1334 = vmatpush.bf16.msra.mxu0 %v1188
    %1335 = vmatpush.bf16.msra.mxu0 %v1187
    %1336 = vmatpush.bf16.msra.mxu0 %v1186
    %1337 = vmatpush.bf16.msra.mxu0 %v1185
    %1338 = vmatpush.bf16.msra.mxu0 %v1184
    %1339 = vmatpush.bf16.msra.mxu0 %v1183
    %1340 = vmatpush.bf16.msra.mxu0 %v1182
    %1341 = vmatpush.bf16.msra.mxu0 %v1181
    %1342 = vmatmul.bf16.gmra.mxu0 %v879
    %v1343 = vpop.f32.mrf.mxu0
    %v1344 = vadd.f32 %v1331, %v1343
    %v1345 = vpop.f32.mrf.mxu0
    %1346 = vdwg.mxu0
    %1347 = vmatpush.bf16.msra.mxu0 %v1196
    %1348 = vmatpush.bf16.msra.mxu0 %v1195
    %1349 = vmatpush.bf16.msra.mxu0 %v1194
    %1350 = vmatpush.bf16.msra.mxu0 %v1193
    %1351 = vmatpush.bf16.msra.mxu0 %v1192
    %1352 = vmatpush.bf16.msra.mxu0 %v1191
    %1353 = vmatpush.bf16.msra.mxu0 %v1190
    %1354 = vmatpush.bf16.msra.mxu0 %v1189
    %1355 = vmatmul.bf16.gmra.mxu0 %v880
    %v1356 = vpop.f32.mrf.mxu0
    %v1357 = vadd.f32 %v1344, %v1356
    %v1358 = vpop.f32.mrf.mxu0
    %1359 = vdwg.mxu0
    %1360 = vmatpush.bf16.msra.mxu0 %v1204
    %1361 = vmatpush.bf16.msra.mxu0 %v1203
    %1362 = vmatpush.bf16.msra.mxu0 %v1202
    %1363 = vmatpush.bf16.msra.mxu0 %v1201
    %1364 = vmatpush.bf16.msra.mxu0 %v1200
    %1365 = vmatpush.bf16.msra.mxu0 %v1199
    %1366 = vmatpush.bf16.msra.mxu0 %v1198
    %1367 = vmatpush.bf16.msra.mxu0 %v1197
    %1368 = vmatmul.bf16.gmra.mxu0 %v881
    %v1369 = vpop.f32.mrf.mxu0
    %v1370 = vadd.f32 %v1357, %v1369
    %v1371 = vpop.f32.mrf.mxu0
    %1372 = vdwg.mxu0
    %v1373 = vlaneseq
    %v1374 = vand.u32 %v1373, 127
    %vm1375 = vcmp.lt.s32.totalorder %v1374, 6
    %v1376 = vsel %vm1375, 1, 0
    %vm1377 = vcmp.eq.s32.totalorder %v1376, 1
    %v1378 = vsel %vm1377, %v1370, 0.0
    %vm1379 = vcmask 1041408
    %v1380 = vsel %vm1379, %v1378, 0.0
    %1381 = vadd.xlane.f32.xlu0 %v1380
    %v1382 = vpop.xlane.xlu0 %1381
    %vm1383 = vcmp.eq.s32.totalorder %v1374, 127
    %v1384 = vsel %vm1383, 1, 0
    %vm1385 = vcmp.eq.s32.totalorder %v1384, 1
    %v1386 = vsel %vm1385, %v1370, 0.0
    %v1387 = vsel %vm1379, %v1386, 0.0
    %1388 = vadd.xlane.f32.xlu0 %v1387
    %v1389 = vpop.xlane.xlu0 %1388
    %v1390 = vadd.f32 %v1389, %v1370
    %v1391 = vmul.f32 %v1382, 0.16666667
    %v1392 = vsub.f32 %v1390, %v1391
    %1393 = vst [vmem:[#allocation2] sm:$0x3] %v1392
    // Predicated region
    $region30: #{dqn_forward.9} parent=1 // pred_check
      _
    $region31: #{dqn_forward.9} parent=1 // pred_check_branch
      %1395 = sbr.rel (0) target = $region33
    $region32: #{dqn_forward.9} parent=1 // pred_region
      %1397 = vsyncadd [#allocation3], 0
      %s1399 = sshll.u32 [#allocation2], 4
      %s1400 = int_to_ptr.vmem [resolvable:$true] %s1399
      %s1401 = sshll.u32 %s7, 4
      %s1402 = int_to_ptr.hbm [resolvable:$true] %s1401
      %1404 = dma.vmem_to_hbm [thread:$0]  %s1400, 32, %s1402, [#allocation3]
    $region33: #{dqn_forward.9} parent=1 // pred_fallthru
      _
    // Predicated region
    $region34: #{dqn_forward.9} parent=1 // pred_check
      _
    $region35: #{dqn_forward.9} parent=1 // pred_check_branch
      %1406 = sbr.rel (0) target = $region37
    $region36: #{dqn_forward.9} parent=1 // pred_region
      %1408 = dma.done [#allocation3], 32
    $region37: #{dqn_forward.9} parent=1 // pred_fallthru
      _
    %1409 = vsyncpa [#allocation3], 1

</llo_original>
